<compile_context>
chip_gen: v7x
topology: tpu7x:2x2x1
jax: 0.10.0
libtpu: 0.0.40
codegen_flags: <defaults>
</compile_context>

<pallas_src>
import jax
import jax.numpy as jnp
from jax.experimental import pallas as pl
from jax.experimental.pallas import tpu as pltpu

H = 384          # MiniLM hidden size
D_PRE = 768      # pre_classifier output dim
VOCAB = 128      # synthetic vocab for the embedding-lookup encoder stub


# --------------------------------------------------------------------------
# Kernel: masked mean pooling (x2) -> combine -> pre_classifier -> ReLU
#         -> classifier -> sigmoid, for one batch tile.
# --------------------------------------------------------------------------
def sbert_head_kernel(sent_tok_ref, doc_tok_ref, sent_mask_ref, doc_mask_ref,
                      w1_ref, b1_ref, w2_ref, b2_ref, out_ref):
    # ---- masked mean pooling (mean_pooling in the PyTorch code), f32 VPU ----
    sm = sent_mask_ref[...]                                  # (tb, S, 1) f32
    dm = doc_mask_ref[...]                                   # (tb, S, 1) f32
    sent_tok = sent_tok_ref[...].astype(jnp.float32)         # bf16 -> f32
    doc_tok = doc_tok_ref[...].astype(jnp.float32)

    sent_sum = jnp.sum(sent_tok * sm, axis=1)                # (tb, H)
    doc_sum = jnp.sum(doc_tok * dm, axis=1)                  # (tb, H)
    sent_inv = pl.reciprocal(
        jnp.maximum(jnp.sum(sm, axis=1), 1e-9), approx=True)  # (tb, 1)
    doc_inv = pl.reciprocal(
        jnp.maximum(jnp.sum(dm, axis=1), 1e-9), approx=True)  # (tb, 1)

    sentence_embeddings = sent_sum * sent_inv                # (tb, H)
    doc_embeddings = doc_sum * doc_inv                       # (tb, H)
    combined_features = sentence_embeddings * doc_embeddings  # (tb, H)

    # ---- pre_classifier on cat([sent, doc, comb], dim=1) ----
    # concat + (tb, 3H) @ (3H, D_PRE) == three dots against static *ref*
    # slices of w1 (identical math, no concat, no VMEM copies of w1).
    # bf16 MXU operands, f32 accumulation.
    se = sentence_embeddings.astype(jnp.bfloat16)
    de = doc_embeddings.astype(jnp.bfloat16)
    ce = combined_features.astype(jnp.bfloat16)
    pooler = (
        jnp.dot(se, w1_ref[0:H, :], preferred_element_type=jnp.float32)
        + jnp.dot(de, w1_ref[H:2 * H, :], preferred_element_type=jnp.float32)
        + jnp.dot(ce, w1_ref[2 * H:3 * H, :], preferred_element_type=jnp.float32)
        + b1_ref[...]                                        # (1, D_PRE) broadcast
    )
    pooler = jnp.maximum(pooler, 0.0)                        # ReLU
    # Dropout(p=0.3): identity in eval mode.

    # ---- classifier (768 -> 1) as a VPU row-reduction + sigmoid ----
    # w2 is stored as the PyTorch (out=1, in=768) row; pooler*w2 summed over
    # lanes == pooler @ W.T, avoiding an N=1 MXU matmul / lane-sparse store.
    logits = jnp.sum(pooler * w2_ref[...], axis=-1, keepdims=True) + b2_ref[...]
    out_ref[...] = 1.0 / (1.0 + jnp.exp(-logits))            # sigmoid, exact


# --------------------------------------------------------------------------
# Wrapper: grid over batch, weights resident across grid steps.
# --------------------------------------------------------------------------
def _pick_block_b(B, S, vmem_budget_bytes=24 << 20):
    """Pick a batch tile so 2 streams x 2 buffers of (tb, S, H) bf16 fit budget."""
    if B % 8 != 0:
        return B                                   # small-batch path: one block
    max_tb = vmem_budget_bytes // (4 * S * H * 2)  # 2 streams x double-buffer, bf16
    max_tb = max(8, min(512, (max_tb // 8) * 8))
    tb = min(B, max_tb)
    while tb >= 8 and B % tb != 0:
        tb -= 8
    return tb if tb >= 8 else B


def sbert_forward(sent_tok, doc_tok, sent_mask_e, doc_mask_e, params,
                  block_b=None):
    B, S, _ = sent_tok.shape
    tb = block_b if block_b is not None else _pick_block_b(B, S)
    assert B % tb == 0, (B, tb)
    grid = (B // tb,)

    tok_spec = pl.BlockSpec((tb, S, H), lambda i: (i, 0, 0))
    mask_spec = pl.BlockSpec((tb, S, 1), lambda i: (i, 0, 0))
    # constant index maps -> weights stay VMEM-resident across grid steps
    w1_spec = pl.BlockSpec((3 * H, D_PRE), lambda i: (0, 0))
    b1_spec = pl.BlockSpec((1, D_PRE), lambda i: (0, 0))
    w2_spec = pl.BlockSpec((1, D_PRE), lambda i: (0, 0))
    b2_spec = pl.BlockSpec((1, 1), lambda i: (0, 0))
    out_spec = pl.BlockSpec((tb, 1), lambda i: (i, 0))

    return pl.pallas_call(
        sbert_head_kernel,
        out_shape=jax.ShapeDtypeStruct((B, 1), jnp.float32),
        grid=grid,
        in_specs=[tok_spec, tok_spec, mask_spec, mask_spec,
                  w1_spec, b1_spec, w2_spec, b2_spec],
        out_specs=out_spec,
        compiler_params=pltpu.CompilerParams(
            dimension_semantics=("parallel",),
            vmem_limit_bytes=48 * 1024 * 1024),
    )(sent_tok, doc_tok, sent_mask_e, doc_mask_e,
      params["w1"], params["b1"], params["w2"], params["b2"])


# --------------------------------------------------------------------------
# Parameters and encoder stub (plain-JAX glue).
# --------------------------------------------------------------------------
def init_params(key):
    k_emb, k_w1, k_b1, k_w2, k_b2 = jax.random.split(key, 5)
    return {
        # encoder stub: token embedding table (stands in for self.l1)
        "emb": jax.random.normal(k_emb, (VOCAB, H), jnp.float32) * 0.05,
        # pre_classifier: Linear(384 * 3, 768), stored as (in, out), bf16 MXU operand
        "w1": (jax.random.normal(k_w1, (3 * H, D_PRE), jnp.float32)
               * 0.02).astype(jnp.bfloat16),
        "b1": jax.random.normal(k_b1, (1, D_PRE), jnp.float32) * 0.02,
        # classifier: Linear(768, 1), stored as the PyTorch (out, in) = (1, 768) row
        "w2": jax.random.normal(k_w2, (1, D_PRE), jnp.float32) * 0.02,
        "b2": jax.random.normal(k_b2, (1, 1), jnp.float32) * 0.02,
    }


def encoder_stub(ids, params):
    # Deterministic embedding lookup == model_output[0]; emitted in bf16 to
    # halve the kernel's dominant input DMA bytes.
    return params["emb"][ids].astype(jnp.bfloat16)           # (B, S, H) bf16


def sentence_bert_apply(sent_ids, doc_ids, sent_mask, doc_mask, params,
                        block_b=None):
    sent_tok = encoder_stub(sent_ids, params)
    doc_tok = encoder_stub(doc_ids, params)
    # pre-expand masks to (B, S, 1) in the wrapper (no in-kernel relayout)
    sent_mask_e = sent_mask.astype(jnp.float32)[:, :, None]
    doc_mask_e = doc_mask.astype(jnp.float32)[:, :, None]
    return sbert_forward(sent_tok, doc_tok, sent_mask_e, doc_mask_e, params,
                         block_b=block_b)


if __name__ == "__main__":
    key = jax.random.PRNGKey(0)
    k_p, k_sid, k_did, k_smask, k_dmask = jax.random.split(key, 5)
    params = init_params(k_p)

    # --- small case, single grid step ---
    B, S = 2, 8
    sent_ids = jax.random.randint(k_sid, (B, S), 0, VOCAB, dtype=jnp.int32)
    doc_ids = jax.random.randint(k_did, (B, S), 0, VOCAB, dtype=jnp.int32)
    sent_mask = jax.random.bernoulli(k_smask, 0.8, (B, S)).astype(jnp.int32)
    doc_mask = jax.random.bernoulli(k_dmask, 0.8, (B, S)).astype(jnp.int32)
    sent_mask = sent_mask.at[:, 0].set(1)   # at least one valid token per row
    doc_mask = doc_mask.at[:, 0].set(1)

    out = sentence_bert_apply(sent_ids, doc_ids, sent_mask, doc_mask, params)
    out = jax.block_until_ready(out)
    assert out.shape == (B, 1) and out.dtype == jnp.float32
    assert bool(jnp.all((out >= 0.0) & (out <= 1.0)))

    # --- larger batch exercising the multi-step grid (weights stay resident) ---
    B2 = 16
    sent_ids2 = jax.random.randint(k_sid, (B2, S), 0, VOCAB, dtype=jnp.int32)
    doc_ids2 = jax.random.randint(k_did, (B2, S), 0, VOCAB, dtype=jnp.int32)
    sent_mask2 = jnp.ones((B2, S), jnp.int32)
    doc_mask2 = jnp.ones((B2, S), jnp.int32)
    out2 = sentence_bert_apply(sent_ids2, doc_ids2, sent_mask2, doc_mask2,
                               params, block_b=8)            # grid = (2,)
    out2 = jax.block_until_ready(out2)
    assert out2.shape == (B2, 1) and out2.dtype == jnp.float32
    assert bool(jnp.all((out2 >= 0.0) & (out2 <= 1.0)))

    print("KERNEL_OK")
</pallas_src>

<mosaic_0001>
module attributes {stable_mosaic.version = 11 : i64} {
  func.func @sbert_head_kernel(%arg0: i32, %arg1: memref<2x8x384xbf16, #tpu.memory_space<vmem>>, %arg2: memref<2x8x384xbf16, #tpu.memory_space<vmem>>, %arg3: memref<2x8x1xf32, #tpu.memory_space<vmem>>, %arg4: memref<2x8x1xf32, #tpu.memory_space<vmem>>, %arg5: memref<1152x768xbf16, #tpu.memory_space<vmem>>, %arg6: memref<1x768xf32, #tpu.memory_space<vmem>>, %arg7: memref<1x768xf32, #tpu.memory_space<vmem>>, %arg8: memref<1x1xf32, #tpu.memory_space<vmem>>, %arg9: memref<2x1xf32, #tpu.memory_space<vmem>>) attributes {dimension_semantics = [#tpu.dimension_semantics<parallel>], iteration_bounds = array<i64: 1>, scalar_prefetch = 0 : i64, scratch_operands = 0 : i64, tpu.core_type = #tpu.core_type<tc>, window_params = [{transform_indices = @transform_0, window_bounds = array<i64: 2, 8, 384>}, {transform_indices = @transform_1, window_bounds = array<i64: 2, 8, 384>}, {transform_indices = @transform_2, window_bounds = array<i64: 2, 8, 1>}, {transform_indices = @transform_3, window_bounds = array<i64: 2, 8, 1>}, {pipeline_mode = #tpu.pipeline_mode<synchronous>, transform_indices = @transform_4, window_bounds = array<i64: 1152, 768>}, {pipeline_mode = #tpu.pipeline_mode<synchronous>, transform_indices = @transform_5, window_bounds = array<i64: 1, 768>}, {pipeline_mode = #tpu.pipeline_mode<synchronous>, transform_indices = @transform_6, window_bounds = array<i64: 1, 768>}, {pipeline_mode = #tpu.pipeline_mode<synchronous>, transform_indices = @transform_7, window_bounds = array<i64: 1, 1>}, {transform_indices = @transform_8, window_bounds = array<i64: 2, 1>}]} {
    %c0 = arith.constant 0 : index
    %c0_0 = arith.constant 0 : index
    %c0_1 = arith.constant 0 : index
    %0 = vector.load %arg3[%c0, %c0_0, %c0_1] : memref<2x8x1xf32, #tpu.memory_space<vmem>>, vector<2x8x1xf32>
    %c0_2 = arith.constant 0 : index
    %c0_3 = arith.constant 0 : index
    %c0_4 = arith.constant 0 : index
    %1 = vector.load %arg4[%c0_2, %c0_3, %c0_4] : memref<2x8x1xf32, #tpu.memory_space<vmem>>, vector<2x8x1xf32>
    %c0_5 = arith.constant 0 : index
    %c0_6 = arith.constant 0 : index
    %c0_7 = arith.constant 0 : index
    %2 = vector.load %arg1[%c0_5, %c0_6, %c0_7] : memref<2x8x384xbf16, #tpu.memory_space<vmem>>, vector<2x8x384xbf16>
    %3 = arith.extf %2 : vector<2x8x384xbf16> to vector<2x8x384xf32>
    %c0_8 = arith.constant 0 : index
    %c0_9 = arith.constant 0 : index
    %c0_10 = arith.constant 0 : index
    %4 = vector.load %arg2[%c0_8, %c0_9, %c0_10] : memref<2x8x384xbf16, #tpu.memory_space<vmem>>, vector<2x8x384xbf16>
    %5 = arith.extf %4 : vector<2x8x384xbf16> to vector<2x8x384xf32>
    %6 = vector.broadcast %0 : vector<2x8x1xf32> to vector<2x8x384xf32>
    %7 = arith.mulf %3, %6 : vector<2x8x384xf32>
    %cst = arith.constant dense<0.000000e+00> : vector<2x384xf32>
    %8 = vector.multi_reduction <add>, %7, %cst [1] : vector<2x8x384xf32> to vector<2x384xf32>
    %9 = vector.broadcast %1 : vector<2x8x1xf32> to vector<2x8x384xf32>
    %10 = arith.mulf %5, %9 : vector<2x8x384xf32>
    %cst_11 = arith.constant dense<0.000000e+00> : vector<2x384xf32>
    %11 = vector.multi_reduction <add>, %10, %cst_11 [1] : vector<2x8x384xf32> to vector<2x384xf32>
    %cst_12 = arith.constant dense<0.000000e+00> : vector<2x1xf32>
    %12 = vector.multi_reduction <add>, %0, %cst_12 [1] : vector<2x8x1xf32> to vector<2x1xf32>
    %cst_13 = arith.constant 9.99999971E-10 : f32
    %13 = vector.broadcast %cst_13 : f32 to vector<2x1xf32>
    %14 = arith.maximumf %12, %13 : vector<2x1xf32>
    %15 = tpu.reciprocal %14 {approx = true} : vector<2x1xf32> -> vector<2x1xf32>
    %cst_14 = arith.constant dense<0.000000e+00> : vector<2x1xf32>
    %16 = vector.multi_reduction <add>, %1, %cst_14 [1] : vector<2x8x1xf32> to vector<2x1xf32>
    %cst_15 = arith.constant 9.99999971E-10 : f32
    %17 = vector.broadcast %cst_15 : f32 to vector<2x1xf32>
    %18 = arith.maximumf %16, %17 : vector<2x1xf32>
    %19 = tpu.reciprocal %18 {approx = true} : vector<2x1xf32> -> vector<2x1xf32>
    %20 = vector.broadcast %15 : vector<2x1xf32> to vector<2x384xf32>
    %21 = arith.mulf %8, %20 : vector<2x384xf32>
    %22 = vector.broadcast %19 : vector<2x1xf32> to vector<2x384xf32>
    %23 = arith.mulf %11, %22 : vector<2x384xf32>
    %24 = arith.mulf %21, %23 : vector<2x384xf32>
    %25 = arith.truncf %21 : vector<2x384xf32> to vector<2x384xbf16>
    %26 = arith.truncf %23 : vector<2x384xf32> to vector<2x384xbf16>
    %27 = arith.truncf %24 : vector<2x384xf32> to vector<2x384xbf16>
    %c0_16 = arith.constant 0 : index
    %c0_17 = arith.constant 0 : index
    %28 = vector.load %arg5[%c0_16, %c0_17] : memref<1152x768xbf16, #tpu.memory_space<vmem>>, vector<384x768xbf16>
    %cst_18 = arith.constant dense<0.000000e+00> : vector<2x768xf32>
    %29 = tpu.matmul %25, %28, %cst_18 {dimension_numbers = #tpu.dot_dimension_numbers<[1], [0], [0], [1], [0, 0, 1, 1], [], []>} : vector<2x384xbf16>, vector<384x768xbf16>, vector<2x768xf32> -> vector<2x768xf32>
    %c384 = arith.constant 384 : index
    %c0_19 = arith.constant 0 : index
    %30 = vector.load %arg5[%c384, %c0_19] : memref<1152x768xbf16, #tpu.memory_space<vmem>>, vector<384x768xbf16>
    %cst_20 = arith.constant dense<0.000000e+00> : vector<2x768xf32>
    %31 = tpu.matmul %26, %30, %cst_20 {dimension_numbers = #tpu.dot_dimension_numbers<[1], [0], [0], [1], [0, 0, 1, 1], [], []>} : vector<2x384xbf16>, vector<384x768xbf16>, vector<2x768xf32> -> vector<2x768xf32>
    %32 = arith.addf %29, %31 : vector<2x768xf32>
    %c768 = arith.constant 768 : index
    %c0_21 = arith.constant 0 : index
    %33 = vector.load %arg5[%c768, %c0_21] : memref<1152x768xbf16, #tpu.memory_space<vmem>>, vector<384x768xbf16>
    %cst_22 = arith.constant dense<0.000000e+00> : vector<2x768xf32>
    %34 = tpu.matmul %27, %33, %cst_22 {dimension_numbers = #tpu.dot_dimension_numbers<[1], [0], [0], [1], [0, 0, 1, 1], [], []>} : vector<2x384xbf16>, vector<384x768xbf16>, vector<2x768xf32> -> vector<2x768xf32>
    %35 = arith.addf %32, %34 : vector<2x768xf32>
    %c0_23 = arith.constant 0 : index
    %c0_24 = arith.constant 0 : index
    %36 = vector.load %arg6[%c0_23, %c0_24] : memref<1x768xf32, #tpu.memory_space<vmem>>, vector<1x768xf32>
    %37 = vector.broadcast %36 : vector<1x768xf32> to vector<2x768xf32>
    %38 = arith.addf %35, %37 : vector<2x768xf32>
    %cst_25 = arith.constant 0.000000e+00 : f32
    %39 = vector.broadcast %cst_25 : f32 to vector<2x768xf32>
    %40 = arith.maximumf %38, %39 : vector<2x768xf32>
    %c0_26 = arith.constant 0 : index
    %c0_27 = arith.constant 0 : index
    %41 = vector.load %arg7[%c0_26, %c0_27] : memref<1x768xf32, #tpu.memory_space<vmem>>, vector<1x768xf32>
    %42 = vector.broadcast %41 : vector<1x768xf32> to vector<2x768xf32>
    %43 = arith.mulf %40, %42 : vector<2x768xf32>
    %cst_28 = arith.constant dense<0.000000e+00> : vector<2xf32>
    %44 = vector.multi_reduction <add>, %43, %cst_28 [1] : vector<2x768xf32> to vector<2xf32>
    %45 = vector.shape_cast %44 : vector<2xf32> to vector<2x1xf32>
    %c0_29 = arith.constant 0 : index
    %c0_30 = arith.constant 0 : index
    %46 = vector.load %arg8[%c0_29, %c0_30] : memref<1x1xf32, #tpu.memory_space<vmem>>, vector<1x1xf32>
    %47 = vector.broadcast %46 : vector<1x1xf32> to vector<2x1xf32>
    %48 = arith.addf %45, %47 : vector<2x1xf32>
    %cst_31 = arith.constant 0.000000e+00 : f32
    %49 = vector.broadcast %cst_31 : f32 to vector<2x1xf32>
    %50 = arith.subf %49, %48 : vector<2x1xf32>
    %51 = math.exp %50 : vector<2x1xf32>
    %cst_32 = arith.constant 1.000000e+00 : f32
    %52 = vector.broadcast %cst_32 : f32 to vector<2x1xf32>
    %53 = arith.addf %52, %51 : vector<2x1xf32>
    %cst_33 = arith.constant 1.000000e+00 : f32
    %54 = vector.broadcast %cst_33 : f32 to vector<2x1xf32>
    %55 = arith.divf %54, %53 : vector<2x1xf32>
    %c0_34 = arith.constant 0 : index
    %c0_35 = arith.constant 0 : index
    %56 = vector.load %arg9[%c0_34, %c0_35] : memref<2x1xf32, #tpu.memory_space<vmem>>, vector<2x1xf32>
    tpu.vector_store %arg9[%c0_34, %c0_35], %55 {strides = array<i32>} : memref<2x1xf32, #tpu.memory_space<vmem>>, vector<2x1xf32>,
    return
  }
  func.func @transform_0(%arg0: i32) -> (i32, i32, i32) {
    %c0_i32 = arith.constant 0 : i32
    %c0_i32_0 = arith.constant 0 : i32
    %c0_i32_1 = arith.constant 0 : i32
    return %arg0, %c0_i32, %c0_i32_0 : i32, i32, i32
  }
  func.func @transform_1(%arg0: i32) -> (i32, i32, i32) {
    %c0_i32 = arith.constant 0 : i32
    %c0_i32_0 = arith.constant 0 : i32
    %c0_i32_1 = arith.constant 0 : i32
    return %arg0, %c0_i32, %c0_i32_0 : i32, i32, i32
  }
  func.func @transform_2(%arg0: i32) -> (i32, i32, i32) {
    %c0_i32 = arith.constant 0 : i32
    %c0_i32_0 = arith.constant 0 : i32
    %c0_i32_1 = arith.constant 0 : i32
    return %arg0, %c0_i32, %c0_i32_0 : i32, i32, i32
  }
  func.func @transform_3(%arg0: i32) -> (i32, i32, i32) {
    %c0_i32 = arith.constant 0 : i32
    %c0_i32_0 = arith.constant 0 : i32
    %c0_i32_1 = arith.constant 0 : i32
    return %arg0, %c0_i32, %c0_i32_0 : i32, i32, i32
  }
  func.func @transform_4(%arg0: i32) -> (i32, i32) {
    %c0_i32 = arith.constant 0 : i32
    %c0_i32_0 = arith.constant 0 : i32
    %c0_i32_1 = arith.constant 0 : i32
    return %c0_i32, %c0_i32_0 : i32, i32
  }
  func.func @transform_5(%arg0: i32) -> (i32, i32) {
    %c0_i32 = arith.constant 0 : i32
    %c0_i32_0 = arith.constant 0 : i32
    %c0_i32_1 = arith.constant 0 : i32
    return %c0_i32, %c0_i32_0 : i32, i32
  }
  func.func @transform_6(%arg0: i32) -> (i32, i32) {
    %c0_i32 = arith.constant 0 : i32
    %c0_i32_0 = arith.constant 0 : i32
    %c0_i32_1 = arith.constant 0 : i32
    return %c0_i32, %c0_i32_0 : i32, i32
  }
  func.func @transform_7(%arg0: i32) -> (i32, i32) {
    %c0_i32 = arith.constant 0 : i32
    %c0_i32_0 = arith.constant 0 : i32
    %c0_i32_1 = arith.constant 0 : i32
    return %c0_i32, %c0_i32_0 : i32, i32
  }
  func.func @transform_8(%arg0: i32) -> (i32, i32) {
    %c0_i32 = arith.constant 0 : i32
    %c0_i32_0 = arith.constant 0 : i32
    return %arg0, %c0_i32 : i32, i32
  }
}

</mosaic_0001>

<llo_original>
// kernel: tpu_custom_call.1
$region0: #{tpu_custom_call.1}
  #allocation0 [shape = 'u32[]', space=smem, size = 0x4, offset = 0x4, fixed_abs, tag = 'smem constant byte address 0x4 - core index']
  #allocation1 [shape = 'u32[144,128]{1,0:T(1,128)}', space=vmem, size = 0x12000, scoped, tag = 'internal scratch']
  #allocation2 [shape = 'f32[1,1]{1,0:T(1,128)S(1)}', space=vmem, size = 0x200, scoped, tag = 'scoped memory for tpu_custom_call.1']
  %s0 = inlined_call_operand.hbm [shape: bf16[2,8,384], index: 0, kind: input, shape index: {}]
  %s1 = inlined_call_operand.hbm [shape: bf16[2,8,384], index: 1, kind: input, shape index: {}]
  %s2 = inlined_call_operand.vmem [shape: f32[2,8,1], index: 2, kind: input, shape index: {}]
  %s3 = inlined_call_operand.vmem [shape: f32[2,8,1], index: 3, kind: input, shape index: {}]
  %s4 = inlined_call_operand.hbm [shape: bf16[1152,768], index: 4, kind: input, shape index: {}]
  %s5 = inlined_call_operand.hbm [shape: f32[1,768], index: 5, kind: input, shape index: {}]
  %s6 = inlined_call_operand.hbm [shape: f32[1,768], index: 6, kind: input, shape index: {}]
  %s7 = inlined_call_operand.<no memory space> [shape: f32[1,1], index: 7, kind: input, shape index: {}]
  %s8 = inlined_call_operand.vmem [shape: f32[2,1], index: 8, kind: output, shape index: {}]
  %s9 = sld [smem:[#allocation0]]
  $region62: #{tpu_custom_call.1} parent=0
    _
  %s11 = ssub.s32 1, %s9
  %s12 = scalar_select 0, %s11, %s9
  %v13 = vstv %s7
  %14 = vst [vmem:[#allocation2] sm:$0x1] %v13
  $region1: #{tpu_custom_call.1} parent=0
    #allocation3 [shape = 'u8[12288]{0}', space=vmem, size = 0x3000, scoped, tag = 'input window, operand 0, single buffered']
    #allocation4 [shape = 's32[1]{0}', space=sflag, size = 0x4, scoped, tag = 'scoped memory for tpu_custom_call.1']
    #allocation5 [shape = 'u8[12288]{0}', space=vmem, size = 0x3000, scoped, tag = 'input window, operand 1, single buffered']
    #allocation6 [shape = 's32[1]{0}', space=sflag, size = 0x4, scoped, tag = 'scoped memory for tpu_custom_call.1']
    #allocation7 [shape = 'u8[1769472]{0}', space=vmem, size = 0x1b0000, scoped, tag = 'input window, operand 4, single buffered']
    #allocation8 [shape = 'u8[3072]{0}', space=vmem, size = 0xc00, scoped, tag = 'input window, operand 5, single buffered']
    #allocation9 [shape = 's32[1]{0}', space=sflag, size = 0x4, scoped, tag = 'scoped memory for tpu_custom_call.1']
    #allocation10 [shape = 'u8[3072]{0}', space=vmem, size = 0xc00, scoped, tag = 'input window, operand 6, single buffered']
    %15 = vsyncpa [#allocation4], 0
    %16 = vsyncpa [#allocation6], 0
    %17 = vsyncpa [#allocation9], 0
    // Predicated region
    $region2: #{tpu_custom_call.1} parent=1 // pred_check
      _
    $region3: #{tpu_custom_call.1} parent=1 // pred_check_branch
      %19 = sbr.rel (0) target = $region5
    $region4: #{tpu_custom_call.1} parent=1 // pred_region
      %s21 = ssub.s32 384, 384
      %22 = vsyncadd [#allocation4], %s21
      %s23 = sshll.u32 [#allocation3], 4
      %s24 = int_to_ptr.vmem [resolvable:$true] %s23
      %29 = dma.hbm_to_vmem [thread:$0]  %s0, 384, %s24, [#allocation4], 192, 192, 12
    $region5: #{tpu_custom_call.1} parent=1 // pred_fallthru
      _
    // Predicated region
    $region6: #{tpu_custom_call.1} parent=1 // pred_check
      _
    $region7: #{tpu_custom_call.1} parent=1 // pred_check_branch
      %31 = sbr.rel (0) target = $region9
    $region8: #{tpu_custom_call.1} parent=1 // pred_region
      %s33 = ssub.s32 384, 384
      %34 = vsyncadd [#allocation6], %s33
      %s35 = sshll.u32 [#allocation5], 4
      %s36 = int_to_ptr.vmem [resolvable:$true] %s35
      %41 = dma.hbm_to_vmem [thread:$0]  %s1, 384, %s36, [#allocation6], 192, 192, 12
    $region9: #{tpu_custom_call.1} parent=1 // pred_fallthru
      _
    // Predicated region
    $region10: #{tpu_custom_call.1} parent=1 // pred_check
      _
    $region11: #{tpu_custom_call.1} parent=1 // pred_check_branch
      %43 = sbr.rel (0) target = $region13
    $region12: #{tpu_custom_call.1} parent=1 // pred_region
      _
    $region13: #{tpu_custom_call.1} parent=1 // pred_fallthru
      _
    // Predicated region
    $region14: #{tpu_custom_call.1} parent=1 // pred_check
      _
    $region15: #{tpu_custom_call.1} parent=1 // pred_check_branch
      %45 = sbr.rel (0) target = $region17
    $region16: #{tpu_custom_call.1} parent=1 // pred_region
      _
    $region17: #{tpu_custom_call.1} parent=1 // pred_fallthru
      _
    // Predicated region
    $region18: #{tpu_custom_call.1} parent=1 // pred_check
      _
    $region19: #{tpu_custom_call.1} parent=1 // pred_check_branch
      %47 = sbr.rel (0) target = $region21
    $region20: #{tpu_custom_call.1} parent=1 // pred_region
      %s49 = ssub.s32 55296, 55296
      %50 = vsyncadd [#allocation6], %s49
      %s51 = sshll.u32 [#allocation7], 4
      %s52 = int_to_ptr.vmem [resolvable:$true] %s51
      %57 = dma.hbm_to_vmem [thread:$0]  %s4, 55296, %s52, [#allocation6], 384, 384, 24
    $region21: #{tpu_custom_call.1} parent=1 // pred_fallthru
      _
    // Predicated region
    $region22: #{tpu_custom_call.1} parent=1 // pred_check
      _
    $region23: #{tpu_custom_call.1} parent=1 // pred_check_branch
      %59 = sbr.rel (0) target = $region25
    $region24: #{tpu_custom_call.1} parent=1 // pred_region
      %s61 = ssub.s32 96, 96
      %62 = vsyncadd [#allocation9], %s61
      %s64 = sshll.u32 [#allocation8], 4
      %s65 = int_to_ptr.vmem [resolvable:$true] %s64
      %67 = dma.hbm_to_vmem [thread:$0]  %s5, 96, %s65, [#allocation9]
    $region25: #{tpu_custom_call.1} parent=1 // pred_fallthru
      _
    // Predicated region
    $region26: #{tpu_custom_call.1} parent=1 // pred_check
      _
    $region27: #{tpu_custom_call.1} parent=1 // pred_check_branch
      %69 = sbr.rel (0) target = $region29
    $region28: #{tpu_custom_call.1} parent=1 // pred_region
      %s71 = ssub.s32 96, 96
      %72 = vsyncadd [#allocation9], %s71
      %s74 = sshll.u32 [#allocation10], 4
      %s75 = int_to_ptr.vmem [resolvable:$true] %s74
      %77 = dma.hbm_to_vmem [thread:$0]  %s6, 96, %s75, [#allocation9]
    $region29: #{tpu_custom_call.1} parent=1 // pred_fallthru
      _
    // Predicated region
    $region30: #{tpu_custom_call.1} parent=1 // pred_check
      _
    $region31: #{tpu_custom_call.1} parent=1 // pred_check_branch
      %79 = sbr.rel (0) target = $region33
    $region32: #{tpu_custom_call.1} parent=1 // pred_region
      _
    $region33: #{tpu_custom_call.1} parent=1 // pred_fallthru
      _
    // Predicated region
    $region34: #{tpu_custom_call.1} parent=1 // pred_check
      _
    $region35: #{tpu_custom_call.1} parent=1 // pred_check_branch
      %81 = sbr.rel (0) target = $region37
    $region36: #{tpu_custom_call.1} parent=1 // pred_region
      %82 = dma.done [#allocation4], 384
    $region37: #{tpu_custom_call.1} parent=1 // pred_fallthru
      _
    // Predicated region
    $region38: #{tpu_custom_call.1} parent=1 // pred_check
      _
    $region39: #{tpu_custom_call.1} parent=1 // pred_check_branch
      %84 = sbr.rel (0) target = $region41
    $region40: #{tpu_custom_call.1} parent=1 // pred_region
      %85 = dma.done [#allocation6], 384
    $region41: #{tpu_custom_call.1} parent=1 // pred_fallthru
      _
    // Predicated region
    $region42: #{tpu_custom_call.1} parent=1 // pred_check
      _
    $region43: #{tpu_custom_call.1} parent=1 // pred_check_branch
      %87 = sbr.rel (0) target = $region45
    $region44: #{tpu_custom_call.1} parent=1 // pred_region
      %88 = dma.done [#allocation6], 55296
    $region45: #{tpu_custom_call.1} parent=1 // pred_fallthru
      _
    // Predicated region
    $region46: #{tpu_custom_call.1} parent=1 // pred_check
      _
    $region47: #{tpu_custom_call.1} parent=1 // pred_check_branch
      %90 = sbr.rel (0) target = $region49
    $region48: #{tpu_custom_call.1} parent=1 // pred_region
      %91 = dma.done [#allocation9], 96
    $region49: #{tpu_custom_call.1} parent=1 // pred_fallthru
      _
    // Predicated region
    $region50: #{tpu_custom_call.1} parent=1 // pred_check
      _
    $region51: #{tpu_custom_call.1} parent=1 // pred_check_branch
      %93 = sbr.rel (0) target = $region53
    $region52: #{tpu_custom_call.1} parent=1 // pred_region
      %94 = dma.done [#allocation9], 96
    $region53: #{tpu_custom_call.1} parent=1 // pred_fallthru
      _
    %v96 = vld [vmem:[%s2] sm:$0xff]
    %v97 = vld [vmem:[%s2 + $0x8] sm:$0xff]
    %v98 = vld [vmem:[%s3] sm:$0xff]
    %v99 = vld [vmem:[%s3 + $0x8] sm:$0xff]
    %v100 = vld [vmem:[#allocation3] sm:$0xff]
    %v101 = vld [vmem:[#allocation3 + $0x8] sm:$0xf]
    %v102 = vld [vmem:[#allocation3 + $0xc] sm:$0xff]
    %v103 = vld [vmem:[#allocation3 + $0x14] sm:$0xf]
    %v104 = vunpack.c.l.bf16 %v100
    %v105 = vunpack.c.h.bf16 %v100
    %v106 = vunpack.c.l.bf16 %v101
    %v107 = vunpack.c.l.bf16 %v102
    %v108 = vunpack.c.h.bf16 %v102
    %v109 = vunpack.c.l.bf16 %v103
    %v110 = vld [vmem:[#allocation5] sm:$0xff]
    %v111 = vld [vmem:[#allocation5 + $0x8] sm:$0xf]
    %v112 = vld [vmem:[#allocation5 + $0xc] sm:$0xff]
    %v113 = vld [vmem:[#allocation5 + $0x14] sm:$0xf]
    %v114 = vunpack.c.l.bf16 %v110
    %v115 = vunpack.c.h.bf16 %v110
    %v116 = vunpack.c.l.bf16 %v111
    %v117 = vunpack.c.l.bf16 %v112
    %v118 = vunpack.c.h.bf16 %v112
    %v119 = vunpack.c.l.bf16 %v113
    %121 = vset.pattern.permute.xlu0 0
    %122 = vperm.xlu0 %121, %v96
    %v123 = vpop.permute.xlu0 %122
    %126 = vset.pattern.permute.xlu0 0
    %127 = vperm.xlu0 %126, %v97
    %v128 = vpop.permute.xlu0 %127
    %v130 = vmul.f32 %v104, %v123
    %v131 = vmul.f32 %v105, %v123
    %v132 = vmul.f32 %v106, %v123
    %v133 = vmul.f32 %v107, %v128
    %v134 = vmul.f32 %v108, %v128
    %v135 = vmul.f32 %v109, %v128
    %v136 = vrot.slane %v130, 4
    %v137 = vadd.f32 %v130, %v136
    %v138 = vrot.slane %v137, 2
    %v139 = vadd.f32 %v137, %v138
    %v140 = vrot.slane %v139, 1
    %v141 = vadd.f32 %v139, %v140
    %v142 = vrot.slane %v131, 4
    %v143 = vadd.f32 %v131, %v142
    %v144 = vrot.slane %v143, 2
    %v145 = vadd.f32 %v143, %v144
    %v146 = vrot.slane %v145, 1
    %v147 = vadd.f32 %v145, %v146
    %v148 = vrot.slane %v132, 4
    %v149 = vadd.f32 %v132, %v148
    %v150 = vrot.slane %v149, 2
    %v151 = vadd.f32 %v149, %v150
    %v152 = vrot.slane %v151, 1
    %v153 = vadd.f32 %v151, %v152
    %v154 = vrot.slane %v133, 4
    %v155 = vadd.f32 %v133, %v154
    %v156 = vrot.slane %v155, 2
    %v157 = vadd.f32 %v155, %v156
    %v158 = vrot.slane %v157, 1
    %v159 = vadd.f32 %v157, %v158
    %v160 = vrot.slane %v134, 4
    %v161 = vadd.f32 %v134, %v160
    %v162 = vrot.slane %v161, 2
    %v163 = vadd.f32 %v161, %v162
    %v164 = vrot.slane %v163, 1
    %v165 = vadd.f32 %v163, %v164
    %v166 = vrot.slane %v135, 4
    %v167 = vadd.f32 %v135, %v166
    %v168 = vrot.slane %v167, 2
    %v169 = vadd.f32 %v167, %v168
    %v170 = vrot.slane %v169, 1
    %v171 = vadd.f32 %v169, %v170
    %173 = vset.pattern.permute.xlu0 0
    %174 = vperm.xlu0 %173, %v98
    %v175 = vpop.permute.xlu0 %174
    %178 = vset.pattern.permute.xlu0 0
    %179 = vperm.xlu0 %178, %v99
    %v180 = vpop.permute.xlu0 %179
    %v182 = vmul.f32 %v114, %v175
    %v183 = vmul.f32 %v115, %v175
    %v184 = vmul.f32 %v116, %v175
    %v185 = vmul.f32 %v117, %v180
    %v186 = vmul.f32 %v118, %v180
    %v187 = vmul.f32 %v119, %v180
    %v188 = vrot.slane %v182, 4
    %v189 = vadd.f32 %v182, %v188
    %v190 = vrot.slane %v189, 2
    %v191 = vadd.f32 %v189, %v190
    %v192 = vrot.slane %v191, 1
    %v193 = vadd.f32 %v191, %v192
    %v194 = vrot.slane %v183, 4
    %v195 = vadd.f32 %v183, %v194
    %v196 = vrot.slane %v195, 2
    %v197 = vadd.f32 %v195, %v196
    %v198 = vrot.slane %v197, 1
    %v199 = vadd.f32 %v197, %v198
    %v200 = vrot.slane %v184, 4
    %v201 = vadd.f32 %v184, %v200
    %v202 = vrot.slane %v201, 2
    %v203 = vadd.f32 %v201, %v202
    %v204 = vrot.slane %v203, 1
    %v205 = vadd.f32 %v203, %v204
    %v206 = vrot.slane %v185, 4
    %v207 = vadd.f32 %v185, %v206
    %v208 = vrot.slane %v207, 2
    %v209 = vadd.f32 %v207, %v208
    %v210 = vrot.slane %v209, 1
    %v211 = vadd.f32 %v209, %v210
    %v212 = vrot.slane %v186, 4
    %v213 = vadd.f32 %v186, %v212
    %v214 = vrot.slane %v213, 2
    %v215 = vadd.f32 %v213, %v214
    %v216 = vrot.slane %v215, 1
    %v217 = vadd.f32 %v215, %v216
    %v218 = vrot.slane %v187, 4
    %v219 = vadd.f32 %v187, %v218
    %v220 = vrot.slane %v219, 2
    %v221 = vadd.f32 %v219, %v220
    %v222 = vrot.slane %v221, 1
    %v223 = vadd.f32 %v221, %v222
    %vm224 = vcmask 7168
    %v225 = vsel %vm224, %v96, 0.0
    %v226 = vrot.slane %v225, 4
    %v227 = vadd.f32 %v225, %v226
    %v228 = vrot.slane %v227, 2
    %v229 = vadd.f32 %v227, %v228
    %v230 = vrot.slane %v229, 1
    %v231 = vadd.f32 %v229, %v230
    %v232 = vsel %vm224, %v97, 0.0
    %v233 = vrot.slane %v232, 4
    %v234 = vadd.f32 %v232, %v233
    %v235 = vrot.slane %v234, 2
    %v236 = vadd.f32 %v234, %v235
    %v237 = vrot.slane %v236, 1
    %v238 = vadd.f32 %v236, %v237
    %v239 = vmax.f32 %v231, 1e-09
    %v240 = vmax.f32 %v238, 1e-09
    %v241 = vrcp.pop %v239
    %v242 = vrcp.pop %v240
    %v243 = vsel %vm224, %v98, 0.0
    %v244 = vrot.slane %v243, 4
    %v245 = vadd.f32 %v243, %v244
    %v246 = vrot.slane %v245, 2
    %v247 = vadd.f32 %v245, %v246
    %v248 = vrot.slane %v247, 1
    %v249 = vadd.f32 %v247, %v248
    %v250 = vsel %vm224, %v99, 0.0
    %v251 = vrot.slane %v250, 4
    %v252 = vadd.f32 %v250, %v251
    %v253 = vrot.slane %v252, 2
    %v254 = vadd.f32 %v252, %v253
    %v255 = vrot.slane %v254, 1
    %v256 = vadd.f32 %v254, %v255
    %v257 = vmax.f32 %v249, 1e-09
    %v258 = vmax.f32 %v256, 1e-09
    %v259 = vrcp.pop %v257
    %v260 = vrcp.pop %v258
    %262 = vset.pattern.permute.xlu0 0
    %263 = vperm.xlu0 %262, %v241
    %v264 = vpop.permute.xlu0 %263
    %267 = vset.pattern.permute.xlu0 0
    %268 = vperm.xlu0 %267, %v242
    %v269 = vpop.permute.xlu0 %268
    %v271 = vmul.f32 %v141, %v264
    %v272 = vmul.f32 %v147, %v264
    %v273 = vmul.f32 %v153, %v264
    %v274 = vmul.f32 %v159, %v269
    %v275 = vmul.f32 %v165, %v269
    %v276 = vmul.f32 %v171, %v269
    %278 = vset.pattern.permute.xlu0 0
    %279 = vperm.xlu0 %278, %v259
    %v280 = vpop.permute.xlu0 %279
    %283 = vset.pattern.permute.xlu0 0
    %284 = vperm.xlu0 %283, %v260
    %v285 = vpop.permute.xlu0 %284
    %v287 = vmul.f32 %v193, %v280
    %v288 = vmul.f32 %v199, %v280
    %v289 = vmul.f32 %v205, %v280
    %v290 = vmul.f32 %v211, %v285
    %v291 = vmul.f32 %v217, %v285
    %v292 = vmul.f32 %v223, %v285
    %v293 = vmul.f32 %v271, %v287
    %v294 = vmul.f32 %v272, %v288
    %v295 = vmul.f32 %v273, %v289
    %v296 = vmul.f32 %v274, %v290
    %v297 = vmul.f32 %v275, %v291
    %v298 = vmul.f32 %v276, %v292
    %v299 = vpack.c.bf16 %v271, %v271
    %v300 = vpack.c.bf16 %v272, %v272
    %v301 = vpack.c.bf16 %v273, %v273
    %v302 = vpack.c.bf16 %v274, %v274
    %v303 = vpack.c.bf16 %v275, %v275
    %v304 = vpack.c.bf16 %v276, %v276
    %v305 = vpack.c.bf16 %v287, %v287
    %v306 = vpack.c.bf16 %v288, %v288
    %v307 = vpack.c.bf16 %v289, %v289
    %v308 = vpack.c.bf16 %v290, %v290
    %v309 = vpack.c.bf16 %v291, %v291
    %v310 = vpack.c.bf16 %v292, %v292
    %v311 = vpack.c.bf16 %v293, %v293
    %v312 = vpack.c.bf16 %v294, %v294
    %v313 = vpack.c.bf16 %v295, %v295
    %v314 = vpack.c.bf16 %v296, %v296
    %v315 = vpack.c.bf16 %v297, %v297
    %v316 = vpack.c.bf16 %v298, %v298
    %v317 = vld [vmem:[#allocation7] sm:$0xff]
    %v318 = vld [vmem:[#allocation7 + $0x8] sm:$0xff]
    %v319 = vld [vmem:[#allocation7 + $0x10] sm:$0xff]
    %v320 = vld [vmem:[#allocation7 + $0x18] sm:$0xff]
    %v321 = vld [vmem:[#allocation7 + $0x20] sm:$0xff]
    %v322 = vld [vmem:[#allocation7 + $0x28] sm:$0xff]
    %v323 = vld [vmem:[#allocation7 + $0x30] sm:$0xff]
    %v324 = vld [vmem:[#allocation7 + $0x38] sm:$0xff]
    %v325 = vld [vmem:[#allocation7 + $0x40] sm:$0xff]
    %v326 = vld [vmem:[#allocation7 + $0x48] sm:$0xff]
    %v327 = vld [vmem:[#allocation7 + $0x50] sm:$0xff]
    %v328 = vld [vmem:[#allocation7 + $0x58] sm:$0xff]
    %v329 = vld [vmem:[#allocation7 + $0x60] sm:$0xff]
    %v330 = vld [vmem:[#allocation7 + $0x68] sm:$0xff]
    %v331 = vld [vmem:[#allocation7 + $0x70] sm:$0xff]
    %v332 = vld [vmem:[#allocation7 + $0x78] sm:$0xff]
    %v333 = vld [vmem:[#allocation7 + $0x80] sm:$0xff]
    %v334 = vld [vmem:[#allocation7 + $0x88] sm:$0xff]
    %v335 = vld [vmem:[#allocation7 + $0x90] sm:$0xff]
    %v336 = vld [vmem:[#allocation7 + $0x98] sm:$0xff]
    %v337 = vld [vmem:[#allocation7 + $0xa0] sm:$0xff]
    %v338 = vld [vmem:[#allocation7 + $0xa8] sm:$0xff]
    %v339 = vld [vmem:[#allocation7 + $0xb0] sm:$0xff]
    %v340 = vld [vmem:[#allocation7 + $0xb8] sm:$0xff]
    %v341 = vld [vmem:[#allocation7 + $0xc0] sm:$0xff]
    %v342 = vld [vmem:[#allocation7 + $0xc8] sm:$0xff]
    %v343 = vld [vmem:[#allocation7 + $0xd0] sm:$0xff]
    %v344 = vld [vmem:[#allocation7 + $0xd8] sm:$0xff]
    %v345 = vld [vmem:[#allocation7 + $0xe0] sm:$0xff]
    %v346 = vld [vmem:[#allocation7 + $0xe8] sm:$0xff]
    %v347 = vld [vmem:[#allocation7 + $0xf0] sm:$0xff]
    %v348 = vld [vmem:[#allocation7 + $0xf8] sm:$0xff]
    %v349 = vld [vmem:[#allocation7 + $0x100] sm:$0xff]
    %v350 = vld [vmem:[#allocation7 + $0x108] sm:$0xff]
    %v351 = vld [vmem:[#allocation7 + $0x110] sm:$0xff]
    %v352 = vld [vmem:[#allocation7 + $0x118] sm:$0xff]
    %v353 = vld [vmem:[#allocation7 + $0x120] sm:$0xff]
    %v354 = vld [vmem:[#allocation7 + $0x128] sm:$0xff]
    %v355 = vld [vmem:[#allocation7 + $0x130] sm:$0xff]
    %v356 = vld [vmem:[#allocation7 + $0x138] sm:$0xff]
    %v357 = vld [vmem:[#allocation7 + $0x140] sm:$0xff]
    %v358 = vld [vmem:[#allocation7 + $0x148] sm:$0xff]
    %v359 = vld [vmem:[#allocation7 + $0x150] sm:$0xff]
    %v360 = vld [vmem:[#allocation7 + $0x158] sm:$0xff]
    %v361 = vld [vmem:[#allocation7 + $0x160] sm:$0xff]
    %v362 = vld [vmem:[#allocation7 + $0x168] sm:$0xff]
    %v363 = vld [vmem:[#allocation7 + $0x170] sm:$0xff]
    %v364 = vld [vmem:[#allocation7 + $0x178] sm:$0xff]
    %v365 = vld [vmem:[#allocation7 + $0x180] sm:$0xff]
    %v366 = vld [vmem:[#allocation7 + $0x188] sm:$0xff]
    %v367 = vld [vmem:[#allocation7 + $0x190] sm:$0xff]
    %v368 = vld [vmem:[#allocation7 + $0x198] sm:$0xff]
    %v369 = vld [vmem:[#allocation7 + $0x1a0] sm:$0xff]
    %v370 = vld [vmem:[#allocation7 + $0x1a8] sm:$0xff]
    %v371 = vld [vmem:[#allocation7 + $0x1b0] sm:$0xff]
    %v372 = vld [vmem:[#allocation7 + $0x1b8] sm:$0xff]
    %v373 = vld [vmem:[#allocation7 + $0x1c0] sm:$0xff]
    %v374 = vld [vmem:[#allocation7 + $0x1c8] sm:$0xff]
    %v375 = vld [vmem:[#allocation7 + $0x1d0] sm:$0xff]
    %v376 = vld [vmem:[#allocation7 + $0x1d8] sm:$0xff]
    %v377 = vld [vmem:[#allocation7 + $0x1e0] sm:$0xff]
    %v378 = vld [vmem:[#allocation7 + $0x1e8] sm:$0xff]
    %v379 = vld [vmem:[#allocation7 + $0x1f0] sm:$0xff]
    %v380 = vld [vmem:[#allocation7 + $0x1f8] sm:$0xff]
    %v381 = vld [vmem:[#allocation7 + $0x200] sm:$0xff]
    %v382 = vld [vmem:[#allocation7 + $0x208] sm:$0xff]
    %v383 = vld [vmem:[#allocation7 + $0x210] sm:$0xff]
    %v384 = vld [vmem:[#allocation7 + $0x218] sm:$0xff]
    %v385 = vld [vmem:[#allocation7 + $0x220] sm:$0xff]
    %v386 = vld [vmem:[#allocation7 + $0x228] sm:$0xff]
    %v387 = vld [vmem:[#allocation7 + $0x230] sm:$0xff]
    %v388 = vld [vmem:[#allocation7 + $0x238] sm:$0xff]
    %v389 = vld [vmem:[#allocation7 + $0x240] sm:$0xff]
    %v390 = vld [vmem:[#allocation7 + $0x248] sm:$0xff]
    %v391 = vld [vmem:[#allocation7 + $0x250] sm:$0xff]
    %v392 = vld [vmem:[#allocation7 + $0x258] sm:$0xff]
    %v393 = vld [vmem:[#allocation7 + $0x260] sm:$0xff]
    %v394 = vld [vmem:[#allocation7 + $0x268] sm:$0xff]
    %v395 = vld [vmem:[#allocation7 + $0x270] sm:$0xff]
    %v396 = vld [vmem:[#allocation7 + $0x278] sm:$0xff]
    %v397 = vld [vmem:[#allocation7 + $0x280] sm:$0xff]
    %v398 = vld [vmem:[#allocation7 + $0x288] sm:$0xff]
    %v399 = vld [vmem:[#allocation7 + $0x290] sm:$0xff]
    %v400 = vld [vmem:[#allocation7 + $0x298] sm:$0xff]
    %v401 = vld [vmem:[#allocation7 + $0x2a0] sm:$0xff]
    %v402 = vld [vmem:[#allocation7 + $0x2a8] sm:$0xff]
    %v403 = vld [vmem:[#allocation7 + $0x2b0] sm:$0xff]
    %v404 = vld [vmem:[#allocation7 + $0x2b8] sm:$0xff]
    %v405 = vld [vmem:[#allocation7 + $0x2c0] sm:$0xff]
    %v406 = vld [vmem:[#allocation7 + $0x2c8] sm:$0xff]
    %v407 = vld [vmem:[#allocation7 + $0x2d0] sm:$0xff]
    %v408 = vld [vmem:[#allocation7 + $0x2d8] sm:$0xff]
    %v409 = vld [vmem:[#allocation7 + $0x2e0] sm:$0xff]
    %v410 = vld [vmem:[#allocation7 + $0x2e8] sm:$0xff]
    %v411 = vld [vmem:[#allocation7 + $0x2f0] sm:$0xff]
    %v412 = vld [vmem:[#allocation7 + $0x2f8] sm:$0xff]
    %v413 = vld [vmem:[#allocation7 + $0x300] sm:$0xff]
    %v414 = vld [vmem:[#allocation7 + $0x308] sm:$0xff]
    %v415 = vld [vmem:[#allocation7 + $0x310] sm:$0xff]
    %v416 = vld [vmem:[#allocation7 + $0x318] sm:$0xff]
    %v417 = vld [vmem:[#allocation7 + $0x320] sm:$0xff]
    %v418 = vld [vmem:[#allocation7 + $0x328] sm:$0xff]
    %v419 = vld [vmem:[#allocation7 + $0x330] sm:$0xff]
    %v420 = vld [vmem:[#allocation7 + $0x338] sm:$0xff]
    %v421 = vld [vmem:[#allocation7 + $0x340] sm:$0xff]
    %v422 = vld [vmem:[#allocation7 + $0x348] sm:$0xff]
    %v423 = vld [vmem:[#allocation7 + $0x350] sm:$0xff]
    %v424 = vld [vmem:[#allocation7 + $0x358] sm:$0xff]
    %v425 = vld [vmem:[#allocation7 + $0x360] sm:$0xff]
    %v426 = vld [vmem:[#allocation7 + $0x368] sm:$0xff]
    %v427 = vld [vmem:[#allocation7 + $0x370] sm:$0xff]
    %v428 = vld [vmem:[#allocation7 + $0x378] sm:$0xff]
    %v429 = vld [vmem:[#allocation7 + $0x380] sm:$0xff]
    %v430 = vld [vmem:[#allocation7 + $0x388] sm:$0xff]
    %v431 = vld [vmem:[#allocation7 + $0x390] sm:$0xff]
    %v432 = vld [vmem:[#allocation7 + $0x398] sm:$0xff]
    %v433 = vld [vmem:[#allocation7 + $0x3a0] sm:$0xff]
    %v434 = vld [vmem:[#allocation7 + $0x3a8] sm:$0xff]
    %v435 = vld [vmem:[#allocation7 + $0x3b0] sm:$0xff]
    %v436 = vld [vmem:[#allocation7 + $0x3b8] sm:$0xff]
    %v437 = vld [vmem:[#allocation7 + $0x3c0] sm:$0xff]
    %v438 = vld [vmem:[#allocation7 + $0x3c8] sm:$0xff]
    %v439 = vld [vmem:[#allocation7 + $0x3d0] sm:$0xff]
    %v440 = vld [vmem:[#allocation7 + $0x3d8] sm:$0xff]
    %v441 = vld [vmem:[#allocation7 + $0x3e0] sm:$0xff]
    %v442 = vld [vmem:[#allocation7 + $0x3e8] sm:$0xff]
    %v443 = vld [vmem:[#allocation7 + $0x3f0] sm:$0xff]
    %v444 = vld [vmem:[#allocation7 + $0x3f8] sm:$0xff]
    %v445 = vld [vmem:[#allocation7 + $0x400] sm:$0xff]
    %v446 = vld [vmem:[#allocation7 + $0x408] sm:$0xff]
    %v447 = vld [vmem:[#allocation7 + $0x410] sm:$0xff]
    %v448 = vld [vmem:[#allocation7 + $0x418] sm:$0xff]
    %v449 = vld [vmem:[#allocation7 + $0x420] sm:$0xff]
    %v450 = vld [vmem:[#allocation7 + $0x428] sm:$0xff]
    %v451 = vld [vmem:[#allocation7 + $0x430] sm:$0xff]
    %v452 = vld [vmem:[#allocation7 + $0x438] sm:$0xff]
    %v453 = vld [vmem:[#allocation7 + $0x440] sm:$0xff]
    %v454 = vld [vmem:[#allocation7 + $0x448] sm:$0xff]
    %v455 = vld [vmem:[#allocation7 + $0x450] sm:$0xff]
    %v456 = vld [vmem:[#allocation7 + $0x458] sm:$0xff]
    %v457 = vld [vmem:[#allocation7 + $0x460] sm:$0xff]
    %v458 = vld [vmem:[#allocation7 + $0x468] sm:$0xff]
    %v459 = vld [vmem:[#allocation7 + $0x470] sm:$0xff]
    %v460 = vld [vmem:[#allocation7 + $0x478] sm:$0xff]
    %v461 = vld [vmem:[#allocation7 + $0x480] sm:$0xff]
    %v462 = vld [vmem:[#allocation7 + $0x488] sm:$0xff]
    %v463 = vld [vmem:[#allocation7 + $0x490] sm:$0xff]
    %v464 = vld [vmem:[#allocation7 + $0x498] sm:$0xff]
    %v465 = vld [vmem:[#allocation7 + $0x4a0] sm:$0xff]
    %v466 = vld [vmem:[#allocation7 + $0x4a8] sm:$0xff]
    %v467 = vld [vmem:[#allocation7 + $0x4b0] sm:$0xff]
    %v468 = vld [vmem:[#allocation7 + $0x4b8] sm:$0xff]
    %v469 = vld [vmem:[#allocation7 + $0x4c0] sm:$0xff]
    %v470 = vld [vmem:[#allocation7 + $0x4c8] sm:$0xff]
    %v471 = vld [vmem:[#allocation7 + $0x4d0] sm:$0xff]
    %v472 = vld [vmem:[#allocation7 + $0x4d8] sm:$0xff]
    %v473 = vld [vmem:[#allocation7 + $0x4e0] sm:$0xff]
    %v474 = vld [vmem:[#allocation7 + $0x4e8] sm:$0xff]
    %v475 = vld [vmem:[#allocation7 + $0x4f0] sm:$0xff]
    %v476 = vld [vmem:[#allocation7 + $0x4f8] sm:$0xff]
    %v477 = vld [vmem:[#allocation7 + $0x500] sm:$0xff]
    %v478 = vld [vmem:[#allocation7 + $0x508] sm:$0xff]
    %v479 = vld [vmem:[#allocation7 + $0x510] sm:$0xff]
    %v480 = vld [vmem:[#allocation7 + $0x518] sm:$0xff]
    %v481 = vld [vmem:[#allocation7 + $0x520] sm:$0xff]
    %v482 = vld [vmem:[#allocation7 + $0x528] sm:$0xff]
    %v483 = vld [vmem:[#allocation7 + $0x530] sm:$0xff]
    %v484 = vld [vmem:[#allocation7 + $0x538] sm:$0xff]
    %v485 = vld [vmem:[#allocation7 + $0x540] sm:$0xff]
    %v486 = vld [vmem:[#allocation7 + $0x548] sm:$0xff]
    %v487 = vld [vmem:[#allocation7 + $0x550] sm:$0xff]
    %v488 = vld [vmem:[#allocation7 + $0x558] sm:$0xff]
    %v489 = vld [vmem:[#allocation7 + $0x560] sm:$0xff]
    %v490 = vld [vmem:[#allocation7 + $0x568] sm:$0xff]
    %v491 = vld [vmem:[#allocation7 + $0x570] sm:$0xff]
    %v492 = vld [vmem:[#allocation7 + $0x578] sm:$0xff]
    %v493 = vld [vmem:[#allocation7 + $0x580] sm:$0xff]
    %v494 = vld [vmem:[#allocation7 + $0x588] sm:$0xff]
    %v495 = vld [vmem:[#allocation7 + $0x590] sm:$0xff]
    %v496 = vld [vmem:[#allocation7 + $0x598] sm:$0xff]
    %v497 = vld [vmem:[#allocation7 + $0x5a0] sm:$0xff]
    %v498 = vld [vmem:[#allocation7 + $0x5a8] sm:$0xff]
    %v499 = vld [vmem:[#allocation7 + $0x5b0] sm:$0xff]
    %v500 = vld [vmem:[#allocation7 + $0x5b8] sm:$0xff]
    %v501 = vld [vmem:[#allocation7 + $0x5c0] sm:$0xff]
    %v502 = vld [vmem:[#allocation7 + $0x5c8] sm:$0xff]
    %v503 = vld [vmem:[#allocation7 + $0x5d0] sm:$0xff]
    %v504 = vld [vmem:[#allocation7 + $0x5d8] sm:$0xff]
    %v505 = vld [vmem:[#allocation7 + $0x5e0] sm:$0xff]
    %v506 = vld [vmem:[#allocation7 + $0x5e8] sm:$0xff]
    %v507 = vld [vmem:[#allocation7 + $0x5f0] sm:$0xff]
    %v508 = vld [vmem:[#allocation7 + $0x5f8] sm:$0xff]
    %v509 = vld [vmem:[#allocation7 + $0x600] sm:$0xff]
    %v510 = vld [vmem:[#allocation7 + $0x608] sm:$0xff]
    %v511 = vld [vmem:[#allocation7 + $0x610] sm:$0xff]
    %v512 = vld [vmem:[#allocation7 + $0x618] sm:$0xff]
    %v513 = vld [vmem:[#allocation7 + $0x620] sm:$0xff]
    %v514 = vld [vmem:[#allocation7 + $0x628] sm:$0xff]
    %v515 = vld [vmem:[#allocation7 + $0x630] sm:$0xff]
    %v516 = vld [vmem:[#allocation7 + $0x638] sm:$0xff]
    %v517 = vld [vmem:[#allocation7 + $0x640] sm:$0xff]
    %v518 = vld [vmem:[#allocation7 + $0x648] sm:$0xff]
    %v519 = vld [vmem:[#allocation7 + $0x650] sm:$0xff]
    %v520 = vld [vmem:[#allocation7 + $0x658] sm:$0xff]
    %v521 = vld [vmem:[#allocation7 + $0x660] sm:$0xff]
    %v522 = vld [vmem:[#allocation7 + $0x668] sm:$0xff]
    %v523 = vld [vmem:[#allocation7 + $0x670] sm:$0xff]
    %v524 = vld [vmem:[#allocation7 + $0x678] sm:$0xff]
    %v525 = vld [vmem:[#allocation7 + $0x680] sm:$0xff]
    %v526 = vld [vmem:[#allocation7 + $0x688] sm:$0xff]
    %v527 = vld [vmem:[#allocation7 + $0x690] sm:$0xff]
    %v528 = vld [vmem:[#allocation7 + $0x698] sm:$0xff]
    %v529 = vld [vmem:[#allocation7 + $0x6a0] sm:$0xff]
    %v530 = vld [vmem:[#allocation7 + $0x6a8] sm:$0xff]
    %v531 = vld [vmem:[#allocation7 + $0x6b0] sm:$0xff]
    %v532 = vld [vmem:[#allocation7 + $0x6b8] sm:$0xff]
    %v533 = vld [vmem:[#allocation7 + $0x6c0] sm:$0xff]
    %v534 = vld [vmem:[#allocation7 + $0x6c8] sm:$0xff]
    %v535 = vld [vmem:[#allocation7 + $0x6d0] sm:$0xff]
    %v536 = vld [vmem:[#allocation7 + $0x6d8] sm:$0xff]
    %v537 = vld [vmem:[#allocation7 + $0x6e0] sm:$0xff]
    %v538 = vld [vmem:[#allocation7 + $0x6e8] sm:$0xff]
    %v539 = vld [vmem:[#allocation7 + $0x6f0] sm:$0xff]
    %v540 = vld [vmem:[#allocation7 + $0x6f8] sm:$0xff]
    %v541 = vld [vmem:[#allocation7 + $0x700] sm:$0xff]
    %v542 = vld [vmem:[#allocation7 + $0x708] sm:$0xff]
    %v543 = vld [vmem:[#allocation7 + $0x710] sm:$0xff]
    %v544 = vld [vmem:[#allocation7 + $0x718] sm:$0xff]
    %v545 = vld [vmem:[#allocation7 + $0x720] sm:$0xff]
    %v546 = vld [vmem:[#allocation7 + $0x728] sm:$0xff]
    %v547 = vld [vmem:[#allocation7 + $0x730] sm:$0xff]
    %v548 = vld [vmem:[#allocation7 + $0x738] sm:$0xff]
    %v549 = vld [vmem:[#allocation7 + $0x740] sm:$0xff]
    %v550 = vld [vmem:[#allocation7 + $0x748] sm:$0xff]
    %v551 = vld [vmem:[#allocation7 + $0x750] sm:$0xff]
    %v552 = vld [vmem:[#allocation7 + $0x758] sm:$0xff]
    %v553 = vld [vmem:[#allocation7 + $0x760] sm:$0xff]
    %v554 = vld [vmem:[#allocation7 + $0x768] sm:$0xff]
    %v555 = vld [vmem:[#allocation7 + $0x770] sm:$0xff]
    %v556 = vld [vmem:[#allocation7 + $0x778] sm:$0xff]
    %v557 = vld [vmem:[#allocation7 + $0x780] sm:$0xff]
    %v558 = vld [vmem:[#allocation7 + $0x788] sm:$0xff]
    %v559 = vld [vmem:[#allocation7 + $0x790] sm:$0xff]
    %v560 = vld [vmem:[#allocation7 + $0x798] sm:$0xff]
    %v561 = vld [vmem:[#allocation7 + $0x7a0] sm:$0xff]
    %v562 = vld [vmem:[#allocation7 + $0x7a8] sm:$0xff]
    %v563 = vld [vmem:[#allocation7 + $0x7b0] sm:$0xff]
    %v564 = vld [vmem:[#allocation7 + $0x7b8] sm:$0xff]
    %v565 = vld [vmem:[#allocation7 + $0x7c0] sm:$0xff]
    %v566 = vld [vmem:[#allocation7 + $0x7c8] sm:$0xff]
    %v567 = vld [vmem:[#allocation7 + $0x7d0] sm:$0xff]
    %v568 = vld [vmem:[#allocation7 + $0x7d8] sm:$0xff]
    %v569 = vld [vmem:[#allocation7 + $0x7e0] sm:$0xff]
    %v570 = vld [vmem:[#allocation7 + $0x7e8] sm:$0xff]
    %v571 = vld [vmem:[#allocation7 + $0x7f0] sm:$0xff]
    %v572 = vld [vmem:[#allocation7 + $0x7f8] sm:$0xff]
    %v573 = vld [vmem:[#allocation7 + $0x800] sm:$0xff]
    %v574 = vld [vmem:[#allocation7 + $0x808] sm:$0xff]
    %v575 = vld [vmem:[#allocation7 + $0x810] sm:$0xff]
    %v576 = vld [vmem:[#allocation7 + $0x818] sm:$0xff]
    %v577 = vld [vmem:[#allocation7 + $0x820] sm:$0xff]
    %v578 = vld [vmem:[#allocation7 + $0x828] sm:$0xff]
    %v579 = vld [vmem:[#allocation7 + $0x830] sm:$0xff]
    %v580 = vld [vmem:[#allocation7 + $0x838] sm:$0xff]
    %v581 = vld [vmem:[#allocation7 + $0x840] sm:$0xff]
    %v582 = vld [vmem:[#allocation7 + $0x848] sm:$0xff]
    %v583 = vld [vmem:[#allocation7 + $0x850] sm:$0xff]
    %v584 = vld [vmem:[#allocation7 + $0x858] sm:$0xff]
    %v585 = vld [vmem:[#allocation7 + $0x860] sm:$0xff]
    %v586 = vld [vmem:[#allocation7 + $0x868] sm:$0xff]
    %v587 = vld [vmem:[#allocation7 + $0x870] sm:$0xff]
    %v588 = vld [vmem:[#allocation7 + $0x878] sm:$0xff]
    %v589 = vld [vmem:[#allocation7 + $0x880] sm:$0xff]
    %v590 = vld [vmem:[#allocation7 + $0x888] sm:$0xff]
    %v591 = vld [vmem:[#allocation7 + $0x890] sm:$0xff]
    %v592 = vld [vmem:[#allocation7 + $0x898] sm:$0xff]
    %v593 = vld [vmem:[#allocation7 + $0x8a0] sm:$0xff]
    %v594 = vld [vmem:[#allocation7 + $0x8a8] sm:$0xff]
    %v595 = vld [vmem:[#allocation7 + $0x8b0] sm:$0xff]
    %v596 = vld [vmem:[#allocation7 + $0x8b8] sm:$0xff]
    %v597 = vld [vmem:[#allocation7 + $0x8c0] sm:$0xff]
    %v598 = vld [vmem:[#allocation7 + $0x8c8] sm:$0xff]
    %v599 = vld [vmem:[#allocation7 + $0x8d0] sm:$0xff]
    %v600 = vld [vmem:[#allocation7 + $0x8d8] sm:$0xff]
    %v601 = vld [vmem:[#allocation7 + $0x8e0] sm:$0xff]
    %v602 = vld [vmem:[#allocation7 + $0x8e8] sm:$0xff]
    %v603 = vld [vmem:[#allocation7 + $0x8f0] sm:$0xff]
    %v604 = vld [vmem:[#allocation7 + $0x8f8] sm:$0xff]
    %v611 = vunpack.c.l.b16 %v305
    %v612 = vunpack.c.l.b16 %v306
    %v613 = vunpack.c.l.b16 %v307
    %v614 = vunpack.c.l.b16 %v308
    %v615 = vunpack.c.l.b16 %v309
    %v616 = vunpack.c.l.b16 %v310
    %vm617 = vcmask 1041409
    %v618 = vsel %vm617, %v614, %v611
    %v619 = vsel %vm617, %v615, %v612
    %v620 = vsel %vm617, %v616, %v613
    %v621 = vpack.c.b16 %v618, %v618
    %v622 = vpack.c.b16 %v619, %v619
    %v623 = vpack.c.b16 %v620, %v620
    %v771 = vunpack.c.l.b16 %v461
    %v772 = vunpack.c.h.b16 %v461
    %v773 = vunpack.c.l.b16 %v462
    %v774 = vunpack.c.h.b16 %v462
    %v775 = vunpack.c.l.b16 %v463
    %v776 = vunpack.c.h.b16 %v463
    %v777 = vunpack.c.l.b16 %v464
    %v778 = vunpack.c.h.b16 %v464
    %v779 = vunpack.c.l.b16 %v465
    %v780 = vunpack.c.h.b16 %v465
    %v781 = vunpack.c.l.b16 %v466
    %v782 = vunpack.c.h.b16 %v466
    %v783 = vunpack.c.l.b16 %v467
    %v784 = vunpack.c.h.b16 %v467
    %v785 = vunpack.c.l.b16 %v468
    %v786 = vunpack.c.h.b16 %v468
    %v787 = vunpack.c.l.b16 %v469
    %v788 = vunpack.c.h.b16 %v469
    %v789 = vunpack.c.l.b16 %v470
    %v790 = vunpack.c.h.b16 %v470
    %v791 = vunpack.c.l.b16 %v471
    %v792 = vunpack.c.h.b16 %v471
    %v793 = vunpack.c.l.b16 %v472
    %v794 = vunpack.c.h.b16 %v472
    %v795 = vunpack.c.l.b16 %v473
    %v796 = vunpack.c.h.b16 %v473
    %v797 = vunpack.c.l.b16 %v474
    %v798 = vunpack.c.h.b16 %v474
    %v799 = vunpack.c.l.b16 %v475
    %v800 = vunpack.c.h.b16 %v475
    %v801 = vunpack.c.l.b16 %v476
    %v802 = vunpack.c.h.b16 %v476
    %v803 = vunpack.c.l.b16 %v477
    %v804 = vunpack.c.h.b16 %v477
    %v805 = vunpack.c.l.b16 %v478
    %v806 = vunpack.c.h.b16 %v478
    %v807 = vunpack.c.l.b16 %v479
    %v808 = vunpack.c.h.b16 %v479
    %v809 = vunpack.c.l.b16 %v480
    %v810 = vunpack.c.h.b16 %v480
    %v811 = vunpack.c.l.b16 %v481
    %v812 = vunpack.c.h.b16 %v481
    %v813 = vunpack.c.l.b16 %v482
    %v814 = vunpack.c.h.b16 %v482
    %v815 = vunpack.c.l.b16 %v483
    %v816 = vunpack.c.h.b16 %v483
    %v817 = vunpack.c.l.b16 %v484
    %v818 = vunpack.c.h.b16 %v484
    %v819 = vunpack.c.l.b16 %v485
    %v820 = vunpack.c.h.b16 %v485
    %v821 = vunpack.c.l.b16 %v486
    %v822 = vunpack.c.h.b16 %v486
    %v823 = vunpack.c.l.b16 %v487
    %v824 = vunpack.c.h.b16 %v487
    %v825 = vunpack.c.l.b16 %v488
    %v826 = vunpack.c.h.b16 %v488
    %v827 = vunpack.c.l.b16 %v489
    %v828 = vunpack.c.h.b16 %v489
    %v829 = vunpack.c.l.b16 %v490
    %v830 = vunpack.c.h.b16 %v490
    %v831 = vunpack.c.l.b16 %v491
    %v832 = vunpack.c.h.b16 %v491
    %v833 = vunpack.c.l.b16 %v492
    %v834 = vunpack.c.h.b16 %v492
    %v835 = vunpack.c.l.b16 %v493
    %v836 = vunpack.c.h.b16 %v493
    %v837 = vunpack.c.l.b16 %v494
    %v838 = vunpack.c.h.b16 %v494
    %v839 = vunpack.c.l.b16 %v495
    %v840 = vunpack.c.h.b16 %v495
    %v841 = vunpack.c.l.b16 %v496
    %v842 = vunpack.c.h.b16 %v496
    %v843 = vunpack.c.l.b16 %v497
    %v844 = vunpack.c.h.b16 %v497
    %v845 = vunpack.c.l.b16 %v498
    %v846 = vunpack.c.h.b16 %v498
    %v847 = vunpack.c.l.b16 %v499
    %v848 = vunpack.c.h.b16 %v499
    %v849 = vunpack.c.l.b16 %v500
    %v850 = vunpack.c.h.b16 %v500
    %v851 = vunpack.c.l.b16 %v501
    %v852 = vunpack.c.h.b16 %v501
    %v853 = vunpack.c.l.b16 %v502
    %v854 = vunpack.c.h.b16 %v502
    %v855 = vunpack.c.l.b16 %v503
    %v856 = vunpack.c.h.b16 %v503
    %v857 = vunpack.c.l.b16 %v504
    %v858 = vunpack.c.h.b16 %v504
    %v859 = vunpack.c.l.b16 %v505
    %v860 = vunpack.c.h.b16 %v505
    %v861 = vunpack.c.l.b16 %v506
    %v862 = vunpack.c.h.b16 %v506
    %v863 = vunpack.c.l.b16 %v507
    %v864 = vunpack.c.h.b16 %v507
    %v865 = vunpack.c.l.b16 %v508
    %v866 = vunpack.c.h.b16 %v508
    %v867 = vunpack.c.l.b16 %v509
    %v868 = vunpack.c.h.b16 %v509
    %v869 = vunpack.c.l.b16 %v510
    %v870 = vunpack.c.h.b16 %v510
    %v871 = vunpack.c.l.b16 %v511
    %v872 = vunpack.c.h.b16 %v511
    %v873 = vunpack.c.l.b16 %v512
    %v874 = vunpack.c.h.b16 %v512
    %v875 = vunpack.c.l.b16 %v513
    %v876 = vunpack.c.h.b16 %v513
    %v877 = vunpack.c.l.b16 %v514
    %v878 = vunpack.c.h.b16 %v514
    %v879 = vunpack.c.l.b16 %v515
    %v880 = vunpack.c.h.b16 %v515
    %v881 = vunpack.c.l.b16 %v516
    %v882 = vunpack.c.h.b16 %v516
    %v883 = vunpack.c.l.b16 %v517
    %v884 = vunpack.c.h.b16 %v517
    %v885 = vunpack.c.l.b16 %v518
    %v886 = vunpack.c.h.b16 %v518
    %v887 = vunpack.c.l.b16 %v519
    %v888 = vunpack.c.h.b16 %v519
    %v889 = vunpack.c.l.b16 %v520
    %v890 = vunpack.c.h.b16 %v520
    %v891 = vunpack.c.l.b16 %v521
    %v892 = vunpack.c.h.b16 %v521
    %v893 = vunpack.c.l.b16 %v522
    %v894 = vunpack.c.h.b16 %v522
    %v895 = vunpack.c.l.b16 %v523
    %v896 = vunpack.c.h.b16 %v523
    %v897 = vunpack.c.l.b16 %v524
    %v898 = vunpack.c.h.b16 %v524
    %v899 = vunpack.c.l.b16 %v525
    %v900 = vunpack.c.h.b16 %v525
    %v901 = vunpack.c.l.b16 %v526
    %v902 = vunpack.c.h.b16 %v526
    %v903 = vunpack.c.l.b16 %v527
    %v904 = vunpack.c.h.b16 %v527
    %v905 = vunpack.c.l.b16 %v528
    %v906 = vunpack.c.h.b16 %v528
    %v907 = vunpack.c.l.b16 %v529
    %v908 = vunpack.c.h.b16 %v529
    %v909 = vunpack.c.l.b16 %v530
    %v910 = vunpack.c.h.b16 %v530
    %v911 = vunpack.c.l.b16 %v531
    %v912 = vunpack.c.h.b16 %v531
    %v913 = vunpack.c.l.b16 %v532
    %v914 = vunpack.c.h.b16 %v532
    %v915 = vunpack.c.l.b16 %v533
    %v916 = vunpack.c.h.b16 %v533
    %v917 = vunpack.c.l.b16 %v534
    %v918 = vunpack.c.h.b16 %v534
    %v919 = vunpack.c.l.b16 %v535
    %v920 = vunpack.c.h.b16 %v535
    %v921 = vunpack.c.l.b16 %v536
    %v922 = vunpack.c.h.b16 %v536
    %v923 = vunpack.c.l.b16 %v537
    %v924 = vunpack.c.h.b16 %v537
    %v925 = vunpack.c.l.b16 %v538
    %v926 = vunpack.c.h.b16 %v538
    %v927 = vunpack.c.l.b16 %v539
    %v928 = vunpack.c.h.b16 %v539
    %v929 = vunpack.c.l.b16 %v540
    %v930 = vunpack.c.h.b16 %v540
    %v931 = vunpack.c.l.b16 %v541
    %v932 = vunpack.c.h.b16 %v541
    %v933 = vunpack.c.l.b16 %v542
    %v934 = vunpack.c.h.b16 %v542
    %v935 = vunpack.c.l.b16 %v543
    %v936 = vunpack.c.h.b16 %v543
    %v937 = vunpack.c.l.b16 %v544
    %v938 = vunpack.c.h.b16 %v544
    %v939 = vunpack.c.l.b16 %v545
    %v940 = vunpack.c.h.b16 %v545
    %v941 = vunpack.c.l.b16 %v546
    %v942 = vunpack.c.h.b16 %v546
    %v943 = vunpack.c.l.b16 %v547
    %v944 = vunpack.c.h.b16 %v547
    %v945 = vunpack.c.l.b16 %v548
    %v946 = vunpack.c.h.b16 %v548
    %v947 = vunpack.c.l.b16 %v549
    %v948 = vunpack.c.h.b16 %v549
    %v949 = vunpack.c.l.b16 %v550
    %v950 = vunpack.c.h.b16 %v550
    %v951 = vunpack.c.l.b16 %v551
    %v952 = vunpack.c.h.b16 %v551
    %v953 = vunpack.c.l.b16 %v552
    %v954 = vunpack.c.h.b16 %v552
    %v955 = vunpack.c.l.b16 %v553
    %v956 = vunpack.c.h.b16 %v553
    %v957 = vunpack.c.l.b16 %v554
    %v958 = vunpack.c.h.b16 %v554
    %v959 = vunpack.c.l.b16 %v555
    %v960 = vunpack.c.h.b16 %v555
    %v961 = vunpack.c.l.b16 %v556
    %v962 = vunpack.c.h.b16 %v556
    %v963 = vunpack.c.l.b16 %v557
    %v964 = vunpack.c.h.b16 %v557
    %v965 = vunpack.c.l.b16 %v558
    %v966 = vunpack.c.h.b16 %v558
    %v967 = vunpack.c.l.b16 %v559
    %v968 = vunpack.c.h.b16 %v559
    %v969 = vunpack.c.l.b16 %v560
    %v970 = vunpack.c.h.b16 %v560
    %v971 = vunpack.c.l.b16 %v561
    %v972 = vunpack.c.h.b16 %v561
    %v973 = vunpack.c.l.b16 %v562
    %v974 = vunpack.c.h.b16 %v562
    %v975 = vunpack.c.l.b16 %v563
    %v976 = vunpack.c.h.b16 %v563
    %v977 = vunpack.c.l.b16 %v564
    %v978 = vunpack.c.h.b16 %v564
    %v979 = vunpack.c.l.b16 %v565
    %v980 = vunpack.c.h.b16 %v565
    %v981 = vunpack.c.l.b16 %v566
    %v982 = vunpack.c.h.b16 %v566
    %v983 = vunpack.c.l.b16 %v567
    %v984 = vunpack.c.h.b16 %v567
    %v985 = vunpack.c.l.b16 %v568
    %v986 = vunpack.c.h.b16 %v568
    %v987 = vunpack.c.l.b16 %v569
    %v988 = vunpack.c.h.b16 %v569
    %v989 = vunpack.c.l.b16 %v570
    %v990 = vunpack.c.h.b16 %v570
    %v991 = vunpack.c.l.b16 %v571
    %v992 = vunpack.c.h.b16 %v571
    %v993 = vunpack.c.l.b16 %v572
    %v994 = vunpack.c.h.b16 %v572
    %v995 = vunpack.c.l.b16 %v573
    %v996 = vunpack.c.h.b16 %v573
    %v997 = vunpack.c.l.b16 %v574
    %v998 = vunpack.c.h.b16 %v574
    %v999 = vunpack.c.l.b16 %v575
    %v1000 = vunpack.c.h.b16 %v575
    %v1001 = vunpack.c.l.b16 %v576
    %v1002 = vunpack.c.h.b16 %v576
    %v1003 = vunpack.c.l.b16 %v577
    %v1004 = vunpack.c.h.b16 %v577
    %v1005 = vunpack.c.l.b16 %v578
    %v1006 = vunpack.c.h.b16 %v578
    %v1007 = vunpack.c.l.b16 %v579
    %v1008 = vunpack.c.h.b16 %v579
    %v1009 = vunpack.c.l.b16 %v580
    %v1010 = vunpack.c.h.b16 %v580
    %v1011 = vunpack.c.l.b16 %v581
    %v1012 = vunpack.c.h.b16 %v581
    %v1013 = vunpack.c.l.b16 %v582
    %v1014 = vunpack.c.h.b16 %v582
    %v1015 = vunpack.c.l.b16 %v583
    %v1016 = vunpack.c.h.b16 %v583
    %v1017 = vunpack.c.l.b16 %v584
    %v1018 = vunpack.c.h.b16 %v584
    %v1019 = vunpack.c.l.b16 %v585
    %v1020 = vunpack.c.h.b16 %v585
    %v1021 = vunpack.c.l.b16 %v586
    %v1022 = vunpack.c.h.b16 %v586
    %v1023 = vunpack.c.l.b16 %v587
    %v1024 = vunpack.c.h.b16 %v587
    %v1025 = vunpack.c.l.b16 %v588
    %v1026 = vunpack.c.h.b16 %v588
    %v1027 = vunpack.c.l.b16 %v589
    %v1028 = vunpack.c.h.b16 %v589
    %v1029 = vunpack.c.l.b16 %v590
    %v1030 = vunpack.c.h.b16 %v590
    %v1031 = vunpack.c.l.b16 %v591
    %v1032 = vunpack.c.h.b16 %v591
    %v1033 = vunpack.c.l.b16 %v592
    %v1034 = vunpack.c.h.b16 %v592
    %v1035 = vunpack.c.l.b16 %v593
    %v1036 = vunpack.c.h.b16 %v593
    %v1037 = vunpack.c.l.b16 %v594
    %v1038 = vunpack.c.h.b16 %v594
    %v1039 = vunpack.c.l.b16 %v595
    %v1040 = vunpack.c.h.b16 %v595
    %v1041 = vunpack.c.l.b16 %v596
    %v1042 = vunpack.c.h.b16 %v596
    %v1043 = vunpack.c.l.b16 %v597
    %v1044 = vunpack.c.h.b16 %v597
    %v1045 = vunpack.c.l.b16 %v598
    %v1046 = vunpack.c.h.b16 %v598
    %v1047 = vunpack.c.l.b16 %v599
    %v1048 = vunpack.c.h.b16 %v599
    %v1049 = vunpack.c.l.b16 %v600
    %v1050 = vunpack.c.h.b16 %v600
    %v1051 = vunpack.c.l.b16 %v601
    %v1052 = vunpack.c.h.b16 %v601
    %v1053 = vunpack.c.l.b16 %v602
    %v1054 = vunpack.c.h.b16 %v602
    %v1055 = vunpack.c.l.b16 %v603
    %v1056 = vunpack.c.h.b16 %v603
    %v1057 = vunpack.c.l.b16 %v604
    %v1058 = vunpack.c.h.b16 %v604
    %v1059 = vpack.c.b16 %v777, %v771
    %v1060 = vpack.c.b16 %v778, %v772
    %v1061 = vpack.c.b16 %v779, %v773
    %v1062 = vpack.c.b16 %v780, %v774
    %v1063 = vpack.c.b16 %v781, %v775
    %v1064 = vpack.c.b16 %v782, %v776
    %v1065 = vpack.c.b16 %v789, %v783
    %v1066 = vpack.c.b16 %v790, %v784
    %v1067 = vpack.c.b16 %v791, %v785
    %v1068 = vpack.c.b16 %v792, %v786
    %v1069 = vpack.c.b16 %v793, %v787
    %v1070 = vpack.c.b16 %v794, %v788
    %v1071 = vpack.c.b16 %v801, %v795
    %v1072 = vpack.c.b16 %v802, %v796
    %v1073 = vpack.c.b16 %v803, %v797
    %v1074 = vpack.c.b16 %v804, %v798
    %v1075 = vpack.c.b16 %v805, %v799
    %v1076 = vpack.c.b16 %v806, %v800
    %v1077 = vpack.c.b16 %v813, %v807
    %v1078 = vpack.c.b16 %v814, %v808
    %v1079 = vpack.c.b16 %v815, %v809
    %v1080 = vpack.c.b16 %v816, %v810
    %v1081 = vpack.c.b16 %v817, %v811
    %v1082 = vpack.c.b16 %v818, %v812
    %v1083 = vpack.c.b16 %v825, %v819
    %v1084 = vpack.c.b16 %v826, %v820
    %v1085 = vpack.c.b16 %v827, %v821
    %v1086 = vpack.c.b16 %v828, %v822
    %v1087 = vpack.c.b16 %v829, %v823
    %v1088 = vpack.c.b16 %v830, %v824
    %v1089 = vpack.c.b16 %v837, %v831
    %v1090 = vpack.c.b16 %v838, %v832
    %v1091 = vpack.c.b16 %v839, %v833
    %v1092 = vpack.c.b16 %v840, %v834
    %v1093 = vpack.c.b16 %v841, %v835
    %v1094 = vpack.c.b16 %v842, %v836
    %v1095 = vpack.c.b16 %v849, %v843
    %v1096 = vpack.c.b16 %v850, %v844
    %v1097 = vpack.c.b16 %v851, %v845
    %v1098 = vpack.c.b16 %v852, %v846
    %v1099 = vpack.c.b16 %v853, %v847
    %v1100 = vpack.c.b16 %v854, %v848
    %v1101 = vpack.c.b16 %v861, %v855
    %v1102 = vpack.c.b16 %v862, %v856
    %v1103 = vpack.c.b16 %v863, %v857
    %v1104 = vpack.c.b16 %v864, %v858
    %v1105 = vpack.c.b16 %v865, %v859
    %v1106 = vpack.c.b16 %v866, %v860
    %v1107 = vpack.c.b16 %v873, %v867
    %v1108 = vpack.c.b16 %v874, %v868
    %v1109 = vpack.c.b16 %v875, %v869
    %v1110 = vpack.c.b16 %v876, %v870
    %v1111 = vpack.c.b16 %v877, %v871
    %v1112 = vpack.c.b16 %v878, %v872
    %v1113 = vpack.c.b16 %v885, %v879
    %v1114 = vpack.c.b16 %v886, %v880
    %v1115 = vpack.c.b16 %v887, %v881
    %v1116 = vpack.c.b16 %v888, %v882
    %v1117 = vpack.c.b16 %v889, %v883
    %v1118 = vpack.c.b16 %v890, %v884
    %v1119 = vpack.c.b16 %v897, %v891
    %v1120 = vpack.c.b16 %v898, %v892
    %v1121 = vpack.c.b16 %v899, %v893
    %v1122 = vpack.c.b16 %v900, %v894
    %v1123 = vpack.c.b16 %v901, %v895
    %v1124 = vpack.c.b16 %v902, %v896
    %v1125 = vpack.c.b16 %v909, %v903
    %v1126 = vpack.c.b16 %v910, %v904
    %v1127 = vpack.c.b16 %v911, %v905
    %v1128 = vpack.c.b16 %v912, %v906
    %v1129 = vpack.c.b16 %v913, %v907
    %v1130 = vpack.c.b16 %v914, %v908
    %v1131 = vpack.c.b16 %v921, %v915
    %v1132 = vpack.c.b16 %v922, %v916
    %v1133 = vpack.c.b16 %v923, %v917
    %v1134 = vpack.c.b16 %v924, %v918
    %v1135 = vpack.c.b16 %v925, %v919
    %v1136 = vpack.c.b16 %v926, %v920
    %v1137 = vpack.c.b16 %v933, %v927
    %v1138 = vpack.c.b16 %v934, %v928
    %v1139 = vpack.c.b16 %v935, %v929
    %v1140 = vpack.c.b16 %v936, %v930
    %v1141 = vpack.c.b16 %v937, %v931
    %v1142 = vpack.c.b16 %v938, %v932
    %v1143 = vpack.c.b16 %v945, %v939
    %v1144 = vpack.c.b16 %v946, %v940
    %v1145 = vpack.c.b16 %v947, %v941
    %v1146 = vpack.c.b16 %v948, %v942
    %v1147 = vpack.c.b16 %v949, %v943
    %v1148 = vpack.c.b16 %v950, %v944
    %v1149 = vpack.c.b16 %v957, %v951
    %v1150 = vpack.c.b16 %v958, %v952
    %v1151 = vpack.c.b16 %v959, %v953
    %v1152 = vpack.c.b16 %v960, %v954
    %v1153 = vpack.c.b16 %v961, %v955
    %v1154 = vpack.c.b16 %v962, %v956
    %v1155 = vpack.c.b16 %v969, %v963
    %v1156 = vpack.c.b16 %v970, %v964
    %v1157 = vpack.c.b16 %v971, %v965
    %v1158 = vpack.c.b16 %v972, %v966
    %v1159 = vpack.c.b16 %v973, %v967
    %v1160 = vpack.c.b16 %v974, %v968
    %v1161 = vpack.c.b16 %v981, %v975
    %v1162 = vpack.c.b16 %v982, %v976
    %v1163 = vpack.c.b16 %v983, %v977
    %v1164 = vpack.c.b16 %v984, %v978
    %v1165 = vpack.c.b16 %v985, %v979
    %v1166 = vpack.c.b16 %v986, %v980
    %v1167 = vpack.c.b16 %v993, %v987
    %v1168 = vpack.c.b16 %v994, %v988
    %v1169 = vpack.c.b16 %v995, %v989
    %v1170 = vpack.c.b16 %v996, %v990
    %v1171 = vpack.c.b16 %v997, %v991
    %v1172 = vpack.c.b16 %v998, %v992
    %v1173 = vpack.c.b16 %v1005, %v999
    %v1174 = vpack.c.b16 %v1006, %v1000
    %v1175 = vpack.c.b16 %v1007, %v1001
    %v1176 = vpack.c.b16 %v1008, %v1002
    %v1177 = vpack.c.b16 %v1009, %v1003
    %v1178 = vpack.c.b16 %v1010, %v1004
    %v1179 = vpack.c.b16 %v1017, %v1011
    %v1180 = vpack.c.b16 %v1018, %v1012
    %v1181 = vpack.c.b16 %v1019, %v1013
    %v1182 = vpack.c.b16 %v1020, %v1014
    %v1183 = vpack.c.b16 %v1021, %v1015
    %v1184 = vpack.c.b16 %v1022, %v1016
    %v1185 = vpack.c.b16 %v1029, %v1023
    %v1186 = vpack.c.b16 %v1030, %v1024
    %v1187 = vpack.c.b16 %v1031, %v1025
    %v1188 = vpack.c.b16 %v1032, %v1026
    %v1189 = vpack.c.b16 %v1033, %v1027
    %v1190 = vpack.c.b16 %v1034, %v1028
    %v1191 = vpack.c.b16 %v1041, %v1035
    %v1192 = vpack.c.b16 %v1042, %v1036
    %v1193 = vpack.c.b16 %v1043, %v1037
    %v1194 = vpack.c.b16 %v1044, %v1038
    %v1195 = vpack.c.b16 %v1045, %v1039
    %v1196 = vpack.c.b16 %v1046, %v1040
    %v1197 = vpack.c.b16 %v1053, %v1047
    %v1198 = vpack.c.b16 %v1054, %v1048
    %v1199 = vpack.c.b16 %v1055, %v1049
    %v1200 = vpack.c.b16 %v1056, %v1050
    %v1201 = vpack.c.b16 %v1057, %v1051
    %v1202 = vpack.c.b16 %v1058, %v1052
    %1347 = vmatprep.subr.bf16.mxu0 %v1060
    %1348 = vmatpush1.bf16.msra.mxu0 %v1059
    %1349 = vmatprep.subr.bf16.mxu0 %v1066
    %1350 = vmatpush1.bf16.msra.mxu0 %v1065
    %1351 = vmatprep.subr.bf16.mxu0 %v1072
    %1352 = vmatpush1.bf16.msra.mxu0 %v1071
    %1353 = vmatprep.subr.bf16.mxu0 %v1078
    %1354 = vmatpush1.bf16.msra.mxu0 %v1077
    %1355 = vmatprep.subr.bf16.mxu0 %v1084
    %1356 = vmatpush1.bf16.msra.mxu0 %v1083
    %1357 = vmatprep.subr.bf16.mxu0 %v1090
    %1358 = vmatpush1.bf16.msra.mxu0 %v1089
    %1359 = vmatprep.subr.bf16.mxu0 %v1096
    %1360 = vmatpush1.bf16.msra.mxu0 %v1095
    %1361 = vmatprep.subr.bf16.mxu0 %v1102
    %1362 = vmatpush1.bf16.msra.mxu0 %v1101
    %1363 = vmatprep.subr.bf16.mxu0 %v1108
    %1364 = vmatpush1.bf16.msra.mxu0 %v1107
    %1365 = vmatprep.subr.bf16.mxu0 %v1114
    %1366 = vmatpush1.bf16.msra.mxu0 %v1113
    %1367 = vmatprep.subr.bf16.mxu0 %v1120
    %1368 = vmatpush1.bf16.msra.mxu0 %v1119
    %1369 = vmatprep.subr.bf16.mxu0 %v1126
    %1370 = vmatpush1.bf16.msra.mxu0 %v1125
    %1371 = vmatprep.subr.bf16.mxu0 %v1132
    %1372 = vmatpush1.bf16.msra.mxu0 %v1131
    %1373 = vmatprep.subr.bf16.mxu0 %v1138
    %1374 = vmatpush1.bf16.msra.mxu0 %v1137
    %1375 = vmatprep.subr.bf16.mxu0 %v1144
    %1376 = vmatpush1.bf16.msra.mxu0 %v1143
    %1377 = vmatprep.subr.bf16.mxu0 %v1150
    %1378 = vmatpush1.bf16.msra.mxu0 %v1149
    %1379 = vmatprep.mubr.bf16.mxu0 %v622
    %1380 = vmatmul.mubr.bf16.gmra.mrb[0].mxu0 %v621
    %v1381 = vpop.f32.mrb[0].mxu0
    %v1382 = vadd.f32 0.0, %v1381
    %v1383 = vpop.f32.mrb[0].mxu0
    %v1384 = vadd.f32 0.0, %v1383
    %v1385 = vpop.f32.mrb[0].mxu0
    %v1386 = vpop.f32.mrb[0].mxu0
    %1387 = vdwg.mxu0
    %1388 = vmatprep.subr.bf16.mxu0 %v1156
    %1389 = vmatpush1.bf16.msra.mxu0 %v1155
    %1390 = vmatprep.subr.bf16.mxu0 %v1162
    %1391 = vmatpush1.bf16.msra.mxu0 %v1161
    %1392 = vmatprep.subr.bf16.mxu0 %v1168
    %1393 = vmatpush1.bf16.msra.mxu0 %v1167
    %1394 = vmatprep.subr.bf16.mxu0 %v1174
    %1395 = vmatpush1.bf16.msra.mxu0 %v1173
    %1396 = vmatprep.subr.bf16.mxu0 %v1180
    %1397 = vmatpush1.bf16.msra.mxu0 %v1179
    %1398 = vmatprep.subr.bf16.mxu0 %v1186
    %1399 = vmatpush1.bf16.msra.mxu0 %v1185
    %1400 = vmatprep.subr.bf16.mxu0 %v1192
    %1401 = vmatpush1.bf16.msra.mxu0 %v1191
    %1402 = vmatprep.subr.bf16.mxu0 %v1198
    %1403 = vmatpush1.bf16.msra.mxu0 %v1197
    %1404 = vmatprep.subr.bf16.mxu0 0
    %1405 = vmatpush1.bf16.msra.mxu0 0
    %1406 = vmatprep.subr.bf16.mxu0 0
    %1407 = vmatpush1.bf16.msra.mxu0 0
    %1408 = vmatprep.subr.bf16.mxu0 0
    %1409 = vmatpush1.bf16.msra.mxu0 0
    %1410 = vmatprep.subr.bf16.mxu0 0
    %1411 = vmatpush1.bf16.msra.mxu0 0
    %1412 = vmatprep.subr.bf16.mxu0 0
    %1413 = vmatpush1.bf16.msra.mxu0 0
    %1414 = vmatprep.subr.bf16.mxu0 0
    %1415 = vmatpush1.bf16.msra.mxu0 0
    %1416 = vmatprep.subr.bf16.mxu0 0
    %1417 = vmatpush1.bf16.msra.mxu0 0
    %1418 = vmatprep.subr.bf16.mxu0 0
    %1419 = vmatpush1.bf16.msra.mxu0 0
    %1420 = vmatprep.mubr.bf16.mxu0 0
    %1421 = vmatmul.mubr.bf16.gmra.mrb[0].mxu0 %v623
    %v1422 = vpop.f32.mrb[0].mxu0
    %v1423 = vadd.f32 %v1382, %v1422
    %v1424 = vpop.f32.mrb[0].mxu0
    %v1425 = vadd.f32 %v1384, %v1424
    %v1426 = vpop.f32.mrb[0].mxu0
    %v1427 = vpop.f32.mrb[0].mxu0
    %1428 = vdwg.mxu0
    %1429 = vmatprep.subr.bf16.mxu0 %v1062
    %1430 = vmatpush1.bf16.msra.mxu0 %v1061
    %1431 = vmatprep.subr.bf16.mxu0 %v1068
    %1432 = vmatpush1.bf16.msra.mxu0 %v1067
    %1433 = vmatprep.subr.bf16.mxu0 %v1074
    %1434 = vmatpush1.bf16.msra.mxu0 %v1073
    %1435 = vmatprep.subr.bf16.mxu0 %v1080
    %1436 = vmatpush1.bf16.msra.mxu0 %v1079
    %1437 = vmatprep.subr.bf16.mxu0 %v1086
    %1438 = vmatpush1.bf16.msra.mxu0 %v1085
    %1439 = vmatprep.subr.bf16.mxu0 %v1092
    %1440 = vmatpush1.bf16.msra.mxu0 %v1091
    %1441 = vmatprep.subr.bf16.mxu0 %v1098
    %1442 = vmatpush1.bf16.msra.mxu0 %v1097
    %1443 = vmatprep.subr.bf16.mxu0 %v1104
    %1444 = vmatpush1.bf16.msra.mxu0 %v1103
    %1445 = vmatprep.subr.bf16.mxu0 %v1110
    %1446 = vmatpush1.bf16.msra.mxu0 %v1109
    %1447 = vmatprep.subr.bf16.mxu0 %v1116
    %1448 = vmatpush1.bf16.msra.mxu0 %v1115
    %1449 = vmatprep.subr.bf16.mxu0 %v1122
    %1450 = vmatpush1.bf16.msra.mxu0 %v1121
    %1451 = vmatprep.subr.bf16.mxu0 %v1128
    %1452 = vmatpush1.bf16.msra.mxu0 %v1127
    %1453 = vmatprep.subr.bf16.mxu0 %v1134
    %1454 = vmatpush1.bf16.msra.mxu0 %v1133
    %1455 = vmatprep.subr.bf16.mxu0 %v1140
    %1456 = vmatpush1.bf16.msra.mxu0 %v1139
    %1457 = vmatprep.subr.bf16.mxu0 %v1146
    %1458 = vmatpush1.bf16.msra.mxu0 %v1145
    %1459 = vmatprep.subr.bf16.mxu0 %v1152
    %1460 = vmatpush1.bf16.msra.mxu0 %v1151
    %1461 = vmatprep.mubr.bf16.mxu0 %v622
    %1462 = vmatmul.mubr.bf16.gmra.mrb[0].mxu0 %v621
    %v1463 = vpop.f32.mrb[0].mxu0
    %v1464 = vadd.f32 0.0, %v1463
    %v1465 = vpop.f32.mrb[0].mxu0
    %v1466 = vadd.f32 0.0, %v1465
    %v1467 = vpop.f32.mrb[0].mxu0
    %v1468 = vpop.f32.mrb[0].mxu0
    %1469 = vdwg.mxu0
    %1470 = vmatprep.subr.bf16.mxu0 %v1158
    %1471 = vmatpush1.bf16.msra.mxu0 %v1157
    %1472 = vmatprep.subr.bf16.mxu0 %v1164
    %1473 = vmatpush1.bf16.msra.mxu0 %v1163
    %1474 = vmatprep.subr.bf16.mxu0 %v1170
    %1475 = vmatpush1.bf16.msra.mxu0 %v1169
    %1476 = vmatprep.subr.bf16.mxu0 %v1176
    %1477 = vmatpush1.bf16.msra.mxu0 %v1175
    %1478 = vmatprep.subr.bf16.mxu0 %v1182
    %1479 = vmatpush1.bf16.msra.mxu0 %v1181
    %1480 = vmatprep.subr.bf16.mxu0 %v1188
    %1481 = vmatpush1.bf16.msra.mxu0 %v1187
    %1482 = vmatprep.subr.bf16.mxu0 %v1194
    %1483 = vmatpush1.bf16.msra.mxu0 %v1193
    %1484 = vmatprep.subr.bf16.mxu0 %v1200
    %1485 = vmatpush1.bf16.msra.mxu0 %v1199
    %1486 = vmatprep.subr.bf16.mxu0 0
    %1487 = vmatpush1.bf16.msra.mxu0 0
    %1488 = vmatprep.subr.bf16.mxu0 0
    %1489 = vmatpush1.bf16.msra.mxu0 0
    %1490 = vmatprep.subr.bf16.mxu0 0
    %1491 = vmatpush1.bf16.msra.mxu0 0
    %1492 = vmatprep.subr.bf16.mxu0 0
    %1493 = vmatpush1.bf16.msra.mxu0 0
    %1494 = vmatprep.subr.bf16.mxu0 0
    %1495 = vmatpush1.bf16.msra.mxu0 0
    %1496 = vmatprep.subr.bf16.mxu0 0
    %1497 = vmatpush1.bf16.msra.mxu0 0
    %1498 = vmatprep.subr.bf16.mxu0 0
    %1499 = vmatpush1.bf16.msra.mxu0 0
    %1500 = vmatprep.subr.bf16.mxu0 0
    %1501 = vmatpush1.bf16.msra.mxu0 0
    %1502 = vmatprep.mubr.bf16.mxu0 0
    %1503 = vmatmul.mubr.bf16.gmra.mrb[0].mxu0 %v623
    %v1504 = vpop.f32.mrb[0].mxu0
    %v1505 = vadd.f32 %v1464, %v1504
    %v1506 = vpop.f32.mrb[0].mxu0
    %v1507 = vadd.f32 %v1466, %v1506
    %v1508 = vpop.f32.mrb[0].mxu0
    %v1509 = vpop.f32.mrb[0].mxu0
    %1510 = vdwg.mxu0
    %1511 = vmatprep.subr.bf16.mxu0 %v1064
    %1512 = vmatpush1.bf16.msra.mxu0 %v1063
    %1513 = vmatprep.subr.bf16.mxu0 %v1070
    %1514 = vmatpush1.bf16.msra.mxu0 %v1069
    %1515 = vmatprep.subr.bf16.mxu0 %v1076
    %1516 = vmatpush1.bf16.msra.mxu0 %v1075
    %1517 = vmatprep.subr.bf16.mxu0 %v1082
    %1518 = vmatpush1.bf16.msra.mxu0 %v1081
    %1519 = vmatprep.subr.bf16.mxu0 %v1088
    %1520 = vmatpush1.bf16.msra.mxu0 %v1087
    %1521 = vmatprep.subr.bf16.mxu0 %v1094
    %1522 = vmatpush1.bf16.msra.mxu0 %v1093
    %1523 = vmatprep.subr.bf16.mxu0 %v1100
    %1524 = vmatpush1.bf16.msra.mxu0 %v1099
    %1525 = vmatprep.subr.bf16.mxu0 %v1106
    %1526 = vmatpush1.bf16.msra.mxu0 %v1105
    %1527 = vmatprep.subr.bf16.mxu0 %v1112
    %1528 = vmatpush1.bf16.msra.mxu0 %v1111
    %1529 = vmatprep.subr.bf16.mxu0 %v1118
    %1530 = vmatpush1.bf16.msra.mxu0 %v1117
    %1531 = vmatprep.subr.bf16.mxu0 %v1124
    %1532 = vmatpush1.bf16.msra.mxu0 %v1123
    %1533 = vmatprep.subr.bf16.mxu0 %v1130
    %1534 = vmatpush1.bf16.msra.mxu0 %v1129
    %1535 = vmatprep.subr.bf16.mxu0 %v1136
    %1536 = vmatpush1.bf16.msra.mxu0 %v1135
    %1537 = vmatprep.subr.bf16.mxu0 %v1142
    %1538 = vmatpush1.bf16.msra.mxu0 %v1141
    %1539 = vmatprep.subr.bf16.mxu0 %v1148
    %1540 = vmatpush1.bf16.msra.mxu0 %v1147
    %1541 = vmatprep.subr.bf16.mxu0 %v1154
    %1542 = vmatpush1.bf16.msra.mxu0 %v1153
    %1543 = vmatprep.mubr.bf16.mxu0 %v622
    %1544 = vmatmul.mubr.bf16.gmra.mrb[0].mxu0 %v621
    %v1545 = vpop.f32.mrb[0].mxu0
    %v1546 = vadd.f32 0.0, %v1545
    %v1547 = vpop.f32.mrb[0].mxu0
    %v1548 = vadd.f32 0.0, %v1547
    %v1549 = vpop.f32.mrb[0].mxu0
    %v1550 = vpop.f32.mrb[0].mxu0
    %1551 = vdwg.mxu0
    %1552 = vmatprep.subr.bf16.mxu0 %v1160
    %1553 = vmatpush1.bf16.msra.mxu0 %v1159
    %1554 = vmatprep.subr.bf16.mxu0 %v1166
    %1555 = vmatpush1.bf16.msra.mxu0 %v1165
    %1556 = vmatprep.subr.bf16.mxu0 %v1172
    %1557 = vmatpush1.bf16.msra.mxu0 %v1171
    %1558 = vmatprep.subr.bf16.mxu0 %v1178
    %1559 = vmatpush1.bf16.msra.mxu0 %v1177
    %1560 = vmatprep.subr.bf16.mxu0 %v1184
    %1561 = vmatpush1.bf16.msra.mxu0 %v1183
    %1562 = vmatprep.subr.bf16.mxu0 %v1190
    %1563 = vmatpush1.bf16.msra.mxu0 %v1189
    %1564 = vmatprep.subr.bf16.mxu0 %v1196
    %1565 = vmatpush1.bf16.msra.mxu0 %v1195
    %1566 = vmatprep.subr.bf16.mxu0 %v1202
    %1567 = vmatpush1.bf16.msra.mxu0 %v1201
    %1568 = vmatprep.subr.bf16.mxu0 0
    %1569 = vmatpush1.bf16.msra.mxu0 0
    %1570 = vmatprep.subr.bf16.mxu0 0
    %1571 = vmatpush1.bf16.msra.mxu0 0
    %1572 = vmatprep.subr.bf16.mxu0 0
    %1573 = vmatpush1.bf16.msra.mxu0 0
    %1574 = vmatprep.subr.bf16.mxu0 0
    %1575 = vmatpush1.bf16.msra.mxu0 0
    %1576 = vmatprep.subr.bf16.mxu0 0
    %1577 = vmatpush1.bf16.msra.mxu0 0
    %1578 = vmatprep.subr.bf16.mxu0 0
    %1579 = vmatpush1.bf16.msra.mxu0 0
    %1580 = vmatprep.subr.bf16.mxu0 0
    %1581 = vmatpush1.bf16.msra.mxu0 0
    %1582 = vmatprep.subr.bf16.mxu0 0
    %1583 = vmatpush1.bf16.msra.mxu0 0
    %1584 = vmatprep.mubr.bf16.mxu0 0
    %1585 = vmatmul.mubr.bf16.gmra.mrb[0].mxu0 %v623
    %v1586 = vpop.f32.mrb[0].mxu0
    %v1587 = vadd.f32 %v1546, %v1586
    %v1588 = vpop.f32.mrb[0].mxu0
    %v1589 = vadd.f32 %v1548, %v1588
    %v1590 = vpop.f32.mrb[0].mxu0
    %v1591 = vpop.f32.mrb[0].mxu0
    %1592 = vdwg.mxu0
    %v1599 = vunpack.c.l.b16 %v299
    %v1600 = vunpack.c.l.b16 %v300
    %v1601 = vunpack.c.l.b16 %v301
    %v1602 = vunpack.c.l.b16 %v302
    %v1603 = vunpack.c.l.b16 %v303
    %v1604 = vunpack.c.l.b16 %v304
    %v1605 = vsel %vm617, %v1602, %v1599
    %v1606 = vsel %vm617, %v1603, %v1600
    %v1607 = vsel %vm617, %v1604, %v1601
    %v1608 = vpack.c.b16 %v1605, %v1605
    %v1609 = vpack.c.b16 %v1606, %v1606
    %v1610 = vpack.c.b16 %v1607, %v1607
    %v1758 = vunpack.c.l.b16 %v317
    %v1759 = vunpack.c.h.b16 %v317
    %v1760 = vunpack.c.l.b16 %v318
    %v1761 = vunpack.c.h.b16 %v318
    %v1762 = vunpack.c.l.b16 %v319
    %v1763 = vunpack.c.h.b16 %v319
    %v1764 = vunpack.c.l.b16 %v320
    %v1765 = vunpack.c.h.b16 %v320
    %v1766 = vunpack.c.l.b16 %v321
    %v1767 = vunpack.c.h.b16 %v321
    %v1768 = vunpack.c.l.b16 %v322
    %v1769 = vunpack.c.h.b16 %v322
    %v1770 = vunpack.c.l.b16 %v323
    %v1771 = vunpack.c.h.b16 %v323
    %v1772 = vunpack.c.l.b16 %v324
    %v1773 = vunpack.c.h.b16 %v324
    %v1774 = vunpack.c.l.b16 %v325
    %v1775 = vunpack.c.h.b16 %v325
    %v1776 = vunpack.c.l.b16 %v326
    %v1777 = vunpack.c.h.b16 %v326
    %v1778 = vunpack.c.l.b16 %v327
    %v1779 = vunpack.c.h.b16 %v327
    %v1780 = vunpack.c.l.b16 %v328
    %v1781 = vunpack.c.h.b16 %v328
    %v1782 = vunpack.c.l.b16 %v329
    %v1783 = vunpack.c.h.b16 %v329
    %v1784 = vunpack.c.l.b16 %v330
    %v1785 = vunpack.c.h.b16 %v330
    %v1786 = vunpack.c.l.b16 %v331
    %v1787 = vunpack.c.h.b16 %v331
    %v1788 = vunpack.c.l.b16 %v332
    %v1789 = vunpack.c.h.b16 %v332
    %v1790 = vunpack.c.l.b16 %v333
    %v1791 = vunpack.c.h.b16 %v333
    %v1792 = vunpack.c.l.b16 %v334
    %v1793 = vunpack.c.h.b16 %v334
    %v1794 = vunpack.c.l.b16 %v335
    %v1795 = vunpack.c.h.b16 %v335
    %v1796 = vunpack.c.l.b16 %v336
    %v1797 = vunpack.c.h.b16 %v336
    %v1798 = vunpack.c.l.b16 %v337
    %v1799 = vunpack.c.h.b16 %v337
    %v1800 = vunpack.c.l.b16 %v338
    %v1801 = vunpack.c.h.b16 %v338
    %v1802 = vunpack.c.l.b16 %v339
    %v1803 = vunpack.c.h.b16 %v339
    %v1804 = vunpack.c.l.b16 %v340
    %v1805 = vunpack.c.h.b16 %v340
    %v1806 = vunpack.c.l.b16 %v341
    %v1807 = vunpack.c.h.b16 %v341
    %v1808 = vunpack.c.l.b16 %v342
    %v1809 = vunpack.c.h.b16 %v342
    %v1810 = vunpack.c.l.b16 %v343
    %v1811 = vunpack.c.h.b16 %v343
    %v1812 = vunpack.c.l.b16 %v344
    %v1813 = vunpack.c.h.b16 %v344
    %v1814 = vunpack.c.l.b16 %v345
    %v1815 = vunpack.c.h.b16 %v345
    %v1816 = vunpack.c.l.b16 %v346
    %v1817 = vunpack.c.h.b16 %v346
    %v1818 = vunpack.c.l.b16 %v347
    %v1819 = vunpack.c.h.b16 %v347
    %v1820 = vunpack.c.l.b16 %v348
    %v1821 = vunpack.c.h.b16 %v348
    %v1822 = vunpack.c.l.b16 %v349
    %v1823 = vunpack.c.h.b16 %v349
    %v1824 = vunpack.c.l.b16 %v350
    %v1825 = vunpack.c.h.b16 %v350
    %v1826 = vunpack.c.l.b16 %v351
    %v1827 = vunpack.c.h.b16 %v351
    %v1828 = vunpack.c.l.b16 %v352
    %v1829 = vunpack.c.h.b16 %v352
    %v1830 = vunpack.c.l.b16 %v353
    %v1831 = vunpack.c.h.b16 %v353
    %v1832 = vunpack.c.l.b16 %v354
    %v1833 = vunpack.c.h.b16 %v354
    %v1834 = vunpack.c.l.b16 %v355
    %v1835 = vunpack.c.h.b16 %v355
    %v1836 = vunpack.c.l.b16 %v356
    %v1837 = vunpack.c.h.b16 %v356
    %v1838 = vunpack.c.l.b16 %v357
    %v1839 = vunpack.c.h.b16 %v357
    %v1840 = vunpack.c.l.b16 %v358
    %v1841 = vunpack.c.h.b16 %v358
    %v1842 = vunpack.c.l.b16 %v359
    %v1843 = vunpack.c.h.b16 %v359
    %v1844 = vunpack.c.l.b16 %v360
    %v1845 = vunpack.c.h.b16 %v360
    %v1846 = vunpack.c.l.b16 %v361
    %v1847 = vunpack.c.h.b16 %v361
    %v1848 = vunpack.c.l.b16 %v362
    %v1849 = vunpack.c.h.b16 %v362
    %v1850 = vunpack.c.l.b16 %v363
    %v1851 = vunpack.c.h.b16 %v363
    %v1852 = vunpack.c.l.b16 %v364
    %v1853 = vunpack.c.h.b16 %v364
    %v1854 = vunpack.c.l.b16 %v365
    %v1855 = vunpack.c.h.b16 %v365
    %v1856 = vunpack.c.l.b16 %v366
    %v1857 = vunpack.c.h.b16 %v366
    %v1858 = vunpack.c.l.b16 %v367
    %v1859 = vunpack.c.h.b16 %v367
    %v1860 = vunpack.c.l.b16 %v368
    %v1861 = vunpack.c.h.b16 %v368
    %v1862 = vunpack.c.l.b16 %v369
    %v1863 = vunpack.c.h.b16 %v369
    %v1864 = vunpack.c.l.b16 %v370
    %v1865 = vunpack.c.h.b16 %v370
    %v1866 = vunpack.c.l.b16 %v371
    %v1867 = vunpack.c.h.b16 %v371
    %v1868 = vunpack.c.l.b16 %v372
    %v1869 = vunpack.c.h.b16 %v372
    %v1870 = vunpack.c.l.b16 %v373
    %v1871 = vunpack.c.h.b16 %v373
    %v1872 = vunpack.c.l.b16 %v374
    %v1873 = vunpack.c.h.b16 %v374
    %v1874 = vunpack.c.l.b16 %v375
    %v1875 = vunpack.c.h.b16 %v375
    %v1876 = vunpack.c.l.b16 %v376
    %v1877 = vunpack.c.h.b16 %v376
    %v1878 = vunpack.c.l.b16 %v377
    %v1879 = vunpack.c.h.b16 %v377
    %v1880 = vunpack.c.l.b16 %v378
    %v1881 = vunpack.c.h.b16 %v378
    %v1882 = vunpack.c.l.b16 %v379
    %v1883 = vunpack.c.h.b16 %v379
    %v1884 = vunpack.c.l.b16 %v380
    %v1885 = vunpack.c.h.b16 %v380
    %v1886 = vunpack.c.l.b16 %v381
    %v1887 = vunpack.c.h.b16 %v381
    %v1888 = vunpack.c.l.b16 %v382
    %v1889 = vunpack.c.h.b16 %v382
    %v1890 = vunpack.c.l.b16 %v383
    %v1891 = vunpack.c.h.b16 %v383
    %v1892 = vunpack.c.l.b16 %v384
    %v1893 = vunpack.c.h.b16 %v384
    %v1894 = vunpack.c.l.b16 %v385
    %v1895 = vunpack.c.h.b16 %v385
    %v1896 = vunpack.c.l.b16 %v386
    %v1897 = vunpack.c.h.b16 %v386
    %v1898 = vunpack.c.l.b16 %v387
    %v1899 = vunpack.c.h.b16 %v387
    %v1900 = vunpack.c.l.b16 %v388
    %v1901 = vunpack.c.h.b16 %v388
    %v1902 = vunpack.c.l.b16 %v389
    %v1903 = vunpack.c.h.b16 %v389
    %v1904 = vunpack.c.l.b16 %v390
    %v1905 = vunpack.c.h.b16 %v390
    %v1906 = vunpack.c.l.b16 %v391
    %v1907 = vunpack.c.h.b16 %v391
    %v1908 = vunpack.c.l.b16 %v392
    %v1909 = vunpack.c.h.b16 %v392
    %v1910 = vunpack.c.l.b16 %v393
    %v1911 = vunpack.c.h.b16 %v393
    %v1912 = vunpack.c.l.b16 %v394
    %v1913 = vunpack.c.h.b16 %v394
    %v1914 = vunpack.c.l.b16 %v395
    %v1915 = vunpack.c.h.b16 %v395
    %v1916 = vunpack.c.l.b16 %v396
    %v1917 = vunpack.c.h.b16 %v396
    %v1918 = vunpack.c.l.b16 %v397
    %v1919 = vunpack.c.h.b16 %v397
    %v1920 = vunpack.c.l.b16 %v398
    %v1921 = vunpack.c.h.b16 %v398
    %v1922 = vunpack.c.l.b16 %v399
    %v1923 = vunpack.c.h.b16 %v399
    %v1924 = vunpack.c.l.b16 %v400
    %v1925 = vunpack.c.h.b16 %v400
    %v1926 = vunpack.c.l.b16 %v401
    %v1927 = vunpack.c.h.b16 %v401
    %v1928 = vunpack.c.l.b16 %v402
    %v1929 = vunpack.c.h.b16 %v402
    %v1930 = vunpack.c.l.b16 %v403
    %v1931 = vunpack.c.h.b16 %v403
    %v1932 = vunpack.c.l.b16 %v404
    %v1933 = vunpack.c.h.b16 %v404
    %v1934 = vunpack.c.l.b16 %v405
    %v1935 = vunpack.c.h.b16 %v405
    %v1936 = vunpack.c.l.b16 %v406
    %v1937 = vunpack.c.h.b16 %v406
    %v1938 = vunpack.c.l.b16 %v407
    %v1939 = vunpack.c.h.b16 %v407
    %v1940 = vunpack.c.l.b16 %v408
    %v1941 = vunpack.c.h.b16 %v408
    %v1942 = vunpack.c.l.b16 %v409
    %v1943 = vunpack.c.h.b16 %v409
    %v1944 = vunpack.c.l.b16 %v410
    %v1945 = vunpack.c.h.b16 %v410
    %v1946 = vunpack.c.l.b16 %v411
    %v1947 = vunpack.c.h.b16 %v411
    %v1948 = vunpack.c.l.b16 %v412
    %v1949 = vunpack.c.h.b16 %v412
    %v1950 = vunpack.c.l.b16 %v413
    %v1951 = vunpack.c.h.b16 %v413
    %v1952 = vunpack.c.l.b16 %v414
    %v1953 = vunpack.c.h.b16 %v414
    %v1954 = vunpack.c.l.b16 %v415
    %v1955 = vunpack.c.h.b16 %v415
    %v1956 = vunpack.c.l.b16 %v416
    %v1957 = vunpack.c.h.b16 %v416
    %v1958 = vunpack.c.l.b16 %v417
    %v1959 = vunpack.c.h.b16 %v417
    %v1960 = vunpack.c.l.b16 %v418
    %v1961 = vunpack.c.h.b16 %v418
    %v1962 = vunpack.c.l.b16 %v419
    %v1963 = vunpack.c.h.b16 %v419
    %v1964 = vunpack.c.l.b16 %v420
    %v1965 = vunpack.c.h.b16 %v420
    %v1966 = vunpack.c.l.b16 %v421
    %v1967 = vunpack.c.h.b16 %v421
    %v1968 = vunpack.c.l.b16 %v422
    %v1969 = vunpack.c.h.b16 %v422
    %v1970 = vunpack.c.l.b16 %v423
    %v1971 = vunpack.c.h.b16 %v423
    %v1972 = vunpack.c.l.b16 %v424
    %v1973 = vunpack.c.h.b16 %v424
    %v1974 = vunpack.c.l.b16 %v425
    %v1975 = vunpack.c.h.b16 %v425
    %v1976 = vunpack.c.l.b16 %v426
    %v1977 = vunpack.c.h.b16 %v426
    %v1978 = vunpack.c.l.b16 %v427
    %v1979 = vunpack.c.h.b16 %v427
    %v1980 = vunpack.c.l.b16 %v428
    %v1981 = vunpack.c.h.b16 %v428
    %v1982 = vunpack.c.l.b16 %v429
    %v1983 = vunpack.c.h.b16 %v429
    %v1984 = vunpack.c.l.b16 %v430
    %v1985 = vunpack.c.h.b16 %v430
    %v1986 = vunpack.c.l.b16 %v431
    %v1987 = vunpack.c.h.b16 %v431
    %v1988 = vunpack.c.l.b16 %v432
    %v1989 = vunpack.c.h.b16 %v432
    %v1990 = vunpack.c.l.b16 %v433
    %v1991 = vunpack.c.h.b16 %v433
    %v1992 = vunpack.c.l.b16 %v434
    %v1993 = vunpack.c.h.b16 %v434
    %v1994 = vunpack.c.l.b16 %v435
    %v1995 = vunpack.c.h.b16 %v435
    %v1996 = vunpack.c.l.b16 %v436
    %v1997 = vunpack.c.h.b16 %v436
    %v1998 = vunpack.c.l.b16 %v437
    %v1999 = vunpack.c.h.b16 %v437
    %v2000 = vunpack.c.l.b16 %v438
    %v2001 = vunpack.c.h.b16 %v438
    %v2002 = vunpack.c.l.b16 %v439
    %v2003 = vunpack.c.h.b16 %v439
    %v2004 = vunpack.c.l.b16 %v440
    %v2005 = vunpack.c.h.b16 %v440
    %v2006 = vunpack.c.l.b16 %v441
    %v2007 = vunpack.c.h.b16 %v441
    %v2008 = vunpack.c.l.b16 %v442
    %v2009 = vunpack.c.h.b16 %v442
    %v2010 = vunpack.c.l.b16 %v443
    %v2011 = vunpack.c.h.b16 %v443
    %v2012 = vunpack.c.l.b16 %v444
    %v2013 = vunpack.c.h.b16 %v444
    %v2014 = vunpack.c.l.b16 %v445
    %v2015 = vunpack.c.h.b16 %v445
    %v2016 = vunpack.c.l.b16 %v446
    %v2017 = vunpack.c.h.b16 %v446
    %v2018 = vunpack.c.l.b16 %v447
    %v2019 = vunpack.c.h.b16 %v447
    %v2020 = vunpack.c.l.b16 %v448
    %v2021 = vunpack.c.h.b16 %v448
    %v2022 = vunpack.c.l.b16 %v449
    %v2023 = vunpack.c.h.b16 %v449
    %v2024 = vunpack.c.l.b16 %v450
    %v2025 = vunpack.c.h.b16 %v450
    %v2026 = vunpack.c.l.b16 %v451
    %v2027 = vunpack.c.h.b16 %v451
    %v2028 = vunpack.c.l.b16 %v452
    %v2029 = vunpack.c.h.b16 %v452
    %v2030 = vunpack.c.l.b16 %v453
    %v2031 = vunpack.c.h.b16 %v453
    %v2032 = vunpack.c.l.b16 %v454
    %v2033 = vunpack.c.h.b16 %v454
    %v2034 = vunpack.c.l.b16 %v455
    %v2035 = vunpack.c.h.b16 %v455
    %v2036 = vunpack.c.l.b16 %v456
    %v2037 = vunpack.c.h.b16 %v456
    %v2038 = vunpack.c.l.b16 %v457
    %v2039 = vunpack.c.h.b16 %v457
    %v2040 = vunpack.c.l.b16 %v458
    %v2041 = vunpack.c.h.b16 %v458
    %v2042 = vunpack.c.l.b16 %v459
    %v2043 = vunpack.c.h.b16 %v459
    %v2044 = vunpack.c.l.b16 %v460
    %v2045 = vunpack.c.h.b16 %v460
    %v2046 = vpack.c.b16 %v1764, %v1758
    %v2047 = vpack.c.b16 %v1765, %v1759
    %v2048 = vpack.c.b16 %v1766, %v1760
    %v2049 = vpack.c.b16 %v1767, %v1761
    %v2050 = vpack.c.b16 %v1768, %v1762
    %v2051 = vpack.c.b16 %v1769, %v1763
    %v2052 = vpack.c.b16 %v1776, %v1770
    %v2053 = vpack.c.b16 %v1777, %v1771
    %v2054 = vpack.c.b16 %v1778, %v1772
    %v2055 = vpack.c.b16 %v1779, %v1773
    %v2056 = vpack.c.b16 %v1780, %v1774
    %v2057 = vpack.c.b16 %v1781, %v1775
    %v2058 = vpack.c.b16 %v1788, %v1782
    %v2059 = vpack.c.b16 %v1789, %v1783
    %v2060 = vpack.c.b16 %v1790, %v1784
    %v2061 = vpack.c.b16 %v1791, %v1785
    %v2062 = vpack.c.b16 %v1792, %v1786
    %v2063 = vpack.c.b16 %v1793, %v1787
    %v2064 = vpack.c.b16 %v1800, %v1794
    %v2065 = vpack.c.b16 %v1801, %v1795
    %v2066 = vpack.c.b16 %v1802, %v1796
    %v2067 = vpack.c.b16 %v1803, %v1797
    %v2068 = vpack.c.b16 %v1804, %v1798
    %v2069 = vpack.c.b16 %v1805, %v1799
    %v2070 = vpack.c.b16 %v1812, %v1806
    %v2071 = vpack.c.b16 %v1813, %v1807
    %v2072 = vpack.c.b16 %v1814, %v1808
    %v2073 = vpack.c.b16 %v1815, %v1809
    %v2074 = vpack.c.b16 %v1816, %v1810
    %v2075 = vpack.c.b16 %v1817, %v1811
    %v2076 = vpack.c.b16 %v1824, %v1818
    %v2077 = vpack.c.b16 %v1825, %v1819
    %v2078 = vpack.c.b16 %v1826, %v1820
    %v2079 = vpack.c.b16 %v1827, %v1821
    %v2080 = vpack.c.b16 %v1828, %v1822
    %v2081 = vpack.c.b16 %v1829, %v1823
    %v2082 = vpack.c.b16 %v1836, %v1830
    %v2083 = vpack.c.b16 %v1837, %v1831
    %v2084 = vpack.c.b16 %v1838, %v1832
    %v2085 = vpack.c.b16 %v1839, %v1833
    %v2086 = vpack.c.b16 %v1840, %v1834
    %v2087 = vpack.c.b16 %v1841, %v1835
    %v2088 = vpack.c.b16 %v1848, %v1842
    %v2089 = vpack.c.b16 %v1849, %v1843
    %v2090 = vpack.c.b16 %v1850, %v1844
    %v2091 = vpack.c.b16 %v1851, %v1845
    %v2092 = vpack.c.b16 %v1852, %v1846
    %v2093 = vpack.c.b16 %v1853, %v1847
    %v2094 = vpack.c.b16 %v1860, %v1854
    %v2095 = vpack.c.b16 %v1861, %v1855
    %v2096 = vpack.c.b16 %v1862, %v1856
    %v2097 = vpack.c.b16 %v1863, %v1857
    %v2098 = vpack.c.b16 %v1864, %v1858
    %v2099 = vpack.c.b16 %v1865, %v1859
    %v2100 = vpack.c.b16 %v1872, %v1866
    %v2101 = vpack.c.b16 %v1873, %v1867
    %v2102 = vpack.c.b16 %v1874, %v1868
    %v2103 = vpack.c.b16 %v1875, %v1869
    %v2104 = vpack.c.b16 %v1876, %v1870
    %v2105 = vpack.c.b16 %v1877, %v1871
    %v2106 = vpack.c.b16 %v1884, %v1878
    %v2107 = vpack.c.b16 %v1885, %v1879
    %v2108 = vpack.c.b16 %v1886, %v1880
    %v2109 = vpack.c.b16 %v1887, %v1881
    %v2110 = vpack.c.b16 %v1888, %v1882
    %v2111 = vpack.c.b16 %v1889, %v1883
    %v2112 = vpack.c.b16 %v1896, %v1890
    %v2113 = vpack.c.b16 %v1897, %v1891
    %v2114 = vpack.c.b16 %v1898, %v1892
    %v2115 = vpack.c.b16 %v1899, %v1893
    %v2116 = vpack.c.b16 %v1900, %v1894
    %v2117 = vpack.c.b16 %v1901, %v1895
    %v2118 = vpack.c.b16 %v1908, %v1902
    %v2119 = vpack.c.b16 %v1909, %v1903
    %v2120 = vpack.c.b16 %v1910, %v1904
    %v2121 = vpack.c.b16 %v1911, %v1905
    %v2122 = vpack.c.b16 %v1912, %v1906
    %v2123 = vpack.c.b16 %v1913, %v1907
    %v2124 = vpack.c.b16 %v1920, %v1914
    %v2125 = vpack.c.b16 %v1921, %v1915
    %v2126 = vpack.c.b16 %v1922, %v1916
    %v2127 = vpack.c.b16 %v1923, %v1917
    %v2128 = vpack.c.b16 %v1924, %v1918
    %v2129 = vpack.c.b16 %v1925, %v1919
    %v2130 = vpack.c.b16 %v1932, %v1926
    %v2131 = vpack.c.b16 %v1933, %v1927
    %v2132 = vpack.c.b16 %v1934, %v1928
    %v2133 = vpack.c.b16 %v1935, %v1929
    %v2134 = vpack.c.b16 %v1936, %v1930
    %v2135 = vpack.c.b16 %v1937, %v1931
    %v2136 = vpack.c.b16 %v1944, %v1938
    %v2137 = vpack.c.b16 %v1945, %v1939
    %v2138 = vpack.c.b16 %v1946, %v1940
    %v2139 = vpack.c.b16 %v1947, %v1941
    %v2140 = vpack.c.b16 %v1948, %v1942
    %v2141 = vpack.c.b16 %v1949, %v1943
    %v2142 = vpack.c.b16 %v1956, %v1950
    %v2143 = vpack.c.b16 %v1957, %v1951
    %v2144 = vpack.c.b16 %v1958, %v1952
    %v2145 = vpack.c.b16 %v1959, %v1953
    %v2146 = vpack.c.b16 %v1960, %v1954
    %v2147 = vpack.c.b16 %v1961, %v1955
    %v2148 = vpack.c.b16 %v1968, %v1962
    %v2149 = vpack.c.b16 %v1969, %v1963
    %v2150 = vpack.c.b16 %v1970, %v1964
    %v2151 = vpack.c.b16 %v1971, %v1965
    %v2152 = vpack.c.b16 %v1972, %v1966
    %v2153 = vpack.c.b16 %v1973, %v1967
    %v2154 = vpack.c.b16 %v1980, %v1974
    %v2155 = vpack.c.b16 %v1981, %v1975
    %v2156 = vpack.c.b16 %v1982, %v1976
    %v2157 = vpack.c.b16 %v1983, %v1977
    %v2158 = vpack.c.b16 %v1984, %v1978
    %v2159 = vpack.c.b16 %v1985, %v1979
    %v2160 = vpack.c.b16 %v1992, %v1986
    %v2161 = vpack.c.b16 %v1993, %v1987
    %v2162 = vpack.c.b16 %v1994, %v1988
    %v2163 = vpack.c.b16 %v1995, %v1989
    %v2164 = vpack.c.b16 %v1996, %v1990
    %v2165 = vpack.c.b16 %v1997, %v1991
    %v2166 = vpack.c.b16 %v2004, %v1998
    %v2167 = vpack.c.b16 %v2005, %v1999
    %v2168 = vpack.c.b16 %v2006, %v2000
    %v2169 = vpack.c.b16 %v2007, %v2001
    %v2170 = vpack.c.b16 %v2008, %v2002
    %v2171 = vpack.c.b16 %v2009, %v2003
    %v2172 = vpack.c.b16 %v2016, %v2010
    %v2173 = vpack.c.b16 %v2017, %v2011
    %v2174 = vpack.c.b16 %v2018, %v2012
    %v2175 = vpack.c.b16 %v2019, %v2013
    %v2176 = vpack.c.b16 %v2020, %v2014
    %v2177 = vpack.c.b16 %v2021, %v2015
    %v2178 = vpack.c.b16 %v2028, %v2022
    %v2179 = vpack.c.b16 %v2029, %v2023
    %v2180 = vpack.c.b16 %v2030, %v2024
    %v2181 = vpack.c.b16 %v2031, %v2025
    %v2182 = vpack.c.b16 %v2032, %v2026
    %v2183 = vpack.c.b16 %v2033, %v2027
    %v2184 = vpack.c.b16 %v2040, %v2034
    %v2185 = vpack.c.b16 %v2041, %v2035
    %v2186 = vpack.c.b16 %v2042, %v2036
    %v2187 = vpack.c.b16 %v2043, %v2037
    %v2188 = vpack.c.b16 %v2044, %v2038
    %v2189 = vpack.c.b16 %v2045, %v2039
    %2334 = vmatprep.subr.bf16.mxu0 %v2047
    %2335 = vmatpush1.bf16.msra.mxu0 %v2046
    %2336 = vmatprep.subr.bf16.mxu0 %v2053
    %2337 = vmatpush1.bf16.msra.mxu0 %v2052
    %2338 = vmatprep.subr.bf16.mxu0 %v2059
    %2339 = vmatpush1.bf16.msra.mxu0 %v2058
    %2340 = vmatprep.subr.bf16.mxu0 %v2065
    %2341 = vmatpush1.bf16.msra.mxu0 %v2064
    %2342 = vmatprep.subr.bf16.mxu0 %v2071
    %2343 = vmatpush1.bf16.msra.mxu0 %v2070
    %2344 = vmatprep.subr.bf16.mxu0 %v2077
    %2345 = vmatpush1.bf16.msra.mxu0 %v2076
    %2346 = vmatprep.subr.bf16.mxu0 %v2083
    %2347 = vmatpush1.bf16.msra.mxu0 %v2082
    %2348 = vmatprep.subr.bf16.mxu0 %v2089
    %2349 = vmatpush1.bf16.msra.mxu0 %v2088
    %2350 = vmatprep.subr.bf16.mxu0 %v2095
    %2351 = vmatpush1.bf16.msra.mxu0 %v2094
    %2352 = vmatprep.subr.bf16.mxu0 %v2101
    %2353 = vmatpush1.bf16.msra.mxu0 %v2100
    %2354 = vmatprep.subr.bf16.mxu0 %v2107
    %2355 = vmatpush1.bf16.msra.mxu0 %v2106
    %2356 = vmatprep.subr.bf16.mxu0 %v2113
    %2357 = vmatpush1.bf16.msra.mxu0 %v2112
    %2358 = vmatprep.subr.bf16.mxu0 %v2119
    %2359 = vmatpush1.bf16.msra.mxu0 %v2118
    %2360 = vmatprep.subr.bf16.mxu0 %v2125
    %2361 = vmatpush1.bf16.msra.mxu0 %v2124
    %2362 = vmatprep.subr.bf16.mxu0 %v2131
    %2363 = vmatpush1.bf16.msra.mxu0 %v2130
    %2364 = vmatprep.subr.bf16.mxu0 %v2137
    %2365 = vmatpush1.bf16.msra.mxu0 %v2136
    %2366 = vmatprep.mubr.bf16.mxu0 %v1609
    %2367 = vmatmul.mubr.bf16.gmra.mrb[0].mxu0 %v1608
    %v2368 = vpop.f32.mrb[0].mxu0
    %v2369 = vadd.f32 %v1423, %v2368
    %v2370 = vpop.f32.mrb[0].mxu0
    %v2371 = vadd.f32 %v1425, %v2370
    %v2372 = vpop.f32.mrb[0].mxu0
    %v2373 = vpop.f32.mrb[0].mxu0
    %2374 = vdwg.mxu0
    %2375 = vmatprep.subr.bf16.mxu0 %v2143
    %2376 = vmatpush1.bf16.msra.mxu0 %v2142
    %2377 = vmatprep.subr.bf16.mxu0 %v2149
    %2378 = vmatpush1.bf16.msra.mxu0 %v2148
    %2379 = vmatprep.subr.bf16.mxu0 %v2155
    %2380 = vmatpush1.bf16.msra.mxu0 %v2154
    %2381 = vmatprep.subr.bf16.mxu0 %v2161
    %2382 = vmatpush1.bf16.msra.mxu0 %v2160
    %2383 = vmatprep.subr.bf16.mxu0 %v2167
    %2384 = vmatpush1.bf16.msra.mxu0 %v2166
    %2385 = vmatprep.subr.bf16.mxu0 %v2173
    %2386 = vmatpush1.bf16.msra.mxu0 %v2172
    %2387 = vmatprep.subr.bf16.mxu0 %v2179
    %2388 = vmatpush1.bf16.msra.mxu0 %v2178
    %2389 = vmatprep.subr.bf16.mxu0 %v2185
    %2390 = vmatpush1.bf16.msra.mxu0 %v2184
    %2391 = vmatprep.subr.bf16.mxu0 0
    %2392 = vmatpush1.bf16.msra.mxu0 0
    %2393 = vmatprep.subr.bf16.mxu0 0
    %2394 = vmatpush1.bf16.msra.mxu0 0
    %2395 = vmatprep.subr.bf16.mxu0 0
    %2396 = vmatpush1.bf16.msra.mxu0 0
    %2397 = vmatprep.subr.bf16.mxu0 0
    %2398 = vmatpush1.bf16.msra.mxu0 0
    %2399 = vmatprep.subr.bf16.mxu0 0
    %2400 = vmatpush1.bf16.msra.mxu0 0
    %2401 = vmatprep.subr.bf16.mxu0 0
    %2402 = vmatpush1.bf16.msra.mxu0 0
    %2403 = vmatprep.subr.bf16.mxu0 0
    %2404 = vmatpush1.bf16.msra.mxu0 0
    %2405 = vmatprep.subr.bf16.mxu0 0
    %2406 = vmatpush1.bf16.msra.mxu0 0
    %2407 = vmatprep.mubr.bf16.mxu0 0
    %2408 = vmatmul.mubr.bf16.gmra.mrb[0].mxu0 %v1610
    %v2409 = vpop.f32.mrb[0].mxu0
    %v2410 = vadd.f32 %v2369, %v2409
    %v2411 = vpop.f32.mrb[0].mxu0
    %v2412 = vadd.f32 %v2371, %v2411
    %v2413 = vpop.f32.mrb[0].mxu0
    %v2414 = vpop.f32.mrb[0].mxu0
    %2415 = vdwg.mxu0
    %2416 = vmatprep.subr.bf16.mxu0 %v2049
    %2417 = vmatpush1.bf16.msra.mxu0 %v2048
    %2418 = vmatprep.subr.bf16.mxu0 %v2055
    %2419 = vmatpush1.bf16.msra.mxu0 %v2054
    %2420 = vmatprep.subr.bf16.mxu0 %v2061
    %2421 = vmatpush1.bf16.msra.mxu0 %v2060
    %2422 = vmatprep.subr.bf16.mxu0 %v2067
    %2423 = vmatpush1.bf16.msra.mxu0 %v2066
    %2424 = vmatprep.subr.bf16.mxu0 %v2073
    %2425 = vmatpush1.bf16.msra.mxu0 %v2072
    %2426 = vmatprep.subr.bf16.mxu0 %v2079
    %2427 = vmatpush1.bf16.msra.mxu0 %v2078
    %2428 = vmatprep.subr.bf16.mxu0 %v2085
    %2429 = vmatpush1.bf16.msra.mxu0 %v2084
    %2430 = vmatprep.subr.bf16.mxu0 %v2091
    %2431 = vmatpush1.bf16.msra.mxu0 %v2090
    %2432 = vmatprep.subr.bf16.mxu0 %v2097
    %2433 = vmatpush1.bf16.msra.mxu0 %v2096
    %2434 = vmatprep.subr.bf16.mxu0 %v2103
    %2435 = vmatpush1.bf16.msra.mxu0 %v2102
    %2436 = vmatprep.subr.bf16.mxu0 %v2109
    %2437 = vmatpush1.bf16.msra.mxu0 %v2108
    %2438 = vmatprep.subr.bf16.mxu0 %v2115
    %2439 = vmatpush1.bf16.msra.mxu0 %v2114
    %2440 = vmatprep.subr.bf16.mxu0 %v2121
    %2441 = vmatpush1.bf16.msra.mxu0 %v2120
    %2442 = vmatprep.subr.bf16.mxu0 %v2127
    %2443 = vmatpush1.bf16.msra.mxu0 %v2126
    %2444 = vmatprep.subr.bf16.mxu0 %v2133
    %2445 = vmatpush1.bf16.msra.mxu0 %v2132
    %2446 = vmatprep.subr.bf16.mxu0 %v2139
    %2447 = vmatpush1.bf16.msra.mxu0 %v2138
    %2448 = vmatprep.mubr.bf16.mxu0 %v1609
    %2449 = vmatmul.mubr.bf16.gmra.mrb[0].mxu0 %v1608
    %v2450 = vpop.f32.mrb[0].mxu0
    %v2451 = vadd.f32 %v1505, %v2450
    %v2452 = vpop.f32.mrb[0].mxu0
    %v2453 = vadd.f32 %v1507, %v2452
    %v2454 = vpop.f32.mrb[0].mxu0
    %v2455 = vpop.f32.mrb[0].mxu0
    %2456 = vdwg.mxu0
    %2457 = vmatprep.subr.bf16.mxu0 %v2145
    %2458 = vmatpush1.bf16.msra.mxu0 %v2144
    %2459 = vmatprep.subr.bf16.mxu0 %v2151
    %2460 = vmatpush1.bf16.msra.mxu0 %v2150
    %2461 = vmatprep.subr.bf16.mxu0 %v2157
    %2462 = vmatpush1.bf16.msra.mxu0 %v2156
    %2463 = vmatprep.subr.bf16.mxu0 %v2163
    %2464 = vmatpush1.bf16.msra.mxu0 %v2162
    %2465 = vmatprep.subr.bf16.mxu0 %v2169
    %2466 = vmatpush1.bf16.msra.mxu0 %v2168
    %2467 = vmatprep.subr.bf16.mxu0 %v2175
    %2468 = vmatpush1.bf16.msra.mxu0 %v2174
    %2469 = vmatprep.subr.bf16.mxu0 %v2181
    %2470 = vmatpush1.bf16.msra.mxu0 %v2180
    %2471 = vmatprep.subr.bf16.mxu0 %v2187
    %2472 = vmatpush1.bf16.msra.mxu0 %v2186
    %2473 = vmatprep.subr.bf16.mxu0 0
    %2474 = vmatpush1.bf16.msra.mxu0 0
    %2475 = vmatprep.subr.bf16.mxu0 0
    %2476 = vmatpush1.bf16.msra.mxu0 0
    %2477 = vmatprep.subr.bf16.mxu0 0
    %2478 = vmatpush1.bf16.msra.mxu0 0
    %2479 = vmatprep.subr.bf16.mxu0 0
    %2480 = vmatpush1.bf16.msra.mxu0 0
    %2481 = vmatprep.subr.bf16.mxu0 0
    %2482 = vmatpush1.bf16.msra.mxu0 0
    %2483 = vmatprep.subr.bf16.mxu0 0
    %2484 = vmatpush1.bf16.msra.mxu0 0
    %2485 = vmatprep.subr.bf16.mxu0 0
    %2486 = vmatpush1.bf16.msra.mxu0 0
    %2487 = vmatprep.subr.bf16.mxu0 0
    %2488 = vmatpush1.bf16.msra.mxu0 0
    %2489 = vmatprep.mubr.bf16.mxu0 0
    %2490 = vmatmul.mubr.bf16.gmra.mrb[0].mxu0 %v1610
    %v2491 = vpop.f32.mrb[0].mxu0
    %v2492 = vadd.f32 %v2451, %v2491
    %v2493 = vpop.f32.mrb[0].mxu0
    %v2494 = vadd.f32 %v2453, %v2493
    %v2495 = vpop.f32.mrb[0].mxu0
    %v2496 = vpop.f32.mrb[0].mxu0
    %2497 = vdwg.mxu0
    %2498 = vmatprep.subr.bf16.mxu0 %v2051
    %2499 = vmatpush1.bf16.msra.mxu0 %v2050
    %2500 = vmatprep.subr.bf16.mxu0 %v2057
    %2501 = vmatpush1.bf16.msra.mxu0 %v2056
    %2502 = vmatprep.subr.bf16.mxu0 %v2063
    %2503 = vmatpush1.bf16.msra.mxu0 %v2062
    %2504 = vmatprep.subr.bf16.mxu0 %v2069
    %2505 = vmatpush1.bf16.msra.mxu0 %v2068
    %2506 = vmatprep.subr.bf16.mxu0 %v2075
    %2507 = vmatpush1.bf16.msra.mxu0 %v2074
    %2508 = vmatprep.subr.bf16.mxu0 %v2081
    %2509 = vmatpush1.bf16.msra.mxu0 %v2080
    %2510 = vmatprep.subr.bf16.mxu0 %v2087
    %2511 = vmatpush1.bf16.msra.mxu0 %v2086
    %2512 = vmatprep.subr.bf16.mxu0 %v2093
    %2513 = vmatpush1.bf16.msra.mxu0 %v2092
    %2514 = vmatprep.subr.bf16.mxu0 %v2099
    %2515 = vmatpush1.bf16.msra.mxu0 %v2098
    %2516 = vmatprep.subr.bf16.mxu0 %v2105
    %2517 = vmatpush1.bf16.msra.mxu0 %v2104
    %2518 = vmatprep.subr.bf16.mxu0 %v2111
    %2519 = vmatpush1.bf16.msra.mxu0 %v2110
    %2520 = vmatprep.subr.bf16.mxu0 %v2117
    %2521 = vmatpush1.bf16.msra.mxu0 %v2116
    %2522 = vmatprep.subr.bf16.mxu0 %v2123
    %2523 = vmatpush1.bf16.msra.mxu0 %v2122
    %2524 = vmatprep.subr.bf16.mxu0 %v2129
    %2525 = vmatpush1.bf16.msra.mxu0 %v2128
    %2526 = vmatprep.subr.bf16.mxu0 %v2135
    %2527 = vmatpush1.bf16.msra.mxu0 %v2134
    %2528 = vmatprep.subr.bf16.mxu0 %v2141
    %2529 = vmatpush1.bf16.msra.mxu0 %v2140
    %2530 = vmatprep.mubr.bf16.mxu0 %v1609
    %2531 = vmatmul.mubr.bf16.gmra.mrb[0].mxu0 %v1608
    %v2532 = vpop.f32.mrb[0].mxu0
    %v2533 = vadd.f32 %v1587, %v2532
    %v2534 = vpop.f32.mrb[0].mxu0
    %v2535 = vadd.f32 %v1589, %v2534
    %v2536 = vpop.f32.mrb[0].mxu0
    %v2537 = vpop.f32.mrb[0].mxu0
    %2538 = vdwg.mxu0
    %2539 = vmatprep.subr.bf16.mxu0 %v2147
    %2540 = vmatpush1.bf16.msra.mxu0 %v2146
    %2541 = vmatprep.subr.bf16.mxu0 %v2153
    %2542 = vmatpush1.bf16.msra.mxu0 %v2152
    %2543 = vmatprep.subr.bf16.mxu0 %v2159
    %2544 = vmatpush1.bf16.msra.mxu0 %v2158
    %2545 = vmatprep.subr.bf16.mxu0 %v2165
    %2546 = vmatpush1.bf16.msra.mxu0 %v2164
    %2547 = vmatprep.subr.bf16.mxu0 %v2171
    %2548 = vmatpush1.bf16.msra.mxu0 %v2170
    %2549 = vmatprep.subr.bf16.mxu0 %v2177
    %2550 = vmatpush1.bf16.msra.mxu0 %v2176
    %2551 = vmatprep.subr.bf16.mxu0 %v2183
    %2552 = vmatpush1.bf16.msra.mxu0 %v2182
    %2553 = vmatprep.subr.bf16.mxu0 %v2189
    %2554 = vmatpush1.bf16.msra.mxu0 %v2188
    %2555 = vmatprep.subr.bf16.mxu0 0
    %2556 = vmatpush1.bf16.msra.mxu0 0
    %2557 = vmatprep.subr.bf16.mxu0 0
    %2558 = vmatpush1.bf16.msra.mxu0 0
    %2559 = vmatprep.subr.bf16.mxu0 0
    %2560 = vmatpush1.bf16.msra.mxu0 0
    %2561 = vmatprep.subr.bf16.mxu0 0
    %2562 = vmatpush1.bf16.msra.mxu0 0
    %2563 = vmatprep.subr.bf16.mxu0 0
    %2564 = vmatpush1.bf16.msra.mxu0 0
    %2565 = vmatprep.subr.bf16.mxu0 0
    %2566 = vmatpush1.bf16.msra.mxu0 0
    %2567 = vmatprep.subr.bf16.mxu0 0
    %2568 = vmatpush1.bf16.msra.mxu0 0
    %2569 = vmatprep.subr.bf16.mxu0 0
    %2570 = vmatpush1.bf16.msra.mxu0 0
    %2571 = vmatprep.mubr.bf16.mxu0 0
    %2572 = vmatmul.mubr.bf16.gmra.mrb[0].mxu0 %v1610
    %v2573 = vpop.f32.mrb[0].mxu0
    %v2574 = vadd.f32 %v2533, %v2573
    %v2575 = vpop.f32.mrb[0].mxu0
    %v2576 = vadd.f32 %v2535, %v2575
    %v2577 = vpop.f32.mrb[0].mxu0
    %v2578 = vpop.f32.mrb[0].mxu0
    %2579 = vdwg.mxu0
    %v2580 = vld [vmem:[#allocation7 + $0x900] sm:$0xff]
    %v2581 = vld [vmem:[#allocation7 + $0x908] sm:$0xff]
    %v2582 = vld [vmem:[#allocation7 + $0x910] sm:$0xff]
    %v2583 = vld [vmem:[#allocation7 + $0x918] sm:$0xff]
    %v2584 = vld [vmem:[#allocation7 + $0x920] sm:$0xff]
    %v2585 = vld [vmem:[#allocation7 + $0x928] sm:$0xff]
    %v2586 = vld [vmem:[#allocation7 + $0x930] sm:$0xff]
    %v2587 = vld [vmem:[#allocation7 + $0x938] sm:$0xff]
    %v2588 = vld [vmem:[#allocation7 + $0x940] sm:$0xff]
    %v2589 = vld [vmem:[#allocation7 + $0x948] sm:$0xff]
    %v2590 = vld [vmem:[#allocation7 + $0x950] sm:$0xff]
    %v2591 = vld [vmem:[#allocation7 + $0x958] sm:$0xff]
    %v2592 = vld [vmem:[#allocation7 + $0x960] sm:$0xff]
    %v2593 = vld [vmem:[#allocation7 + $0x968] sm:$0xff]
    %v2594 = vld [vmem:[#allocation7 + $0x970] sm:$0xff]
    %v2595 = vld [vmem:[#allocation7 + $0x978] sm:$0xff]
    %v2596 = vld [vmem:[#allocation7 + $0x980] sm:$0xff]
    %v2597 = vld [vmem:[#allocation7 + $0x988] sm:$0xff]
    %v2598 = vld [vmem:[#allocation7 + $0x990] sm:$0xff]
    %v2599 = vld [vmem:[#allocation7 + $0x998] sm:$0xff]
    %v2600 = vld [vmem:[#allocation7 + $0x9a0] sm:$0xff]
    %v2601 = vld [vmem:[#allocation7 + $0x9a8] sm:$0xff]
    %v2602 = vld [vmem:[#allocation7 + $0x9b0] sm:$0xff]
    %v2603 = vld [vmem:[#allocation7 + $0x9b8] sm:$0xff]
    %v2604 = vld [vmem:[#allocation7 + $0x9c0] sm:$0xff]
    %v2605 = vld [vmem:[#allocation7 + $0x9c8] sm:$0xff]
    %v2606 = vld [vmem:[#allocation7 + $0x9d0] sm:$0xff]
    %v2607 = vld [vmem:[#allocation7 + $0x9d8] sm:$0xff]
    %v2608 = vld [vmem:[#allocation7 + $0x9e0] sm:$0xff]
    %v2609 = vld [vmem:[#allocation7 + $0x9e8] sm:$0xff]
    %v2610 = vld [vmem:[#allocation7 + $0x9f0] sm:$0xff]
    %v2611 = vld [vmem:[#allocation7 + $0x9f8] sm:$0xff]
    %v2612 = vld [vmem:[#allocation7 + $0xa00] sm:$0xff]
    %v2613 = vld [vmem:[#allocation7 + $0xa08] sm:$0xff]
    %v2614 = vld [vmem:[#allocation7 + $0xa10] sm:$0xff]
    %v2615 = vld [vmem:[#allocation7 + $0xa18] sm:$0xff]
    %v2616 = vld [vmem:[#allocation7 + $0xa20] sm:$0xff]
    %v2617 = vld [vmem:[#allocation7 + $0xa28] sm:$0xff]
    %v2618 = vld [vmem:[#allocation7 + $0xa30] sm:$0xff]
    %v2619 = vld [vmem:[#allocation7 + $0xa38] sm:$0xff]
    %v2620 = vld [vmem:[#allocation7 + $0xa40] sm:$0xff]
    %v2621 = vld [vmem:[#allocation7 + $0xa48] sm:$0xff]
    %v2622 = vld [vmem:[#allocation7 + $0xa50] sm:$0xff]
    %v2623 = vld [vmem:[#allocation7 + $0xa58] sm:$0xff]
    %v2624 = vld [vmem:[#allocation7 + $0xa60] sm:$0xff]
    %v2625 = vld [vmem:[#allocation7 + $0xa68] sm:$0xff]
    %v2626 = vld [vmem:[#allocation7 + $0xa70] sm:$0xff]
    %v2627 = vld [vmem:[#allocation7 + $0xa78] sm:$0xff]
    %v2628 = vld [vmem:[#allocation7 + $0xa80] sm:$0xff]
    %v2629 = vld [vmem:[#allocation7 + $0xa88] sm:$0xff]
    %v2630 = vld [vmem:[#allocation7 + $0xa90] sm:$0xff]
    %v2631 = vld [vmem:[#allocation7 + $0xa98] sm:$0xff]
    %v2632 = vld [vmem:[#allocation7 + $0xaa0] sm:$0xff]
    %v2633 = vld [vmem:[#allocation7 + $0xaa8] sm:$0xff]
    %v2634 = vld [vmem:[#allocation7 + $0xab0] sm:$0xff]
    %v2635 = vld [vmem:[#allocation7 + $0xab8] sm:$0xff]
    %v2636 = vld [vmem:[#allocation7 + $0xac0] sm:$0xff]
    %v2637 = vld [vmem:[#allocation7 + $0xac8] sm:$0xff]
    %v2638 = vld [vmem:[#allocation7 + $0xad0] sm:$0xff]
    %v2639 = vld [vmem:[#allocation7 + $0xad8] sm:$0xff]
    %v2640 = vld [vmem:[#allocation7 + $0xae0] sm:$0xff]
    %v2641 = vld [vmem:[#allocation7 + $0xae8] sm:$0xff]
    %v2642 = vld [vmem:[#allocation7 + $0xaf0] sm:$0xff]
    %v2643 = vld [vmem:[#allocation7 + $0xaf8] sm:$0xff]
    %v2644 = vld [vmem:[#allocation7 + $0xb00] sm:$0xff]
    %v2645 = vld [vmem:[#allocation7 + $0xb08] sm:$0xff]
    %v2646 = vld [vmem:[#allocation7 + $0xb10] sm:$0xff]
    %v2647 = vld [vmem:[#allocation7 + $0xb18] sm:$0xff]
    %v2648 = vld [vmem:[#allocation7 + $0xb20] sm:$0xff]
    %v2649 = vld [vmem:[#allocation7 + $0xb28] sm:$0xff]
    %v2650 = vld [vmem:[#allocation7 + $0xb30] sm:$0xff]
    %v2651 = vld [vmem:[#allocation7 + $0xb38] sm:$0xff]
    %v2652 = vld [vmem:[#allocation7 + $0xb40] sm:$0xff]
    %v2653 = vld [vmem:[#allocation7 + $0xb48] sm:$0xff]
    %v2654 = vld [vmem:[#allocation7 + $0xb50] sm:$0xff]
    %v2655 = vld [vmem:[#allocation7 + $0xb58] sm:$0xff]
    %v2656 = vld [vmem:[#allocation7 + $0xb60] sm:$0xff]
    %v2657 = vld [vmem:[#allocation7 + $0xb68] sm:$0xff]
    %v2658 = vld [vmem:[#allocation7 + $0xb70] sm:$0xff]
    %v2659 = vld [vmem:[#allocation7 + $0xb78] sm:$0xff]
    %v2660 = vld [vmem:[#allocation7 + $0xb80] sm:$0xff]
    %v2661 = vld [vmem:[#allocation7 + $0xb88] sm:$0xff]
    %v2662 = vld [vmem:[#allocation7 + $0xb90] sm:$0xff]
    %v2663 = vld [vmem:[#allocation7 + $0xb98] sm:$0xff]
    %v2664 = vld [vmem:[#allocation7 + $0xba0] sm:$0xff]
    %v2665 = vld [vmem:[#allocation7 + $0xba8] sm:$0xff]
    %v2666 = vld [vmem:[#allocation7 + $0xbb0] sm:$0xff]
    %v2667 = vld [vmem:[#allocation7 + $0xbb8] sm:$0xff]
    %v2668 = vld [vmem:[#allocation7 + $0xbc0] sm:$0xff]
    %v2669 = vld [vmem:[#allocation7 + $0xbc8] sm:$0xff]
    %v2670 = vld [vmem:[#allocation7 + $0xbd0] sm:$0xff]
    %v2671 = vld [vmem:[#allocation7 + $0xbd8] sm:$0xff]
    %v2672 = vld [vmem:[#allocation7 + $0xbe0] sm:$0xff]
    %v2673 = vld [vmem:[#allocation7 + $0xbe8] sm:$0xff]
    %v2674 = vld [vmem:[#allocation7 + $0xbf0] sm:$0xff]
    %v2675 = vld [vmem:[#allocation7 + $0xbf8] sm:$0xff]
    %v2676 = vld [vmem:[#allocation7 + $0xc00] sm:$0xff]
    %v2677 = vld [vmem:[#allocation7 + $0xc08] sm:$0xff]
    %v2678 = vld [vmem:[#allocation7 + $0xc10] sm:$0xff]
    %v2679 = vld [vmem:[#allocation7 + $0xc18] sm:$0xff]
    %v2680 = vld [vmem:[#allocation7 + $0xc20] sm:$0xff]
    %v2681 = vld [vmem:[#allocation7 + $0xc28] sm:$0xff]
    %v2682 = vld [vmem:[#allocation7 + $0xc30] sm:$0xff]
    %v2683 = vld [vmem:[#allocation7 + $0xc38] sm:$0xff]
    %v2684 = vld [vmem:[#allocation7 + $0xc40] sm:$0xff]
    %v2685 = vld [vmem:[#allocation7 + $0xc48] sm:$0xff]
    %v2686 = vld [vmem:[#allocation7 + $0xc50] sm:$0xff]
    %v2687 = vld [vmem:[#allocation7 + $0xc58] sm:$0xff]
    %v2688 = vld [vmem:[#allocation7 + $0xc60] sm:$0xff]
    %v2689 = vld [vmem:[#allocation7 + $0xc68] sm:$0xff]
    %v2690 = vld [vmem:[#allocation7 + $0xc70] sm:$0xff]
    %v2691 = vld [vmem:[#allocation7 + $0xc78] sm:$0xff]
    %v2692 = vld [vmem:[#allocation7 + $0xc80] sm:$0xff]
    %v2693 = vld [vmem:[#allocation7 + $0xc88] sm:$0xff]
    %v2694 = vld [vmem:[#allocation7 + $0xc90] sm:$0xff]
    %v2695 = vld [vmem:[#allocation7 + $0xc98] sm:$0xff]
    %v2696 = vld [vmem:[#allocation7 + $0xca0] sm:$0xff]
    %v2697 = vld [vmem:[#allocation7 + $0xca8] sm:$0xff]
    %v2698 = vld [vmem:[#allocation7 + $0xcb0] sm:$0xff]
    %v2699 = vld [vmem:[#allocation7 + $0xcb8] sm:$0xff]
    %v2700 = vld [vmem:[#allocation7 + $0xcc0] sm:$0xff]
    %v2701 = vld [vmem:[#allocation7 + $0xcc8] sm:$0xff]
    %v2702 = vld [vmem:[#allocation7 + $0xcd0] sm:$0xff]
    %v2703 = vld [vmem:[#allocation7 + $0xcd8] sm:$0xff]
    %v2704 = vld [vmem:[#allocation7 + $0xce0] sm:$0xff]
    %v2705 = vld [vmem:[#allocation7 + $0xce8] sm:$0xff]
    %v2706 = vld [vmem:[#allocation7 + $0xcf0] sm:$0xff]
    %v2707 = vld [vmem:[#allocation7 + $0xcf8] sm:$0xff]
    %v2708 = vld [vmem:[#allocation7 + $0xd00] sm:$0xff]
    %v2709 = vld [vmem:[#allocation7 + $0xd08] sm:$0xff]
    %v2710 = vld [vmem:[#allocation7 + $0xd10] sm:$0xff]
    %v2711 = vld [vmem:[#allocation7 + $0xd18] sm:$0xff]
    %v2712 = vld [vmem:[#allocation7 + $0xd20] sm:$0xff]
    %v2713 = vld [vmem:[#allocation7 + $0xd28] sm:$0xff]
    %v2714 = vld [vmem:[#allocation7 + $0xd30] sm:$0xff]
    %v2715 = vld [vmem:[#allocation7 + $0xd38] sm:$0xff]
    %v2716 = vld [vmem:[#allocation7 + $0xd40] sm:$0xff]
    %v2717 = vld [vmem:[#allocation7 + $0xd48] sm:$0xff]
    %v2718 = vld [vmem:[#allocation7 + $0xd50] sm:$0xff]
    %v2719 = vld [vmem:[#allocation7 + $0xd58] sm:$0xff]
    %v2720 = vld [vmem:[#allocation7 + $0xd60] sm:$0xff]
    %v2721 = vld [vmem:[#allocation7 + $0xd68] sm:$0xff]
    %v2722 = vld [vmem:[#allocation7 + $0xd70] sm:$0xff]
    %v2723 = vld [vmem:[#allocation7 + $0xd78] sm:$0xff]
    %v2730 = vunpack.c.l.b16 %v311
    %v2731 = vunpack.c.l.b16 %v312
    %v2732 = vunpack.c.l.b16 %v313
    %v2733 = vunpack.c.l.b16 %v314
    %v2734 = vunpack.c.l.b16 %v315
    %v2735 = vunpack.c.l.b16 %v316
    %v2736 = vsel %vm617, %v2733, %v2730
    %v2737 = vsel %vm617, %v2734, %v2731
    %v2738 = vsel %vm617, %v2735, %v2732
    %v2739 = vpack.c.b16 %v2736, %v2736
    %v2740 = vpack.c.b16 %v2737, %v2737
    %v2741 = vpack.c.b16 %v2738, %v2738
    %v2889 = vunpack.c.l.b16 %v2580
    %v2890 = vunpack.c.h.b16 %v2580
    %v2891 = vunpack.c.l.b16 %v2581
    %v2892 = vunpack.c.h.b16 %v2581
    %v2893 = vunpack.c.l.b16 %v2582
    %v2894 = vunpack.c.h.b16 %v2582
    %v2895 = vunpack.c.l.b16 %v2583
    %v2896 = vunpack.c.h.b16 %v2583
    %v2897 = vunpack.c.l.b16 %v2584
    %v2898 = vunpack.c.h.b16 %v2584
    %v2899 = vunpack.c.l.b16 %v2585
    %v2900 = vunpack.c.h.b16 %v2585
    %v2901 = vunpack.c.l.b16 %v2586
    %v2902 = vunpack.c.h.b16 %v2586
    %v2903 = vunpack.c.l.b16 %v2587
    %v2904 = vunpack.c.h.b16 %v2587
    %v2905 = vunpack.c.l.b16 %v2588
    %v2906 = vunpack.c.h.b16 %v2588
    %v2907 = vunpack.c.l.b16 %v2589
    %v2908 = vunpack.c.h.b16 %v2589
    %v2909 = vunpack.c.l.b16 %v2590
    %v2910 = vunpack.c.h.b16 %v2590
    %v2911 = vunpack.c.l.b16 %v2591
    %v2912 = vunpack.c.h.b16 %v2591
    %v2913 = vunpack.c.l.b16 %v2592
    %v2914 = vunpack.c.h.b16 %v2592
    %v2915 = vunpack.c.l.b16 %v2593
    %v2916 = vunpack.c.h.b16 %v2593
    %v2917 = vunpack.c.l.b16 %v2594
    %v2918 = vunpack.c.h.b16 %v2594
    %v2919 = vunpack.c.l.b16 %v2595
    %v2920 = vunpack.c.h.b16 %v2595
    %v2921 = vunpack.c.l.b16 %v2596
    %v2922 = vunpack.c.h.b16 %v2596
    %v2923 = vunpack.c.l.b16 %v2597
    %v2924 = vunpack.c.h.b16 %v2597
    %v2925 = vunpack.c.l.b16 %v2598
    %v2926 = vunpack.c.h.b16 %v2598
    %v2927 = vunpack.c.l.b16 %v2599
    %v2928 = vunpack.c.h.b16 %v2599
    %v2929 = vunpack.c.l.b16 %v2600
    %v2930 = vunpack.c.h.b16 %v2600
    %v2931 = vunpack.c.l.b16 %v2601
    %v2932 = vunpack.c.h.b16 %v2601
    %v2933 = vunpack.c.l.b16 %v2602
    %v2934 = vunpack.c.h.b16 %v2602
    %v2935 = vunpack.c.l.b16 %v2603
    %v2936 = vunpack.c.h.b16 %v2603
    %v2937 = vunpack.c.l.b16 %v2604
    %v2938 = vunpack.c.h.b16 %v2604
    %v2939 = vunpack.c.l.b16 %v2605
    %v2940 = vunpack.c.h.b16 %v2605
    %v2941 = vunpack.c.l.b16 %v2606
    %v2942 = vunpack.c.h.b16 %v2606
    %v2943 = vunpack.c.l.b16 %v2607
    %v2944 = vunpack.c.h.b16 %v2607
    %v2945 = vunpack.c.l.b16 %v2608
    %v2946 = vunpack.c.h.b16 %v2608
    %v2947 = vunpack.c.l.b16 %v2609
    %v2948 = vunpack.c.h.b16 %v2609
    %v2949 = vunpack.c.l.b16 %v2610
    %v2950 = vunpack.c.h.b16 %v2610
    %v2951 = vunpack.c.l.b16 %v2611
    %v2952 = vunpack.c.h.b16 %v2611
    %v2953 = vunpack.c.l.b16 %v2612
    %v2954 = vunpack.c.h.b16 %v2612
    %v2955 = vunpack.c.l.b16 %v2613
    %v2956 = vunpack.c.h.b16 %v2613
    %v2957 = vunpack.c.l.b16 %v2614
    %v2958 = vunpack.c.h.b16 %v2614
    %v2959 = vunpack.c.l.b16 %v2615
    %v2960 = vunpack.c.h.b16 %v2615
    %v2961 = vunpack.c.l.b16 %v2616
    %v2962 = vunpack.c.h.b16 %v2616
    %v2963 = vunpack.c.l.b16 %v2617
    %v2964 = vunpack.c.h.b16 %v2617
    %v2965 = vunpack.c.l.b16 %v2618
    %v2966 = vunpack.c.h.b16 %v2618
    %v2967 = vunpack.c.l.b16 %v2619
    %v2968 = vunpack.c.h.b16 %v2619
    %v2969 = vunpack.c.l.b16 %v2620
    %v2970 = vunpack.c.h.b16 %v2620
    %v2971 = vunpack.c.l.b16 %v2621
    %v2972 = vunpack.c.h.b16 %v2621
    %v2973 = vunpack.c.l.b16 %v2622
    %v2974 = vunpack.c.h.b16 %v2622
    %v2975 = vunpack.c.l.b16 %v2623
    %v2976 = vunpack.c.h.b16 %v2623
    %v2977 = vunpack.c.l.b16 %v2624
    %v2978 = vunpack.c.h.b16 %v2624
    %v2979 = vunpack.c.l.b16 %v2625
    %v2980 = vunpack.c.h.b16 %v2625
    %v2981 = vunpack.c.l.b16 %v2626
    %v2982 = vunpack.c.h.b16 %v2626
    %v2983 = vunpack.c.l.b16 %v2627
    %v2984 = vunpack.c.h.b16 %v2627
    %v2985 = vunpack.c.l.b16 %v2628
    %v2986 = vunpack.c.h.b16 %v2628
    %v2987 = vunpack.c.l.b16 %v2629
    %v2988 = vunpack.c.h.b16 %v2629
    %v2989 = vunpack.c.l.b16 %v2630
    %v2990 = vunpack.c.h.b16 %v2630
    %v2991 = vunpack.c.l.b16 %v2631
    %v2992 = vunpack.c.h.b16 %v2631
    %v2993 = vunpack.c.l.b16 %v2632
    %v2994 = vunpack.c.h.b16 %v2632
    %v2995 = vunpack.c.l.b16 %v2633
    %v2996 = vunpack.c.h.b16 %v2633
    %v2997 = vunpack.c.l.b16 %v2634
    %v2998 = vunpack.c.h.b16 %v2634
    %v2999 = vunpack.c.l.b16 %v2635
    %v3000 = vunpack.c.h.b16 %v2635
    %v3001 = vunpack.c.l.b16 %v2636
    %v3002 = vunpack.c.h.b16 %v2636
    %v3003 = vunpack.c.l.b16 %v2637
    %v3004 = vunpack.c.h.b16 %v2637
    %v3005 = vunpack.c.l.b16 %v2638
    %v3006 = vunpack.c.h.b16 %v2638
    %v3007 = vunpack.c.l.b16 %v2639
    %v3008 = vunpack.c.h.b16 %v2639
    %v3009 = vunpack.c.l.b16 %v2640
    %v3010 = vunpack.c.h.b16 %v2640
    %v3011 = vunpack.c.l.b16 %v2641
    %v3012 = vunpack.c.h.b16 %v2641
    %v3013 = vunpack.c.l.b16 %v2642
    %v3014 = vunpack.c.h.b16 %v2642
    %v3015 = vunpack.c.l.b16 %v2643
    %v3016 = vunpack.c.h.b16 %v2643
    %v3017 = vunpack.c.l.b16 %v2644
    %v3018 = vunpack.c.h.b16 %v2644
    %v3019 = vunpack.c.l.b16 %v2645
    %v3020 = vunpack.c.h.b16 %v2645
    %v3021 = vunpack.c.l.b16 %v2646
    %v3022 = vunpack.c.h.b16 %v2646
    %v3023 = vunpack.c.l.b16 %v2647
    %v3024 = vunpack.c.h.b16 %v2647
    %v3025 = vunpack.c.l.b16 %v2648
    %v3026 = vunpack.c.h.b16 %v2648
    %v3027 = vunpack.c.l.b16 %v2649
    %v3028 = vunpack.c.h.b16 %v2649
    %v3029 = vunpack.c.l.b16 %v2650
    %v3030 = vunpack.c.h.b16 %v2650
    %v3031 = vunpack.c.l.b16 %v2651
    %v3032 = vunpack.c.h.b16 %v2651
    %v3033 = vunpack.c.l.b16 %v2652
    %v3034 = vunpack.c.h.b16 %v2652
    %v3035 = vunpack.c.l.b16 %v2653
    %v3036 = vunpack.c.h.b16 %v2653
    %v3037 = vunpack.c.l.b16 %v2654
    %v3038 = vunpack.c.h.b16 %v2654
    %v3039 = vunpack.c.l.b16 %v2655
    %v3040 = vunpack.c.h.b16 %v2655
    %v3041 = vunpack.c.l.b16 %v2656
    %v3042 = vunpack.c.h.b16 %v2656
    %v3043 = vunpack.c.l.b16 %v2657
    %v3044 = vunpack.c.h.b16 %v2657
    %v3045 = vunpack.c.l.b16 %v2658
    %v3046 = vunpack.c.h.b16 %v2658
    %v3047 = vunpack.c.l.b16 %v2659
    %v3048 = vunpack.c.h.b16 %v2659
    %v3049 = vunpack.c.l.b16 %v2660
    %v3050 = vunpack.c.h.b16 %v2660
    %v3051 = vunpack.c.l.b16 %v2661
    %v3052 = vunpack.c.h.b16 %v2661
    %v3053 = vunpack.c.l.b16 %v2662
    %v3054 = vunpack.c.h.b16 %v2662
    %v3055 = vunpack.c.l.b16 %v2663
    %v3056 = vunpack.c.h.b16 %v2663
    %v3057 = vunpack.c.l.b16 %v2664
    %v3058 = vunpack.c.h.b16 %v2664
    %v3059 = vunpack.c.l.b16 %v2665
    %v3060 = vunpack.c.h.b16 %v2665
    %v3061 = vunpack.c.l.b16 %v2666
    %v3062 = vunpack.c.h.b16 %v2666
    %v3063 = vunpack.c.l.b16 %v2667
    %v3064 = vunpack.c.h.b16 %v2667
    %v3065 = vunpack.c.l.b16 %v2668
    %v3066 = vunpack.c.h.b16 %v2668
    %v3067 = vunpack.c.l.b16 %v2669
    %v3068 = vunpack.c.h.b16 %v2669
    %v3069 = vunpack.c.l.b16 %v2670
    %v3070 = vunpack.c.h.b16 %v2670
    %v3071 = vunpack.c.l.b16 %v2671
    %v3072 = vunpack.c.h.b16 %v2671
    %v3073 = vunpack.c.l.b16 %v2672
    %v3074 = vunpack.c.h.b16 %v2672
    %v3075 = vunpack.c.l.b16 %v2673
    %v3076 = vunpack.c.h.b16 %v2673
    %v3077 = vunpack.c.l.b16 %v2674
    %v3078 = vunpack.c.h.b16 %v2674
    %v3079 = vunpack.c.l.b16 %v2675
    %v3080 = vunpack.c.h.b16 %v2675
    %v3081 = vunpack.c.l.b16 %v2676
    %v3082 = vunpack.c.h.b16 %v2676
    %v3083 = vunpack.c.l.b16 %v2677
    %v3084 = vunpack.c.h.b16 %v2677
    %v3085 = vunpack.c.l.b16 %v2678
    %v3086 = vunpack.c.h.b16 %v2678
    %v3087 = vunpack.c.l.b16 %v2679
    %v3088 = vunpack.c.h.b16 %v2679
    %v3089 = vunpack.c.l.b16 %v2680
    %v3090 = vunpack.c.h.b16 %v2680
    %v3091 = vunpack.c.l.b16 %v2681
    %v3092 = vunpack.c.h.b16 %v2681
    %v3093 = vunpack.c.l.b16 %v2682
    %v3094 = vunpack.c.h.b16 %v2682
    %v3095 = vunpack.c.l.b16 %v2683
    %v3096 = vunpack.c.h.b16 %v2683
    %v3097 = vunpack.c.l.b16 %v2684
    %v3098 = vunpack.c.h.b16 %v2684
    %v3099 = vunpack.c.l.b16 %v2685
    %v3100 = vunpack.c.h.b16 %v2685
    %v3101 = vunpack.c.l.b16 %v2686
    %v3102 = vunpack.c.h.b16 %v2686
    %v3103 = vunpack.c.l.b16 %v2687
    %v3104 = vunpack.c.h.b16 %v2687
    %v3105 = vunpack.c.l.b16 %v2688
    %v3106 = vunpack.c.h.b16 %v2688
    %v3107 = vunpack.c.l.b16 %v2689
    %v3108 = vunpack.c.h.b16 %v2689
    %v3109 = vunpack.c.l.b16 %v2690
    %v3110 = vunpack.c.h.b16 %v2690
    %v3111 = vunpack.c.l.b16 %v2691
    %v3112 = vunpack.c.h.b16 %v2691
    %v3113 = vunpack.c.l.b16 %v2692
    %v3114 = vunpack.c.h.b16 %v2692
    %v3115 = vunpack.c.l.b16 %v2693
    %v3116 = vunpack.c.h.b16 %v2693
    %v3117 = vunpack.c.l.b16 %v2694
    %v3118 = vunpack.c.h.b16 %v2694
    %v3119 = vunpack.c.l.b16 %v2695
    %v3120 = vunpack.c.h.b16 %v2695
    %v3121 = vunpack.c.l.b16 %v2696
    %v3122 = vunpack.c.h.b16 %v2696
    %v3123 = vunpack.c.l.b16 %v2697
    %v3124 = vunpack.c.h.b16 %v2697
    %v3125 = vunpack.c.l.b16 %v2698
    %v3126 = vunpack.c.h.b16 %v2698
    %v3127 = vunpack.c.l.b16 %v2699
    %v3128 = vunpack.c.h.b16 %v2699
    %v3129 = vunpack.c.l.b16 %v2700
    %v3130 = vunpack.c.h.b16 %v2700
    %v3131 = vunpack.c.l.b16 %v2701
    %v3132 = vunpack.c.h.b16 %v2701
    %v3133 = vunpack.c.l.b16 %v2702
    %v3134 = vunpack.c.h.b16 %v2702
    %v3135 = vunpack.c.l.b16 %v2703
    %v3136 = vunpack.c.h.b16 %v2703
    %v3137 = vunpack.c.l.b16 %v2704
    %v3138 = vunpack.c.h.b16 %v2704
    %v3139 = vunpack.c.l.b16 %v2705
    %v3140 = vunpack.c.h.b16 %v2705
    %v3141 = vunpack.c.l.b16 %v2706
    %v3142 = vunpack.c.h.b16 %v2706
    %v3143 = vunpack.c.l.b16 %v2707
    %v3144 = vunpack.c.h.b16 %v2707
    %v3145 = vunpack.c.l.b16 %v2708
    %v3146 = vunpack.c.h.b16 %v2708
    %v3147 = vunpack.c.l.b16 %v2709
    %v3148 = vunpack.c.h.b16 %v2709
    %v3149 = vunpack.c.l.b16 %v2710
    %v3150 = vunpack.c.h.b16 %v2710
    %v3151 = vunpack.c.l.b16 %v2711
    %v3152 = vunpack.c.h.b16 %v2711
    %v3153 = vunpack.c.l.b16 %v2712
    %v3154 = vunpack.c.h.b16 %v2712
    %v3155 = vunpack.c.l.b16 %v2713
    %v3156 = vunpack.c.h.b16 %v2713
    %v3157 = vunpack.c.l.b16 %v2714
    %v3158 = vunpack.c.h.b16 %v2714
    %v3159 = vunpack.c.l.b16 %v2715
    %v3160 = vunpack.c.h.b16 %v2715
    %v3161 = vunpack.c.l.b16 %v2716
    %v3162 = vunpack.c.h.b16 %v2716
    %v3163 = vunpack.c.l.b16 %v2717
    %v3164 = vunpack.c.h.b16 %v2717
    %v3165 = vunpack.c.l.b16 %v2718
    %v3166 = vunpack.c.h.b16 %v2718
    %v3167 = vunpack.c.l.b16 %v2719
    %v3168 = vunpack.c.h.b16 %v2719
    %v3169 = vunpack.c.l.b16 %v2720
    %v3170 = vunpack.c.h.b16 %v2720
    %v3171 = vunpack.c.l.b16 %v2721
    %v3172 = vunpack.c.h.b16 %v2721
    %v3173 = vunpack.c.l.b16 %v2722
    %v3174 = vunpack.c.h.b16 %v2722
    %v3175 = vunpack.c.l.b16 %v2723
    %v3176 = vunpack.c.h.b16 %v2723
    %v3177 = vpack.c.b16 %v2895, %v2889
    %v3178 = vpack.c.b16 %v2896, %v2890
    %v3179 = vpack.c.b16 %v2897, %v2891
    %v3180 = vpack.c.b16 %v2898, %v2892
    %v3181 = vpack.c.b16 %v2899, %v2893
    %v3182 = vpack.c.b16 %v2900, %v2894
    %v3183 = vpack.c.b16 %v2907, %v2901
    %v3184 = vpack.c.b16 %v2908, %v2902
    %v3185 = vpack.c.b16 %v2909, %v2903
    %v3186 = vpack.c.b16 %v2910, %v2904
    %v3187 = vpack.c.b16 %v2911, %v2905
    %v3188 = vpack.c.b16 %v2912, %v2906
    %v3189 = vpack.c.b16 %v2919, %v2913
    %v3190 = vpack.c.b16 %v2920, %v2914
    %v3191 = vpack.c.b16 %v2921, %v2915
    %v3192 = vpack.c.b16 %v2922, %v2916
    %v3193 = vpack.c.b16 %v2923, %v2917
    %v3194 = vpack.c.b16 %v2924, %v2918
    %v3195 = vpack.c.b16 %v2931, %v2925
    %v3196 = vpack.c.b16 %v2932, %v2926
    %v3197 = vpack.c.b16 %v2933, %v2927
    %v3198 = vpack.c.b16 %v2934, %v2928
    %v3199 = vpack.c.b16 %v2935, %v2929
    %v3200 = vpack.c.b16 %v2936, %v2930
    %v3201 = vpack.c.b16 %v2943, %v2937
    %v3202 = vpack.c.b16 %v2944, %v2938
    %v3203 = vpack.c.b16 %v2945, %v2939
    %v3204 = vpack.c.b16 %v2946, %v2940
    %v3205 = vpack.c.b16 %v2947, %v2941
    %v3206 = vpack.c.b16 %v2948, %v2942
    %v3207 = vpack.c.b16 %v2955, %v2949
    %v3208 = vpack.c.b16 %v2956, %v2950
    %v3209 = vpack.c.b16 %v2957, %v2951
    %v3210 = vpack.c.b16 %v2958, %v2952
    %v3211 = vpack.c.b16 %v2959, %v2953
    %v3212 = vpack.c.b16 %v2960, %v2954
    %v3213 = vpack.c.b16 %v2967, %v2961
    %v3214 = vpack.c.b16 %v2968, %v2962
    %v3215 = vpack.c.b16 %v2969, %v2963
    %v3216 = vpack.c.b16 %v2970, %v2964
    %v3217 = vpack.c.b16 %v2971, %v2965
    %v3218 = vpack.c.b16 %v2972, %v2966
    %v3219 = vpack.c.b16 %v2979, %v2973
    %v3220 = vpack.c.b16 %v2980, %v2974
    %v3221 = vpack.c.b16 %v2981, %v2975
    %v3222 = vpack.c.b16 %v2982, %v2976
    %v3223 = vpack.c.b16 %v2983, %v2977
    %v3224 = vpack.c.b16 %v2984, %v2978
    %v3225 = vpack.c.b16 %v2991, %v2985
    %v3226 = vpack.c.b16 %v2992, %v2986
    %v3227 = vpack.c.b16 %v2993, %v2987
    %v3228 = vpack.c.b16 %v2994, %v2988
    %v3229 = vpack.c.b16 %v2995, %v2989
    %v3230 = vpack.c.b16 %v2996, %v2990
    %v3231 = vpack.c.b16 %v3003, %v2997
    %v3232 = vpack.c.b16 %v3004, %v2998
    %v3233 = vpack.c.b16 %v3005, %v2999
    %v3234 = vpack.c.b16 %v3006, %v3000
    %v3235 = vpack.c.b16 %v3007, %v3001
    %v3236 = vpack.c.b16 %v3008, %v3002
    %v3237 = vpack.c.b16 %v3015, %v3009
    %v3238 = vpack.c.b16 %v3016, %v3010
    %v3239 = vpack.c.b16 %v3017, %v3011
    %v3240 = vpack.c.b16 %v3018, %v3012
    %v3241 = vpack.c.b16 %v3019, %v3013
    %v3242 = vpack.c.b16 %v3020, %v3014
    %v3243 = vpack.c.b16 %v3027, %v3021
    %v3244 = vpack.c.b16 %v3028, %v3022
    %v3245 = vpack.c.b16 %v3029, %v3023
    %v3246 = vpack.c.b16 %v3030, %v3024
    %v3247 = vpack.c.b16 %v3031, %v3025
    %v3248 = vpack.c.b16 %v3032, %v3026
    %v3249 = vpack.c.b16 %v3039, %v3033
    %v3250 = vpack.c.b16 %v3040, %v3034
    %v3251 = vpack.c.b16 %v3041, %v3035
    %v3252 = vpack.c.b16 %v3042, %v3036
    %v3253 = vpack.c.b16 %v3043, %v3037
    %v3254 = vpack.c.b16 %v3044, %v3038
    %v3255 = vpack.c.b16 %v3051, %v3045
    %v3256 = vpack.c.b16 %v3052, %v3046
    %v3257 = vpack.c.b16 %v3053, %v3047
    %v3258 = vpack.c.b16 %v3054, %v3048
    %v3259 = vpack.c.b16 %v3055, %v3049
    %v3260 = vpack.c.b16 %v3056, %v3050
    %v3261 = vpack.c.b16 %v3063, %v3057
    %v3262 = vpack.c.b16 %v3064, %v3058
    %v3263 = vpack.c.b16 %v3065, %v3059
    %v3264 = vpack.c.b16 %v3066, %v3060
    %v3265 = vpack.c.b16 %v3067, %v3061
    %v3266 = vpack.c.b16 %v3068, %v3062
    %v3267 = vpack.c.b16 %v3075, %v3069
    %v3268 = vpack.c.b16 %v3076, %v3070
    %v3269 = vpack.c.b16 %v3077, %v3071
    %v3270 = vpack.c.b16 %v3078, %v3072
    %v3271 = vpack.c.b16 %v3079, %v3073
    %v3272 = vpack.c.b16 %v3080, %v3074
    %v3273 = vpack.c.b16 %v3087, %v3081
    %v3274 = vpack.c.b16 %v3088, %v3082
    %v3275 = vpack.c.b16 %v3089, %v3083
    %v3276 = vpack.c.b16 %v3090, %v3084
    %v3277 = vpack.c.b16 %v3091, %v3085
    %v3278 = vpack.c.b16 %v3092, %v3086
    %v3279 = vpack.c.b16 %v3099, %v3093
    %v3280 = vpack.c.b16 %v3100, %v3094
    %v3281 = vpack.c.b16 %v3101, %v3095
    %v3282 = vpack.c.b16 %v3102, %v3096
    %v3283 = vpack.c.b16 %v3103, %v3097
    %v3284 = vpack.c.b16 %v3104, %v3098
    %v3285 = vpack.c.b16 %v3111, %v3105
    %v3286 = vpack.c.b16 %v3112, %v3106
    %v3287 = vpack.c.b16 %v3113, %v3107
    %v3288 = vpack.c.b16 %v3114, %v3108
    %v3289 = vpack.c.b16 %v3115, %v3109
    %v3290 = vpack.c.b16 %v3116, %v3110
    %v3291 = vpack.c.b16 %v3123, %v3117
    %v3292 = vpack.c.b16 %v3124, %v3118
    %v3293 = vpack.c.b16 %v3125, %v3119
    %v3294 = vpack.c.b16 %v3126, %v3120
    %v3295 = vpack.c.b16 %v3127, %v3121
    %v3296 = vpack.c.b16 %v3128, %v3122
    %v3297 = vpack.c.b16 %v3135, %v3129
    %v3298 = vpack.c.b16 %v3136, %v3130
    %v3299 = vpack.c.b16 %v3137, %v3131
    %v3300 = vpack.c.b16 %v3138, %v3132
    %v3301 = vpack.c.b16 %v3139, %v3133
    %v3302 = vpack.c.b16 %v3140, %v3134
    %v3303 = vpack.c.b16 %v3147, %v3141
    %v3304 = vpack.c.b16 %v3148, %v3142
    %v3305 = vpack.c.b16 %v3149, %v3143
    %v3306 = vpack.c.b16 %v3150, %v3144
    %v3307 = vpack.c.b16 %v3151, %v3145
    %v3308 = vpack.c.b16 %v3152, %v3146
    %v3309 = vpack.c.b16 %v3159, %v3153
    %v3310 = vpack.c.b16 %v3160, %v3154
    %v3311 = vpack.c.b16 %v3161, %v3155
    %v3312 = vpack.c.b16 %v3162, %v3156
    %v3313 = vpack.c.b16 %v3163, %v3157
    %v3314 = vpack.c.b16 %v3164, %v3158
    %v3315 = vpack.c.b16 %v3171, %v3165
    %v3316 = vpack.c.b16 %v3172, %v3166
    %v3317 = vpack.c.b16 %v3173, %v3167
    %v3318 = vpack.c.b16 %v3174, %v3168
    %v3319 = vpack.c.b16 %v3175, %v3169
    %v3320 = vpack.c.b16 %v3176, %v3170
    %3465 = vmatprep.subr.bf16.mxu0 %v3178
    %3466 = vmatpush1.bf16.msra.mxu0 %v3177
    %3467 = vmatprep.subr.bf16.mxu0 %v3184
    %3468 = vmatpush1.bf16.msra.mxu0 %v3183
    %3469 = vmatprep.subr.bf16.mxu0 %v3190
    %3470 = vmatpush1.bf16.msra.mxu0 %v3189
    %3471 = vmatprep.subr.bf16.mxu0 %v3196
    %3472 = vmatpush1.bf16.msra.mxu0 %v3195
    %3473 = vmatprep.subr.bf16.mxu0 %v3202
    %3474 = vmatpush1.bf16.msra.mxu0 %v3201
    %3475 = vmatprep.subr.bf16.mxu0 %v3208
    %3476 = vmatpush1.bf16.msra.mxu0 %v3207
    %3477 = vmatprep.subr.bf16.mxu0 %v3214
    %3478 = vmatpush1.bf16.msra.mxu0 %v3213
    %3479 = vmatprep.subr.bf16.mxu0 %v3220
    %3480 = vmatpush1.bf16.msra.mxu0 %v3219
    %3481 = vmatprep.subr.bf16.mxu0 %v3226
    %3482 = vmatpush1.bf16.msra.mxu0 %v3225
    %3483 = vmatprep.subr.bf16.mxu0 %v3232
    %3484 = vmatpush1.bf16.msra.mxu0 %v3231
    %3485 = vmatprep.subr.bf16.mxu0 %v3238
    %3486 = vmatpush1.bf16.msra.mxu0 %v3237
    %3487 = vmatprep.subr.bf16.mxu0 %v3244
    %3488 = vmatpush1.bf16.msra.mxu0 %v3243
    %3489 = vmatprep.subr.bf16.mxu0 %v3250
    %3490 = vmatpush1.bf16.msra.mxu0 %v3249
    %3491 = vmatprep.subr.bf16.mxu0 %v3256
    %3492 = vmatpush1.bf16.msra.mxu0 %v3255
    %3493 = vmatprep.subr.bf16.mxu0 %v3262
    %3494 = vmatpush1.bf16.msra.mxu0 %v3261
    %3495 = vmatprep.subr.bf16.mxu0 %v3268
    %3496 = vmatpush1.bf16.msra.mxu0 %v3267
    %3497 = vmatprep.mubr.bf16.mxu0 %v2740
    %3498 = vmatmul.mubr.bf16.gmra.mrb[0].mxu0 %v2739
    %v3499 = vpop.f32.mrb[0].mxu0
    %v3500 = vadd.f32 0.0, %v3499
    %v3501 = vpop.f32.mrb[0].mxu0
    %v3502 = vadd.f32 0.0, %v3501
    %v3503 = vpop.f32.mrb[0].mxu0
    %v3504 = vpop.f32.mrb[0].mxu0
    %3505 = vdwg.mxu0
    %3506 = vmatprep.subr.bf16.mxu0 %v3274
    %3507 = vmatpush1.bf16.msra.mxu0 %v3273
    %3508 = vmatprep.subr.bf16.mxu0 %v3280
    %3509 = vmatpush1.bf16.msra.mxu0 %v3279
    %3510 = vmatprep.subr.bf16.mxu0 %v3286
    %3511 = vmatpush1.bf16.msra.mxu0 %v3285
    %3512 = vmatprep.subr.bf16.mxu0 %v3292
    %3513 = vmatpush1.bf16.msra.mxu0 %v3291
    %3514 = vmatprep.subr.bf16.mxu0 %v3298
    %3515 = vmatpush1.bf16.msra.mxu0 %v3297
    %3516 = vmatprep.subr.bf16.mxu0 %v3304
    %3517 = vmatpush1.bf16.msra.mxu0 %v3303
    %3518 = vmatprep.subr.bf16.mxu0 %v3310
    %3519 = vmatpush1.bf16.msra.mxu0 %v3309
    %3520 = vmatprep.subr.bf16.mxu0 %v3316
    %3521 = vmatpush1.bf16.msra.mxu0 %v3315
    %3522 = vmatprep.subr.bf16.mxu0 0
    %3523 = vmatpush1.bf16.msra.mxu0 0
    %3524 = vmatprep.subr.bf16.mxu0 0
    %3525 = vmatpush1.bf16.msra.mxu0 0
    %3526 = vmatprep.subr.bf16.mxu0 0
    %3527 = vmatpush1.bf16.msra.mxu0 0
    %3528 = vmatprep.subr.bf16.mxu0 0
    %3529 = vmatpush1.bf16.msra.mxu0 0
    %3530 = vmatprep.subr.bf16.mxu0 0
    %3531 = vmatpush1.bf16.msra.mxu0 0
    %3532 = vmatprep.subr.bf16.mxu0 0
    %3533 = vmatpush1.bf16.msra.mxu0 0
    %3534 = vmatprep.subr.bf16.mxu0 0
    %3535 = vmatpush1.bf16.msra.mxu0 0
    %3536 = vmatprep.subr.bf16.mxu0 0
    %3537 = vmatpush1.bf16.msra.mxu0 0
    %3538 = vmatprep.mubr.bf16.mxu0 0
    %3539 = vmatmul.mubr.bf16.gmra.mrb[0].mxu0 %v2741
    %v3540 = vpop.f32.mrb[0].mxu0
    %v3541 = vadd.f32 %v3500, %v3540
    %v3542 = vpop.f32.mrb[0].mxu0
    %v3543 = vadd.f32 %v3502, %v3542
    %v3544 = vpop.f32.mrb[0].mxu0
    %v3545 = vpop.f32.mrb[0].mxu0
    %3546 = vdwg.mxu0
    %3547 = vmatprep.subr.bf16.mxu0 %v3180
    %3548 = vmatpush1.bf16.msra.mxu0 %v3179
    %3549 = vmatprep.subr.bf16.mxu0 %v3186
    %3550 = vmatpush1.bf16.msra.mxu0 %v3185
    %3551 = vmatprep.subr.bf16.mxu0 %v3192
    %3552 = vmatpush1.bf16.msra.mxu0 %v3191
    %3553 = vmatprep.subr.bf16.mxu0 %v3198
    %3554 = vmatpush1.bf16.msra.mxu0 %v3197
    %3555 = vmatprep.subr.bf16.mxu0 %v3204
    %3556 = vmatpush1.bf16.msra.mxu0 %v3203
    %3557 = vmatprep.subr.bf16.mxu0 %v3210
    %3558 = vmatpush1.bf16.msra.mxu0 %v3209
    %3559 = vmatprep.subr.bf16.mxu0 %v3216
    %3560 = vmatpush1.bf16.msra.mxu0 %v3215
    %3561 = vmatprep.subr.bf16.mxu0 %v3222
    %3562 = vmatpush1.bf16.msra.mxu0 %v3221
    %3563 = vmatprep.subr.bf16.mxu0 %v3228
    %3564 = vmatpush1.bf16.msra.mxu0 %v3227
    %3565 = vmatprep.subr.bf16.mxu0 %v3234
    %3566 = vmatpush1.bf16.msra.mxu0 %v3233
    %3567 = vmatprep.subr.bf16.mxu0 %v3240
    %3568 = vmatpush1.bf16.msra.mxu0 %v3239
    %3569 = vmatprep.subr.bf16.mxu0 %v3246
    %3570 = vmatpush1.bf16.msra.mxu0 %v3245
    %3571 = vmatprep.subr.bf16.mxu0 %v3252
    %3572 = vmatpush1.bf16.msra.mxu0 %v3251
    %3573 = vmatprep.subr.bf16.mxu0 %v3258
    %3574 = vmatpush1.bf16.msra.mxu0 %v3257
    %3575 = vmatprep.subr.bf16.mxu0 %v3264
    %3576 = vmatpush1.bf16.msra.mxu0 %v3263
    %3577 = vmatprep.subr.bf16.mxu0 %v3270
    %3578 = vmatpush1.bf16.msra.mxu0 %v3269
    %3579 = vmatprep.mubr.bf16.mxu0 %v2740
    %3580 = vmatmul.mubr.bf16.gmra.mrb[0].mxu0 %v2739
    %v3581 = vpop.f32.mrb[0].mxu0
    %v3582 = vadd.f32 0.0, %v3581
    %v3583 = vpop.f32.mrb[0].mxu0
    %v3584 = vadd.f32 0.0, %v3583
    %v3585 = vpop.f32.mrb[0].mxu0
    %v3586 = vpop.f32.mrb[0].mxu0
    %3587 = vdwg.mxu0
    %3588 = vmatprep.subr.bf16.mxu0 %v3276
    %3589 = vmatpush1.bf16.msra.mxu0 %v3275
    %3590 = vmatprep.subr.bf16.mxu0 %v3282
    %3591 = vmatpush1.bf16.msra.mxu0 %v3281
    %3592 = vmatprep.subr.bf16.mxu0 %v3288
    %3593 = vmatpush1.bf16.msra.mxu0 %v3287
    %3594 = vmatprep.subr.bf16.mxu0 %v3294
    %3595 = vmatpush1.bf16.msra.mxu0 %v3293
    %3596 = vmatprep.subr.bf16.mxu0 %v3300
    %3597 = vmatpush1.bf16.msra.mxu0 %v3299
    %3598 = vmatprep.subr.bf16.mxu0 %v3306
    %3599 = vmatpush1.bf16.msra.mxu0 %v3305
    %3600 = vmatprep.subr.bf16.mxu0 %v3312
    %3601 = vmatpush1.bf16.msra.mxu0 %v3311
    %3602 = vmatprep.subr.bf16.mxu0 %v3318
    %3603 = vmatpush1.bf16.msra.mxu0 %v3317
    %3604 = vmatprep.subr.bf16.mxu0 0
    %3605 = vmatpush1.bf16.msra.mxu0 0
    %3606 = vmatprep.subr.bf16.mxu0 0
    %3607 = vmatpush1.bf16.msra.mxu0 0
    %3608 = vmatprep.subr.bf16.mxu0 0
    %3609 = vmatpush1.bf16.msra.mxu0 0
    %3610 = vmatprep.subr.bf16.mxu0 0
    %3611 = vmatpush1.bf16.msra.mxu0 0
    %3612 = vmatprep.subr.bf16.mxu0 0
    %3613 = vmatpush1.bf16.msra.mxu0 0
    %3614 = vmatprep.subr.bf16.mxu0 0
    %3615 = vmatpush1.bf16.msra.mxu0 0
    %3616 = vmatprep.subr.bf16.mxu0 0
    %3617 = vmatpush1.bf16.msra.mxu0 0
    %3618 = vmatprep.subr.bf16.mxu0 0
    %3619 = vmatpush1.bf16.msra.mxu0 0
    %3620 = vmatprep.mubr.bf16.mxu0 0
    %3621 = vmatmul.mubr.bf16.gmra.mrb[0].mxu0 %v2741
    %v3622 = vpop.f32.mrb[0].mxu0
    %v3623 = vadd.f32 %v3582, %v3622
    %v3624 = vpop.f32.mrb[0].mxu0
    %v3625 = vadd.f32 %v3584, %v3624
    %v3626 = vpop.f32.mrb[0].mxu0
    %v3627 = vpop.f32.mrb[0].mxu0
    %3628 = vdwg.mxu0
    %3629 = vmatprep.subr.bf16.mxu0 %v3182
    %3630 = vmatpush1.bf16.msra.mxu0 %v3181
    %3631 = vmatprep.subr.bf16.mxu0 %v3188
    %3632 = vmatpush1.bf16.msra.mxu0 %v3187
    %3633 = vmatprep.subr.bf16.mxu0 %v3194
    %3634 = vmatpush1.bf16.msra.mxu0 %v3193
    %3635 = vmatprep.subr.bf16.mxu0 %v3200
    %3636 = vmatpush1.bf16.msra.mxu0 %v3199
    %3637 = vmatprep.subr.bf16.mxu0 %v3206
    %3638 = vmatpush1.bf16.msra.mxu0 %v3205
    %3639 = vmatprep.subr.bf16.mxu0 %v3212
    %3640 = vmatpush1.bf16.msra.mxu0 %v3211
    %3641 = vmatprep.subr.bf16.mxu0 %v3218
    %3642 = vmatpush1.bf16.msra.mxu0 %v3217
    %3643 = vmatprep.subr.bf16.mxu0 %v3224
    %3644 = vmatpush1.bf16.msra.mxu0 %v3223
    %3645 = vmatprep.subr.bf16.mxu0 %v3230
    %3646 = vmatpush1.bf16.msra.mxu0 %v3229
    %3647 = vmatprep.subr.bf16.mxu0 %v3236
    %3648 = vmatpush1.bf16.msra.mxu0 %v3235
    %3649 = vmatprep.subr.bf16.mxu0 %v3242
    %3650 = vmatpush1.bf16.msra.mxu0 %v3241
    %3651 = vmatprep.subr.bf16.mxu0 %v3248
    %3652 = vmatpush1.bf16.msra.mxu0 %v3247
    %3653 = vmatprep.subr.bf16.mxu0 %v3254
    %3654 = vmatpush1.bf16.msra.mxu0 %v3253
    %3655 = vmatprep.subr.bf16.mxu0 %v3260
    %3656 = vmatpush1.bf16.msra.mxu0 %v3259
    %3657 = vmatprep.subr.bf16.mxu0 %v3266
    %3658 = vmatpush1.bf16.msra.mxu0 %v3265
    %3659 = vmatprep.subr.bf16.mxu0 %v3272
    %3660 = vmatpush1.bf16.msra.mxu0 %v3271
    %3661 = vmatprep.mubr.bf16.mxu0 %v2740
    %3662 = vmatmul.mubr.bf16.gmra.mrb[0].mxu0 %v2739
    %v3663 = vpop.f32.mrb[0].mxu0
    %v3664 = vadd.f32 0.0, %v3663
    %v3665 = vpop.f32.mrb[0].mxu0
    %v3666 = vadd.f32 0.0, %v3665
    %v3667 = vpop.f32.mrb[0].mxu0
    %v3668 = vpop.f32.mrb[0].mxu0
    %3669 = vdwg.mxu0
    %3670 = vmatprep.subr.bf16.mxu0 %v3278
    %3671 = vmatpush1.bf16.msra.mxu0 %v3277
    %3672 = vmatprep.subr.bf16.mxu0 %v3284
    %3673 = vmatpush1.bf16.msra.mxu0 %v3283
    %3674 = vmatprep.subr.bf16.mxu0 %v3290
    %3675 = vmatpush1.bf16.msra.mxu0 %v3289
    %3676 = vmatprep.subr.bf16.mxu0 %v3296
    %3677 = vmatpush1.bf16.msra.mxu0 %v3295
    %3678 = vmatprep.subr.bf16.mxu0 %v3302
    %3679 = vmatpush1.bf16.msra.mxu0 %v3301
    %3680 = vmatprep.subr.bf16.mxu0 %v3308
    %3681 = vmatpush1.bf16.msra.mxu0 %v3307
    %3682 = vmatprep.subr.bf16.mxu0 %v3314
    %3683 = vmatpush1.bf16.msra.mxu0 %v3313
    %3684 = vmatprep.subr.bf16.mxu0 %v3320
    %3685 = vmatpush1.bf16.msra.mxu0 %v3319
    %3686 = vmatprep.subr.bf16.mxu0 0
    %3687 = vmatpush1.bf16.msra.mxu0 0
    %3688 = vmatprep.subr.bf16.mxu0 0
    %3689 = vmatpush1.bf16.msra.mxu0 0
    %3690 = vmatprep.subr.bf16.mxu0 0
    %3691 = vmatpush1.bf16.msra.mxu0 0
    %3692 = vmatprep.subr.bf16.mxu0 0
    %3693 = vmatpush1.bf16.msra.mxu0 0
    %3694 = vmatprep.subr.bf16.mxu0 0
    %3695 = vmatpush1.bf16.msra.mxu0 0
    %3696 = vmatprep.subr.bf16.mxu0 0
    %3697 = vmatpush1.bf16.msra.mxu0 0
    %3698 = vmatprep.subr.bf16.mxu0 0
    %3699 = vmatpush1.bf16.msra.mxu0 0
    %3700 = vmatprep.subr.bf16.mxu0 0
    %3701 = vmatpush1.bf16.msra.mxu0 0
    %3702 = vmatprep.mubr.bf16.mxu0 0
    %3703 = vmatmul.mubr.bf16.gmra.mrb[0].mxu0 %v2741
    %v3704 = vpop.f32.mrb[0].mxu0
    %v3705 = vadd.f32 %v3664, %v3704
    %v3706 = vpop.f32.mrb[0].mxu0
    %v3707 = vadd.f32 %v3666, %v3706
    %v3708 = vpop.f32.mrb[0].mxu0
    %v3709 = vpop.f32.mrb[0].mxu0
    %3710 = vdwg.mxu0
    %v3711 = vadd.f32 %v2410, %v3541
    %v3712 = vadd.f32 %v2412, %v3543
    %v3713 = vadd.f32 %v2492, %v3623
    %v3714 = vadd.f32 %v2494, %v3625
    %v3715 = vadd.f32 %v2574, %v3705
    %v3716 = vadd.f32 %v2576, %v3707
    %v3717 = vld [vmem:[#allocation8] sm:$0x3f]
    %v3719 = vlaneseq
    %v3720 = vshrl.u32 %v3719, 7
    %v3721 = vsub.s32 0, %v3720
    %v3722 = vrot.slane %v3717, %v3721
    %v3723 = vlaneseq
    %v3724 = vshrl.u32 %v3723, 7
    %v3725 = vsub.s32 1, %v3724
    %v3726 = vrot.slane %v3717, %v3725
    %v3727 = vlaneseq
    %v3728 = vshrl.u32 %v3727, 7
    %v3729 = vsub.s32 2, %v3728
    %v3730 = vrot.slane %v3717, %v3729
    %v3731 = vlaneseq
    %v3732 = vshrl.u32 %v3731, 7
    %v3733 = vsub.s32 3, %v3732
    %v3734 = vrot.slane %v3717, %v3733
    %v3735 = vlaneseq
    %v3736 = vshrl.u32 %v3735, 7
    %v3737 = vsub.s32 4, %v3736
    %v3738 = vrot.slane %v3717, %v3737
    %v3739 = vlaneseq
    %v3740 = vshrl.u32 %v3739, 7
    %v3741 = vsub.s32 5, %v3740
    %v3742 = vrot.slane %v3717, %v3741
    %v3749 = vadd.f32 %v3711, %v3722
    %v3750 = vadd.f32 %v3712, %v3726
    %v3751 = vadd.f32 %v3713, %v3730
    %v3752 = vadd.f32 %v3714, %v3734
    %v3753 = vadd.f32 %v3715, %v3738
    %v3754 = vadd.f32 %v3716, %v3742
    %v3755 = vmax.f32 %v3749, 0.0
    %v3756 = vmax.f32 %v3750, 0.0
    %v3757 = vmax.f32 %v3751, 0.0
    %v3758 = vmax.f32 %v3752, 0.0
    %v3759 = vmax.f32 %v3753, 0.0
    %v3760 = vmax.f32 %v3754, 0.0
    %v3761 = vld [vmem:[#allocation10] sm:$0x3f]
    %v3763 = vlaneseq
    %v3764 = vshrl.u32 %v3763, 7
    %v3765 = vsub.s32 0, %v3764
    %v3766 = vrot.slane %v3761, %v3765
    %v3767 = vlaneseq
    %v3768 = vshrl.u32 %v3767, 7
    %v3769 = vsub.s32 1, %v3768
    %v3770 = vrot.slane %v3761, %v3769
    %v3771 = vlaneseq
    %v3772 = vshrl.u32 %v3771, 7
    %v3773 = vsub.s32 2, %v3772
    %v3774 = vrot.slane %v3761, %v3773
    %v3775 = vlaneseq
    %v3776 = vshrl.u32 %v3775, 7
    %v3777 = vsub.s32 3, %v3776
    %v3778 = vrot.slane %v3761, %v3777
    %v3779 = vlaneseq
    %v3780 = vshrl.u32 %v3779, 7
    %v3781 = vsub.s32 4, %v3780
    %v3782 = vrot.slane %v3761, %v3781
    %v3783 = vlaneseq
    %v3784 = vshrl.u32 %v3783, 7
    %v3785 = vsub.s32 5, %v3784
    %v3786 = vrot.slane %v3761, %v3785
    %v3793 = vmul.f32 %v3755, %v3766
    %v3794 = vmul.f32 %v3756, %v3770
    %v3795 = vmul.f32 %v3757, %v3774
    %v3796 = vmul.f32 %v3758, %v3778
    %v3797 = vmul.f32 %v3759, %v3782
    %v3798 = vmul.f32 %v3760, %v3786
    %vm3799 = vcmask 1041408
    %v3800 = vsel %vm3799, %v3793, 0.0
    %v3801 = vsel %vm3799, %v3794, 0.0
    %v3802 = vadd.f32 %v3800, %v3801
    %v3803 = vsel %vm3799, %v3795, 0.0
    %v3804 = vadd.f32 %v3802, %v3803
    %v3805 = vsel %vm3799, %v3796, 0.0
    %v3806 = vadd.f32 %v3804, %v3805
    %v3807 = vsel %vm3799, %v3797, 0.0
    %v3808 = vadd.f32 %v3806, %v3807
    %v3809 = vsel %vm3799, %v3798, 0.0
    %v3810 = vadd.f32 %v3808, %v3809
    %3811 = vadd.xlane.f32.xlu0 %v3810
    %v3812 = vpop.xlane.xlu0 %3811
    %v3813 = vld [vmem:[#allocation2] sm:$0x1]
    %v3815 = vlaneseq
    %v3816 = vshrl.u32 %v3815, 7
    %v3817 = vsub.s32 0, %v3816
    %v3818 = vrot.slane %v3813, %v3817
    %v3820 = vadd.f32 %v3812, %v3818
    %v3821 = vsub.f32 0.0, %v3820
    %v3822 = vmul.f32 %v3821, 1.442695
    %v3823 = vpow.pop %v3822
    %v3824 = vadd.f32 %v3823, 1.0
    %v3825 = vrcp.pop %v3824
    %v3826 = vmul.f32 1.0, %v3825
    %vm3827 = vcmask 1024
    %3828 = vst.msk [vmem:[%s8] sm:$0x3] %vm3827, %v3826
    // Predicated region
    $region54: #{tpu_custom_call.1} parent=1 // pred_check
      _
    $region55: #{tpu_custom_call.1} parent=1 // pred_check_branch
      %3830 = sbr.rel (0) target = $region57
    $region56: #{tpu_custom_call.1} parent=1 // pred_region
      _
    $region57: #{tpu_custom_call.1} parent=1 // pred_fallthru
      _
    // Predicated region
    $region58: #{tpu_custom_call.1} parent=1 // pred_check
      _
    $region59: #{tpu_custom_call.1} parent=1 // pred_check_branch
      %3832 = sbr.rel (0) target = $region61
    $region60: #{tpu_custom_call.1} parent=1 // pred_region
      _
    $region61: #{tpu_custom_call.1} parent=1 // pred_fallthru
      _
    %3833 = vsyncpa [#allocation4], 1
    %3834 = vsyncpa [#allocation6], 1
    %3835 = vsyncpa [#allocation9], 1

</llo_original>
